<compile_context>
chip_gen: v6e
topology: v6e:2x2x1
jax: 0.10.0
libtpu: 0.0.40
codegen_flags: <defaults>
</compile_context>

<pallas_src>
import numpy as np
import jax
import jax.numpy as jnp
from jax.experimental import pallas as pl
from jax.experimental.pallas import tpu as pltpu

# ----------------------------- static geometry -----------------------------
K = 5                        # conv kernel size
H_IN, W_IN = 28, 28          # input spatial size, Cin = 1
W_PAD = 32                   # input W zero-padded (aligned matmul contraction dim)
HO1 = 24                     # conv1 output spatial (24x24)
HP1, WP1 = 12, 12            # after 2x2 maxpool
HO2 = 8                      # conv2 output spatial (8x8)
HP2, WP2 = 4, 4              # after 2x2 maxpool
C1, C2 = 10, 20              # conv channel counts
F1, F1P = 50, 64             # fc1 features (true / padded)
NCLS = 10
LANES = 128                  # lane width; activation lanes = pooled_col*C + channel


# ------------------------------ fused kernel -------------------------------
def net_fused_kernel(x_ref, w1_ref, b1_ref, w2_ref, b2_ref,
                     wf1_ref, bf1_ref, wf2_ref, bf2_ref, o_ref):
    TB = x_ref.shape[0]
    f32 = jnp.float32

    b1 = b1_ref[...]          # (1, 128)  lanes = wp*10 + co
    b2 = b2_ref[...]          # (1, 128)  lanes = wp2*20 + co2
    bf1 = bf1_ref[...]        # (1, 64)
    bf2 = bf2_ref[...]        # (1, 128)
    wf2 = wf2_ref[...]        # (64, 128)

    for b in range(TB):
        img = x_ref[b]                                    # (28, 32), cols 28..31 = 0

        # ---- conv1 (1->10, k5) as banded MXU matmuls; even/odd W-pool free ----
        acc_e = None
        acc_o = None
        for kh in range(K):
            lhs = img[kh:kh + HO1, :]                     # (24, 32)
            ue = jnp.dot(lhs, w1_ref[0, kh], preferred_element_type=f32)  # (24,128)
            uo = jnp.dot(lhs, w1_ref[1, kh], preferred_element_type=f32)
            acc_e = ue if acc_e is None else acc_e + ue
            acc_o = uo if acc_o is None else acc_o + uo
        a_e = jnp.maximum(acc_e + b1, 0.0)                # bias + ReLU
        a_o = jnp.maximum(acc_o + b1, 0.0)
        pw = jnp.maximum(a_e, a_o)                        # pooled along W  (24, 128)
        pr = pw.reshape(HP1, 2, LANES)
        p1 = jnp.maximum(pr[:, 0, :], pr[:, 1, :])        # pooled along H  (12, 128)

        # ---- conv2 (10->20, k5), same banded-matmul scheme ---------------------
        acc_e = None
        acc_o = None
        for kh in range(K):
            lhs = p1[kh:kh + HO2, :]                      # (8, 128)
            ue = jnp.dot(lhs, w2_ref[0, kh], preferred_element_type=f32)  # (8,128)
            uo = jnp.dot(lhs, w2_ref[1, kh], preferred_element_type=f32)
            acc_e = ue if acc_e is None else acc_e + ue
            acc_o = uo if acc_o is None else acc_o + uo
        a_e = jnp.maximum(acc_e + b2, 0.0)
        a_o = jnp.maximum(acc_o + b2, 0.0)
        pw = jnp.maximum(a_e, a_o)                        # (8, 128)
        pr = pw.reshape(HP2, 2, LANES)
        p2 = jnp.maximum(pr[:, 0, :], pr[:, 1, :])        # (4, 128)

        # ---- fc1 (320->50) + fc2 (50->10); torch flatten order is in the packing
        hid = bf1                                         # (1, 64)
        for hp2 in range(HP2):
            hid = hid + jnp.dot(p2[hp2:hp2 + 1, :], wf1_ref[hp2],
                                preferred_element_type=f32)
        out_b = jnp.dot(hid, wf2, preferred_element_type=f32) + bf2   # (1, 128)
        o_ref[b] = out_b


# ------------------------------ pallas wrapper ------------------------------
def _full_spec(arr):
    n = arr.ndim
    return pl.BlockSpec(arr.shape, lambda g, _n=n: (0,) * _n)


def net_pallas(x_bhw, W1, B1, W2, B2, WF1, BF1, WF2, BF2, tb):
    Bsz = x_bhw.shape[0]
    grid_spec = pltpu.PrefetchScalarGridSpec(
        num_scalar_prefetch=0,
        grid=(Bsz // tb,),
        in_specs=[
            pl.BlockSpec((tb, H_IN, W_PAD), lambda g: (g, 0, 0)),
            _full_spec(W1), _full_spec(B1),
            _full_spec(W2), _full_spec(B2),
            _full_spec(WF1), _full_spec(BF1),
            _full_spec(WF2), _full_spec(BF2),
        ],
        out_specs=pl.BlockSpec((tb, 1, LANES), lambda g: (g, 0, 0)),
    )
    return pl.pallas_call(
        net_fused_kernel,
        out_shape=jax.ShapeDtypeStruct((Bsz, 1, LANES), jnp.float32),
        grid_spec=grid_spec,
        compiler_params=pltpu.CompilerParams(
            dimension_semantics=("parallel",),
            vmem_limit_bytes=32 * 1024 * 1024,
        ),
    )(x_bhw, W1, B1, W2, B2, WF1, BF1, WF2, BF2)


def net_forward(packed, x_nchw):
    """Forward pass on packed weights; x is NCHW like the PyTorch module."""
    B = x_nchw.shape[0]
    # batch tile: largest divisor of B that is <= 8 (no padding ever needed)
    tb = max(d for d in range(1, min(B, 8) + 1) if B % d == 0)
    x = x_nchw.reshape(B, H_IN, W_IN)                      # Cin = 1
    x = jnp.pad(x, ((0, 0), (0, 0), (0, W_PAD - W_IN)))    # (B, 28, 32)
    out = net_pallas(x, packed["W1"], packed["B1"], packed["W2"], packed["B2"],
                     packed["WF1"], packed["BF1"], packed["WF2"], packed["BF2"], tb)
    return out.reshape(B, LANES)[:, :NCLS]


# --------------------- one-time host-side weight packing --------------------
def pack_params(p):
    """Repack torch-shaped params into banded / lane-padded matrices (numpy, one-time)."""
    w1 = np.asarray(p["w_conv1"], np.float32)    # (10, 1, 5, 5)
    b1 = np.asarray(p["b_conv1"], np.float32)    # (10,)
    w2 = np.asarray(p["w_conv2"], np.float32)    # (20, 10, 5, 5)
    b2 = np.asarray(p["b_conv2"], np.float32)    # (20,)
    wf1 = np.asarray(p["w_fc1"], np.float32)     # (50, 320)
    bf1 = np.asarray(p["b_fc1"], np.float32)     # (50,)
    wf2 = np.asarray(p["w_fc2"], np.float32)     # (10, 50)
    bf2 = np.asarray(p["b_fc2"], np.float32)     # (10,)

    # conv1 band weights: out lane = wp*10 + co, input row = win (image column).
    # parity 0 -> even output columns wo = 2*wp, parity 1 -> odd (wo = 2*wp+1).
    W1 = np.zeros((2, K, W_PAD, LANES), np.float32)
    for par in range(2):
        for kh in range(K):
            for wp in range(WP1):
                for kw in range(K):
                    win = 2 * wp + par + kw
                    W1[par, kh, win, wp * C1:(wp + 1) * C1] = w1[:, 0, kh, kw]
    B1 = np.zeros((1, LANES), np.float32)
    for wp in range(WP1):
        B1[0, wp * C1:(wp + 1) * C1] = b1

    # conv2 band weights: input lane = wp*10 + ci, out lane = wp2*20 + co2.
    # The kw taps land in disjoint (row-block, col-block) cells -> summed into one
    # (128,128) matrix per (parity, kh).
    W2 = np.zeros((2, K, LANES, LANES), np.float32)
    for par in range(2):
        for kh in range(K):
            for kw in range(K):
                for wp2 in range(WP2):
                    wp = 2 * wp2 + par + kw
                    W2[par, kh, wp * C1:(wp + 1) * C1,
                       wp2 * C2:(wp2 + 1) * C2] = w2[:, :, kh, kw].T  # (ci, co2)
    B2 = np.zeros((1, LANES), np.float32)
    for wp2 in range(WP2):
        B2[0, wp2 * C2:(wp2 + 1) * C2] = b2

    # fc1: kernel layout is rows=hp2, lanes=wp2*20+co2; torch flattens (co2,hp2,wp2).
    WF1 = np.zeros((HP2, LANES, F1P), np.float32)
    for hp2 in range(HP2):
        for wp2 in range(WP2):
            for co2 in range(C2):
                WF1[hp2, wp2 * C2 + co2, :F1] = wf1[:, co2 * (HP2 * WP2) + hp2 * WP2 + wp2]
    BF1 = np.zeros((1, F1P), np.float32)
    BF1[0, :F1] = bf1

    # fc2: (10, 50) -> (64, 128), zero rows/cols for padding lanes.
    WF2 = np.zeros((F1P, LANES), np.float32)
    WF2[:F1, :NCLS] = wf2.T
    BF2 = np.zeros((1, LANES), np.float32)
    BF2[0, :NCLS] = bf2

    return dict(W1=jnp.asarray(W1), B1=jnp.asarray(B1),
                W2=jnp.asarray(W2), B2=jnp.asarray(B2),
                WF1=jnp.asarray(WF1), BF1=jnp.asarray(BF1),
                WF2=jnp.asarray(WF2), BF2=jnp.asarray(BF2))


def init_params(key):
    """Deterministic init matching the PyTorch module's parameter shapes."""
    ks = jax.random.split(key, 8)

    def u(k, shape, fan_in):
        bound = 1.0 / jnp.sqrt(jnp.float32(fan_in))
        return jax.random.uniform(k, shape, jnp.float32, -bound, bound)

    return dict(
        w_conv1=u(ks[0], (C1, 1, K, K), 1 * K * K),
        b_conv1=u(ks[1], (C1,), 1 * K * K),
        w_conv2=u(ks[2], (C2, C1, K, K), C1 * K * K),
        b_conv2=u(ks[3], (C2,), C1 * K * K),
        w_fc1=u(ks[4], (F1, 320), 320),
        b_fc1=u(ks[5], (F1,), 320),
        w_fc2=u(ks[6], (NCLS, F1), F1),
        b_fc2=u(ks[7], (NCLS,), F1),
    )


# ------------------------------ JAX reference -------------------------------
def net_forward_ref(params, x):
    """Pure-JAX reference reproducing the PyTorch forward (for validation)."""
    hi = jax.lax.Precision.HIGHEST
    y = jax.lax.conv_general_dilated(x, params["w_conv1"], (1, 1), "VALID",
                                     dimension_numbers=("NCHW", "OIHW", "NCHW"),
                                     precision=hi)
    y = jax.nn.relu(y + params["b_conv1"].reshape(1, -1, 1, 1))
    y = jax.lax.reduce_window(y, -jnp.inf, jax.lax.max, (1, 1, 2, 2), (1, 1, 2, 2), "VALID")
    y = jax.lax.conv_general_dilated(y, params["w_conv2"], (1, 1), "VALID",
                                     dimension_numbers=("NCHW", "OIHW", "NCHW"),
                                     precision=hi)
    y = jax.nn.relu(y + params["b_conv2"].reshape(1, -1, 1, 1))
    y = jax.lax.reduce_window(y, -jnp.inf, jax.lax.max, (1, 1, 2, 2), (1, 1, 2, 2), "VALID")
    y = y.reshape(y.shape[0], -1)
    y = jnp.dot(y, params["w_fc1"].T, precision=hi) + params["b_fc1"]
    y = jnp.dot(y, params["w_fc2"].T, precision=hi) + params["b_fc2"]
    return y


# ---------------------------------- main ------------------------------------
if __name__ == "__main__":
    key = jax.random.PRNGKey(0)
    k_param, k_x = jax.random.split(key)

    params = init_params(k_param)
    x = jax.random.normal(k_x, (2, 1, H_IN, W_IN), dtype=jnp.float32)  # NCHW, MNIST-sized

    # Round data/weights to bf16-representable f32 so MXU pass-count choices
    # cannot blur the comparison; remaining differences are f32 summation order.
    rb = lambda t: t.astype(jnp.bfloat16).astype(jnp.float32)
    params = jax.tree_util.tree_map(rb, params)
    x = rb(x)

    packed = pack_params(params)                  # one-time host-side repack
    fwd = jax.jit(net_forward)

    out = jax.block_until_ready(fwd(packed, x))
    assert out.shape == (2, NCLS), out.shape

    ref = net_forward_ref(params, x)
    if not jnp.allclose(out, ref, atol=2e-5, rtol=2e-5):
        err = float(jnp.max(jnp.abs(out - ref)))
        raise AssertionError(f"Pallas output mismatch vs JAX reference, max abs err = {err}")

    print("KERNEL_OK")
</pallas_src>

<mosaic_0001>
module attributes {stable_mosaic.version = 11 : i64} {
  func.func @net_fused_kernel(%arg0: i32, %arg1: memref<2x28x32xf32, #tpu.memory_space<vmem>>, %arg2: memref<2x5x32x128xf32, #tpu.memory_space<vmem>>, %arg3: memref<1x128xf32, #tpu.memory_space<vmem>>, %arg4: memref<2x5x128x128xf32, #tpu.memory_space<vmem>>, %arg5: memref<1x128xf32, #tpu.memory_space<vmem>>, %arg6: memref<4x128x64xf32, #tpu.memory_space<vmem>>, %arg7: memref<1x64xf32, #tpu.memory_space<vmem>>, %arg8: memref<64x128xf32, #tpu.memory_space<vmem>>, %arg9: memref<1x128xf32, #tpu.memory_space<vmem>>, %arg10: memref<2x1x128xf32, #tpu.memory_space<vmem>>) attributes {dimension_semantics = [#tpu.dimension_semantics<parallel>], iteration_bounds = array<i64: 1>, scalar_prefetch = 0 : i64, scratch_operands = 0 : i64, tpu.core_type = #tpu.core_type<tc>, window_params = [{transform_indices = @transform_0, window_bounds = array<i64: 2, 28, 32>}, {pipeline_mode = #tpu.pipeline_mode<synchronous>, transform_indices = @transform_1, window_bounds = array<i64: 2, 5, 32, 128>}, {pipeline_mode = #tpu.pipeline_mode<synchronous>, transform_indices = @transform_2, window_bounds = array<i64: 1, 128>}, {pipeline_mode = #tpu.pipeline_mode<synchronous>, transform_indices = @transform_3, window_bounds = array<i64: 2, 5, 128, 128>}, {pipeline_mode = #tpu.pipeline_mode<synchronous>, transform_indices = @transform_4, window_bounds = array<i64: 1, 128>}, {pipeline_mode = #tpu.pipeline_mode<synchronous>, transform_indices = @transform_5, window_bounds = array<i64: 4, 128, 64>}, {pipeline_mode = #tpu.pipeline_mode<synchronous>, transform_indices = @transform_6, window_bounds = array<i64: 1, 64>}, {pipeline_mode = #tpu.pipeline_mode<synchronous>, transform_indices = @transform_7, window_bounds = array<i64: 64, 128>}, {pipeline_mode = #tpu.pipeline_mode<synchronous>, transform_indices = @transform_8, window_bounds = array<i64: 1, 128>}, {transform_indices = @transform_9, window_bounds = array<i64: 2, 1, 128>}]} {
    %c0 = arith.constant 0 : index
    %c0_0 = arith.constant 0 : index
    %0 = vector.load %arg3[%c0, %c0_0] : memref<1x128xf32, #tpu.memory_space<vmem>>, vector<1x128xf32>
    %c0_1 = arith.constant 0 : index
    %c0_2 = arith.constant 0 : index
    %1 = vector.load %arg5[%c0_1, %c0_2] : memref<1x128xf32, #tpu.memory_space<vmem>>, vector<1x128xf32>
    %c0_3 = arith.constant 0 : index
    %c0_4 = arith.constant 0 : index
    %2 = vector.load %arg7[%c0_3, %c0_4] : memref<1x64xf32, #tpu.memory_space<vmem>>, vector<1x64xf32>
    %c0_5 = arith.constant 0 : index
    %c0_6 = arith.constant 0 : index
    %3 = vector.load %arg9[%c0_5, %c0_6] : memref<1x128xf32, #tpu.memory_space<vmem>>, vector<1x128xf32>
    %c0_7 = arith.constant 0 : index
    %c0_8 = arith.constant 0 : index
    %4 = vector.load %arg8[%c0_7, %c0_8] : memref<64x128xf32, #tpu.memory_space<vmem>>, vector<64x128xf32>
    %c0_9 = arith.constant 0 : index
    %c0_10 = arith.constant 0 : index
    %c0_11 = arith.constant 0 : index
    %5 = vector.load %arg1[%c0_9, %c0_10, %c0_11] : memref<2x28x32xf32, #tpu.memory_space<vmem>>, vector<1x28x32xf32>
    %6 = vector.shape_cast %5 : vector<1x28x32xf32> to vector<28x32xf32>
    %7 = vector.extract_strided_slice %6 {offsets = [0, 0], sizes = [24, 32], strides = [1, 1]} : vector<28x32xf32> to vector<24x32xf32>
    %c0_12 = arith.constant 0 : index
    %c0_13 = arith.constant 0 : index
    %c0_14 = arith.constant 0 : index
    %c0_15 = arith.constant 0 : index
    %8 = vector.load %arg2[%c0_12, %c0_13, %c0_14, %c0_15] : memref<2x5x32x128xf32, #tpu.memory_space<vmem>>, vector<1x1x32x128xf32>
    %9 = vector.shape_cast %8 : vector<1x1x32x128xf32> to vector<32x128xf32>
    %cst = arith.constant dense<0.000000e+00> : vector<24x128xf32>
    %10 = tpu.matmul %7, %9, %cst {dimension_numbers = #tpu.dot_dimension_numbers<[1], [0], [0], [1], [0, 0, 1, 1], [], []>} : vector<24x32xf32>, vector<32x128xf32>, vector<24x128xf32> -> vector<24x128xf32>
    %c1 = arith.constant 1 : index
    %c0_16 = arith.constant 0 : index
    %c0_17 = arith.constant 0 : index
    %c0_18 = arith.constant 0 : index
    %11 = vector.load %arg2[%c1, %c0_16, %c0_17, %c0_18] : memref<2x5x32x128xf32, #tpu.memory_space<vmem>>, vector<1x1x32x128xf32>
    %12 = vector.shape_cast %11 : vector<1x1x32x128xf32> to vector<32x128xf32>
    %cst_19 = arith.constant dense<0.000000e+00> : vector<24x128xf32>
    %13 = tpu.matmul %7, %12, %cst_19 {dimension_numbers = #tpu.dot_dimension_numbers<[1], [0], [0], [1], [0, 0, 1, 1], [], []>} : vector<24x32xf32>, vector<32x128xf32>, vector<24x128xf32> -> vector<24x128xf32>
    %14 = vector.extract_strided_slice %6 {offsets = [1, 0], sizes = [24, 32], strides = [1, 1]} : vector<28x32xf32> to vector<24x32xf32>
    %c0_20 = arith.constant 0 : index
    %c1_21 = arith.constant 1 : index
    %c0_22 = arith.constant 0 : index
    %c0_23 = arith.constant 0 : index
    %15 = vector.load %arg2[%c0_20, %c1_21, %c0_22, %c0_23] : memref<2x5x32x128xf32, #tpu.memory_space<vmem>>, vector<1x1x32x128xf32>
    %16 = vector.shape_cast %15 : vector<1x1x32x128xf32> to vector<32x128xf32>
    %cst_24 = arith.constant dense<0.000000e+00> : vector<24x128xf32>
    %17 = tpu.matmul %14, %16, %cst_24 {dimension_numbers = #tpu.dot_dimension_numbers<[1], [0], [0], [1], [0, 0, 1, 1], [], []>} : vector<24x32xf32>, vector<32x128xf32>, vector<24x128xf32> -> vector<24x128xf32>
    %c1_25 = arith.constant 1 : index
    %c1_26 = arith.constant 1 : index
    %c0_27 = arith.constant 0 : index
    %c0_28 = arith.constant 0 : index
    %18 = vector.load %arg2[%c1_25, %c1_26, %c0_27, %c0_28] : memref<2x5x32x128xf32, #tpu.memory_space<vmem>>, vector<1x1x32x128xf32>
    %19 = vector.shape_cast %18 : vector<1x1x32x128xf32> to vector<32x128xf32>
    %cst_29 = arith.constant dense<0.000000e+00> : vector<24x128xf32>
    %20 = tpu.matmul %14, %19, %cst_29 {dimension_numbers = #tpu.dot_dimension_numbers<[1], [0], [0], [1], [0, 0, 1, 1], [], []>} : vector<24x32xf32>, vector<32x128xf32>, vector<24x128xf32> -> vector<24x128xf32>
    %21 = arith.addf %10, %17 : vector<24x128xf32>
    %22 = arith.addf %13, %20 : vector<24x128xf32>
    %23 = vector.extract_strided_slice %6 {offsets = [2, 0], sizes = [24, 32], strides = [1, 1]} : vector<28x32xf32> to vector<24x32xf32>
    %c0_30 = arith.constant 0 : index
    %c2 = arith.constant 2 : index
    %c0_31 = arith.constant 0 : index
    %c0_32 = arith.constant 0 : index
    %24 = vector.load %arg2[%c0_30, %c2, %c0_31, %c0_32] : memref<2x5x32x128xf32, #tpu.memory_space<vmem>>, vector<1x1x32x128xf32>
    %25 = vector.shape_cast %24 : vector<1x1x32x128xf32> to vector<32x128xf32>
    %cst_33 = arith.constant dense<0.000000e+00> : vector<24x128xf32>
    %26 = tpu.matmul %23, %25, %cst_33 {dimension_numbers = #tpu.dot_dimension_numbers<[1], [0], [0], [1], [0, 0, 1, 1], [], []>} : vector<24x32xf32>, vector<32x128xf32>, vector<24x128xf32> -> vector<24x128xf32>
    %c1_34 = arith.constant 1 : index
    %c2_35 = arith.constant 2 : index
    %c0_36 = arith.constant 0 : index
    %c0_37 = arith.constant 0 : index
    %27 = vector.load %arg2[%c1_34, %c2_35, %c0_36, %c0_37] : memref<2x5x32x128xf32, #tpu.memory_space<vmem>>, vector<1x1x32x128xf32>
    %28 = vector.shape_cast %27 : vector<1x1x32x128xf32> to vector<32x128xf32>
    %cst_38 = arith.constant dense<0.000000e+00> : vector<24x128xf32>
    %29 = tpu.matmul %23, %28, %cst_38 {dimension_numbers = #tpu.dot_dimension_numbers<[1], [0], [0], [1], [0, 0, 1, 1], [], []>} : vector<24x32xf32>, vector<32x128xf32>, vector<24x128xf32> -> vector<24x128xf32>
    %30 = arith.addf %21, %26 : vector<24x128xf32>
    %31 = arith.addf %22, %29 : vector<24x128xf32>
    %32 = vector.extract_strided_slice %6 {offsets = [3, 0], sizes = [24, 32], strides = [1, 1]} : vector<28x32xf32> to vector<24x32xf32>
    %c0_39 = arith.constant 0 : index
    %c3 = arith.constant 3 : index
    %c0_40 = arith.constant 0 : index
    %c0_41 = arith.constant 0 : index
    %33 = vector.load %arg2[%c0_39, %c3, %c0_40, %c0_41] : memref<2x5x32x128xf32, #tpu.memory_space<vmem>>, vector<1x1x32x128xf32>
    %34 = vector.shape_cast %33 : vector<1x1x32x128xf32> to vector<32x128xf32>
    %cst_42 = arith.constant dense<0.000000e+00> : vector<24x128xf32>
    %35 = tpu.matmul %32, %34, %cst_42 {dimension_numbers = #tpu.dot_dimension_numbers<[1], [0], [0], [1], [0, 0, 1, 1], [], []>} : vector<24x32xf32>, vector<32x128xf32>, vector<24x128xf32> -> vector<24x128xf32>
    %c1_43 = arith.constant 1 : index
    %c3_44 = arith.constant 3 : index
    %c0_45 = arith.constant 0 : index
    %c0_46 = arith.constant 0 : index
    %36 = vector.load %arg2[%c1_43, %c3_44, %c0_45, %c0_46] : memref<2x5x32x128xf32, #tpu.memory_space<vmem>>, vector<1x1x32x128xf32>
    %37 = vector.shape_cast %36 : vector<1x1x32x128xf32> to vector<32x128xf32>
    %cst_47 = arith.constant dense<0.000000e+00> : vector<24x128xf32>
    %38 = tpu.matmul %32, %37, %cst_47 {dimension_numbers = #tpu.dot_dimension_numbers<[1], [0], [0], [1], [0, 0, 1, 1], [], []>} : vector<24x32xf32>, vector<32x128xf32>, vector<24x128xf32> -> vector<24x128xf32>
    %39 = arith.addf %30, %35 : vector<24x128xf32>
    %40 = arith.addf %31, %38 : vector<24x128xf32>
    %41 = vector.extract_strided_slice %6 {offsets = [4, 0], sizes = [24, 32], strides = [1, 1]} : vector<28x32xf32> to vector<24x32xf32>
    %c0_48 = arith.constant 0 : index
    %c4 = arith.constant 4 : index
    %c0_49 = arith.constant 0 : index
    %c0_50 = arith.constant 0 : index
    %42 = vector.load %arg2[%c0_48, %c4, %c0_49, %c0_50] : memref<2x5x32x128xf32, #tpu.memory_space<vmem>>, vector<1x1x32x128xf32>
    %43 = vector.shape_cast %42 : vector<1x1x32x128xf32> to vector<32x128xf32>
    %cst_51 = arith.constant dense<0.000000e+00> : vector<24x128xf32>
    %44 = tpu.matmul %41, %43, %cst_51 {dimension_numbers = #tpu.dot_dimension_numbers<[1], [0], [0], [1], [0, 0, 1, 1], [], []>} : vector<24x32xf32>, vector<32x128xf32>, vector<24x128xf32> -> vector<24x128xf32>
    %c1_52 = arith.constant 1 : index
    %c4_53 = arith.constant 4 : index
    %c0_54 = arith.constant 0 : index
    %c0_55 = arith.constant 0 : index
    %45 = vector.load %arg2[%c1_52, %c4_53, %c0_54, %c0_55] : memref<2x5x32x128xf32, #tpu.memory_space<vmem>>, vector<1x1x32x128xf32>
    %46 = vector.shape_cast %45 : vector<1x1x32x128xf32> to vector<32x128xf32>
    %cst_56 = arith.constant dense<0.000000e+00> : vector<24x128xf32>
    %47 = tpu.matmul %41, %46, %cst_56 {dimension_numbers = #tpu.dot_dimension_numbers<[1], [0], [0], [1], [0, 0, 1, 1], [], []>} : vector<24x32xf32>, vector<32x128xf32>, vector<24x128xf32> -> vector<24x128xf32>
    %48 = arith.addf %39, %44 : vector<24x128xf32>
    %49 = arith.addf %40, %47 : vector<24x128xf32>
    %50 = vector.broadcast %0 : vector<1x128xf32> to vector<24x128xf32>
    %51 = arith.addf %48, %50 : vector<24x128xf32>
    %cst_57 = arith.constant 0.000000e+00 : f32
    %52 = vector.broadcast %cst_57 : f32 to vector<24x128xf32>
    %53 = arith.maximumf %51, %52 : vector<24x128xf32>
    %54 = vector.broadcast %0 : vector<1x128xf32> to vector<24x128xf32>
    %55 = arith.addf %49, %54 : vector<24x128xf32>
    %cst_58 = arith.constant 0.000000e+00 : f32
    %56 = vector.broadcast %cst_58 : f32 to vector<24x128xf32>
    %57 = arith.maximumf %55, %56 : vector<24x128xf32>
    %58 = arith.maximumf %53, %57 : vector<24x128xf32>
    %59 = vector.shape_cast %58 : vector<24x128xf32> to vector<12x2x128xf32>
    %60 = vector.extract_strided_slice %59 {offsets = [0, 0, 0], sizes = [12, 1, 128], strides = [1, 1, 1]} : vector<12x2x128xf32> to vector<12x1x128xf32>
    %61 = vector.shape_cast %60 : vector<12x1x128xf32> to vector<12x128xf32>
    %62 = vector.extract_strided_slice %59 {offsets = [0, 1, 0], sizes = [12, 1, 128], strides = [1, 1, 1]} : vector<12x2x128xf32> to vector<12x1x128xf32>
    %63 = vector.shape_cast %62 : vector<12x1x128xf32> to vector<12x128xf32>
    %64 = arith.maximumf %61, %63 : vector<12x128xf32>
    %65 = vector.extract_strided_slice %64 {offsets = [0, 0], sizes = [8, 128], strides = [1, 1]} : vector<12x128xf32> to vector<8x128xf32>
    %c0_59 = arith.constant 0 : index
    %c0_60 = arith.constant 0 : index
    %c0_61 = arith.constant 0 : index
    %c0_62 = arith.constant 0 : index
    %66 = vector.load %arg4[%c0_59, %c0_60, %c0_61, %c0_62] : memref<2x5x128x128xf32, #tpu.memory_space<vmem>>, vector<1x1x128x128xf32>
    %67 = vector.shape_cast %66 : vector<1x1x128x128xf32> to vector<128x128xf32>
    %cst_63 = arith.constant dense<0.000000e+00> : vector<8x128xf32>
    %68 = tpu.matmul %65, %67, %cst_63 {dimension_numbers = #tpu.dot_dimension_numbers<[1], [0], [0], [1], [0, 0, 1, 1], [], []>} : vector<8x128xf32>, vector<128x128xf32>, vector<8x128xf32> -> vector<8x128xf32>
    %c1_64 = arith.constant 1 : index
    %c0_65 = arith.constant 0 : index
    %c0_66 = arith.constant 0 : index
    %c0_67 = arith.constant 0 : index
    %69 = vector.load %arg4[%c1_64, %c0_65, %c0_66, %c0_67] : memref<2x5x128x128xf32, #tpu.memory_space<vmem>>, vector<1x1x128x128xf32>
    %70 = vector.shape_cast %69 : vector<1x1x128x128xf32> to vector<128x128xf32>
    %cst_68 = arith.constant dense<0.000000e+00> : vector<8x128xf32>
    %71 = tpu.matmul %65, %70, %cst_68 {dimension_numbers = #tpu.dot_dimension_numbers<[1], [0], [0], [1], [0, 0, 1, 1], [], []>} : vector<8x128xf32>, vector<128x128xf32>, vector<8x128xf32> -> vector<8x128xf32>
    %72 = vector.extract_strided_slice %64 {offsets = [1, 0], sizes = [8, 128], strides = [1, 1]} : vector<12x128xf32> to vector<8x128xf32>
    %c0_69 = arith.constant 0 : index
    %c1_70 = arith.constant 1 : index
    %c0_71 = arith.constant 0 : index
    %c0_72 = arith.constant 0 : index
    %73 = vector.load %arg4[%c0_69, %c1_70, %c0_71, %c0_72] : memref<2x5x128x128xf32, #tpu.memory_space<vmem>>, vector<1x1x128x128xf32>
    %74 = vector.shape_cast %73 : vector<1x1x128x128xf32> to vector<128x128xf32>
    %cst_73 = arith.constant dense<0.000000e+00> : vector<8x128xf32>
    %75 = tpu.matmul %72, %74, %cst_73 {dimension_numbers = #tpu.dot_dimension_numbers<[1], [0], [0], [1], [0, 0, 1, 1], [], []>} : vector<8x128xf32>, vector<128x128xf32>, vector<8x128xf32> -> vector<8x128xf32>
    %c1_74 = arith.constant 1 : index
    %c1_75 = arith.constant 1 : index
    %c0_76 = arith.constant 0 : index
    %c0_77 = arith.constant 0 : index
    %76 = vector.load %arg4[%c1_74, %c1_75, %c0_76, %c0_77] : memref<2x5x128x128xf32, #tpu.memory_space<vmem>>, vector<1x1x128x128xf32>
    %77 = vector.shape_cast %76 : vector<1x1x128x128xf32> to vector<128x128xf32>
    %cst_78 = arith.constant dense<0.000000e+00> : vector<8x128xf32>
    %78 = tpu.matmul %72, %77, %cst_78 {dimension_numbers = #tpu.dot_dimension_numbers<[1], [0], [0], [1], [0, 0, 1, 1], [], []>} : vector<8x128xf32>, vector<128x128xf32>, vector<8x128xf32> -> vector<8x128xf32>
    %79 = arith.addf %68, %75 : vector<8x128xf32>
    %80 = arith.addf %71, %78 : vector<8x128xf32>
    %81 = vector.extract_strided_slice %64 {offsets = [2, 0], sizes = [8, 128], strides = [1, 1]} : vector<12x128xf32> to vector<8x128xf32>
    %c0_79 = arith.constant 0 : index
    %c2_80 = arith.constant 2 : index
    %c0_81 = arith.constant 0 : index
    %c0_82 = arith.constant 0 : index
    %82 = vector.load %arg4[%c0_79, %c2_80, %c0_81, %c0_82] : memref<2x5x128x128xf32, #tpu.memory_space<vmem>>, vector<1x1x128x128xf32>
    %83 = vector.shape_cast %82 : vector<1x1x128x128xf32> to vector<128x128xf32>
    %cst_83 = arith.constant dense<0.000000e+00> : vector<8x128xf32>
    %84 = tpu.matmul %81, %83, %cst_83 {dimension_numbers = #tpu.dot_dimension_numbers<[1], [0], [0], [1], [0, 0, 1, 1], [], []>} : vector<8x128xf32>, vector<128x128xf32>, vector<8x128xf32> -> vector<8x128xf32>
    %c1_84 = arith.constant 1 : index
    %c2_85 = arith.constant 2 : index
    %c0_86 = arith.constant 0 : index
    %c0_87 = arith.constant 0 : index
    %85 = vector.load %arg4[%c1_84, %c2_85, %c0_86, %c0_87] : memref<2x5x128x128xf32, #tpu.memory_space<vmem>>, vector<1x1x128x128xf32>
    %86 = vector.shape_cast %85 : vector<1x1x128x128xf32> to vector<128x128xf32>
    %cst_88 = arith.constant dense<0.000000e+00> : vector<8x128xf32>
    %87 = tpu.matmul %81, %86, %cst_88 {dimension_numbers = #tpu.dot_dimension_numbers<[1], [0], [0], [1], [0, 0, 1, 1], [], []>} : vector<8x128xf32>, vector<128x128xf32>, vector<8x128xf32> -> vector<8x128xf32>
    %88 = arith.addf %79, %84 : vector<8x128xf32>
    %89 = arith.addf %80, %87 : vector<8x128xf32>
    %90 = vector.extract_strided_slice %64 {offsets = [3, 0], sizes = [8, 128], strides = [1, 1]} : vector<12x128xf32> to vector<8x128xf32>
    %c0_89 = arith.constant 0 : index
    %c3_90 = arith.constant 3 : index
    %c0_91 = arith.constant 0 : index
    %c0_92 = arith.constant 0 : index
    %91 = vector.load %arg4[%c0_89, %c3_90, %c0_91, %c0_92] : memref<2x5x128x128xf32, #tpu.memory_space<vmem>>, vector<1x1x128x128xf32>
    %92 = vector.shape_cast %91 : vector<1x1x128x128xf32> to vector<128x128xf32>
    %cst_93 = arith.constant dense<0.000000e+00> : vector<8x128xf32>
    %93 = tpu.matmul %90, %92, %cst_93 {dimension_numbers = #tpu.dot_dimension_numbers<[1], [0], [0], [1], [0, 0, 1, 1], [], []>} : vector<8x128xf32>, vector<128x128xf32>, vector<8x128xf32> -> vector<8x128xf32>
    %c1_94 = arith.constant 1 : index
    %c3_95 = arith.constant 3 : index
    %c0_96 = arith.constant 0 : index
    %c0_97 = arith.constant 0 : index
    %94 = vector.load %arg4[%c1_94, %c3_95, %c0_96, %c0_97] : memref<2x5x128x128xf32, #tpu.memory_space<vmem>>, vector<1x1x128x128xf32>
    %95 = vector.shape_cast %94 : vector<1x1x128x128xf32> to vector<128x128xf32>
    %cst_98 = arith.constant dense<0.000000e+00> : vector<8x128xf32>
    %96 = tpu.matmul %90, %95, %cst_98 {dimension_numbers = #tpu.dot_dimension_numbers<[1], [0], [0], [1], [0, 0, 1, 1], [], []>} : vector<8x128xf32>, vector<128x128xf32>, vector<8x128xf32> -> vector<8x128xf32>
    %97 = arith.addf %88, %93 : vector<8x128xf32>
    %98 = arith.addf %89, %96 : vector<8x128xf32>
    %99 = vector.extract_strided_slice %64 {offsets = [4, 0], sizes = [8, 128], strides = [1, 1]} : vector<12x128xf32> to vector<8x128xf32>
    %c0_99 = arith.constant 0 : index
    %c4_100 = arith.constant 4 : index
    %c0_101 = arith.constant 0 : index
    %c0_102 = arith.constant 0 : index
    %100 = vector.load %arg4[%c0_99, %c4_100, %c0_101, %c0_102] : memref<2x5x128x128xf32, #tpu.memory_space<vmem>>, vector<1x1x128x128xf32>
    %101 = vector.shape_cast %100 : vector<1x1x128x128xf32> to vector<128x128xf32>
    %cst_103 = arith.constant dense<0.000000e+00> : vector<8x128xf32>
    %102 = tpu.matmul %99, %101, %cst_103 {dimension_numbers = #tpu.dot_dimension_numbers<[1], [0], [0], [1], [0, 0, 1, 1], [], []>} : vector<8x128xf32>, vector<128x128xf32>, vector<8x128xf32> -> vector<8x128xf32>
    %c1_104 = arith.constant 1 : index
    %c4_105 = arith.constant 4 : index
    %c0_106 = arith.constant 0 : index
    %c0_107 = arith.constant 0 : index
    %103 = vector.load %arg4[%c1_104, %c4_105, %c0_106, %c0_107] : memref<2x5x128x128xf32, #tpu.memory_space<vmem>>, vector<1x1x128x128xf32>
    %104 = vector.shape_cast %103 : vector<1x1x128x128xf32> to vector<128x128xf32>
    %cst_108 = arith.constant dense<0.000000e+00> : vector<8x128xf32>
    %105 = tpu.matmul %99, %104, %cst_108 {dimension_numbers = #tpu.dot_dimension_numbers<[1], [0], [0], [1], [0, 0, 1, 1], [], []>} : vector<8x128xf32>, vector<128x128xf32>, vector<8x128xf32> -> vector<8x128xf32>
    %106 = arith.addf %97, %102 : vector<8x128xf32>
    %107 = arith.addf %98, %105 : vector<8x128xf32>
    %108 = vector.broadcast %1 : vector<1x128xf32> to vector<8x128xf32>
    %109 = arith.addf %106, %108 : vector<8x128xf32>
    %cst_109 = arith.constant 0.000000e+00 : f32
    %110 = vector.broadcast %cst_109 : f32 to vector<8x128xf32>
    %111 = arith.maximumf %109, %110 : vector<8x128xf32>
    %112 = vector.broadcast %1 : vector<1x128xf32> to vector<8x128xf32>
    %113 = arith.addf %107, %112 : vector<8x128xf32>
    %cst_110 = arith.constant 0.000000e+00 : f32
    %114 = vector.broadcast %cst_110 : f32 to vector<8x128xf32>
    %115 = arith.maximumf %113, %114 : vector<8x128xf32>
    %116 = arith.maximumf %111, %115 : vector<8x128xf32>
    %117 = vector.shape_cast %116 : vector<8x128xf32> to vector<4x2x128xf32>
    %118 = vector.extract_strided_slice %117 {offsets = [0, 0, 0], sizes = [4, 1, 128], strides = [1, 1, 1]} : vector<4x2x128xf32> to vector<4x1x128xf32>
    %119 = vector.shape_cast %118 : vector<4x1x128xf32> to vector<4x128xf32>
    %120 = vector.extract_strided_slice %117 {offsets = [0, 1, 0], sizes = [4, 1, 128], strides = [1, 1, 1]} : vector<4x2x128xf32> to vector<4x1x128xf32>
    %121 = vector.shape_cast %120 : vector<4x1x128xf32> to vector<4x128xf32>
    %122 = arith.maximumf %119, %121 : vector<4x128xf32>
    %123 = vector.extract_strided_slice %122 {offsets = [0, 0], sizes = [1, 128], strides = [1, 1]} : vector<4x128xf32> to vector<1x128xf32>
    %c0_111 = arith.constant 0 : index
    %c0_112 = arith.constant 0 : index
    %c0_113 = arith.constant 0 : index
    %124 = vector.load %arg6[%c0_111, %c0_112, %c0_113] : memref<4x128x64xf32, #tpu.memory_space<vmem>>, vector<1x128x64xf32>
    %125 = vector.shape_cast %124 : vector<1x128x64xf32> to vector<128x64xf32>
    %cst_114 = arith.constant dense<0.000000e+00> : vector<1x64xf32>
    %126 = tpu.matmul %123, %125, %cst_114 {dimension_numbers = #tpu.dot_dimension_numbers<[1], [0], [0], [1], [0, 0, 1, 1], [], []>} : vector<1x128xf32>, vector<128x64xf32>, vector<1x64xf32> -> vector<1x64xf32>
    %127 = arith.addf %2, %126 : vector<1x64xf32>
    %128 = vector.extract_strided_slice %122 {offsets = [1, 0], sizes = [1, 128], strides = [1, 1]} : vector<4x128xf32> to vector<1x128xf32>
    %c1_115 = arith.constant 1 : index
    %c0_116 = arith.constant 0 : index
    %c0_117 = arith.constant 0 : index
    %129 = vector.load %arg6[%c1_115, %c0_116, %c0_117] : memref<4x128x64xf32, #tpu.memory_space<vmem>>, vector<1x128x64xf32>
    %130 = vector.shape_cast %129 : vector<1x128x64xf32> to vector<128x64xf32>
    %cst_118 = arith.constant dense<0.000000e+00> : vector<1x64xf32>
    %131 = tpu.matmul %128, %130, %cst_118 {dimension_numbers = #tpu.dot_dimension_numbers<[1], [0], [0], [1], [0, 0, 1, 1], [], []>} : vector<1x128xf32>, vector<128x64xf32>, vector<1x64xf32> -> vector<1x64xf32>
    %132 = arith.addf %127, %131 : vector<1x64xf32>
    %133 = vector.extract_strided_slice %122 {offsets = [2, 0], sizes = [1, 128], strides = [1, 1]} : vector<4x128xf32> to vector<1x128xf32>
    %c2_119 = arith.constant 2 : index
    %c0_120 = arith.constant 0 : index
    %c0_121 = arith.constant 0 : index
    %134 = vector.load %arg6[%c2_119, %c0_120, %c0_121] : memref<4x128x64xf32, #tpu.memory_space<vmem>>, vector<1x128x64xf32>
    %135 = vector.shape_cast %134 : vector<1x128x64xf32> to vector<128x64xf32>
    %cst_122 = arith.constant dense<0.000000e+00> : vector<1x64xf32>
    %136 = tpu.matmul %133, %135, %cst_122 {dimension_numbers = #tpu.dot_dimension_numbers<[1], [0], [0], [1], [0, 0, 1, 1], [], []>} : vector<1x128xf32>, vector<128x64xf32>, vector<1x64xf32> -> vector<1x64xf32>
    %137 = arith.addf %132, %136 : vector<1x64xf32>
    %138 = vector.extract_strided_slice %122 {offsets = [3, 0], sizes = [1, 128], strides = [1, 1]} : vector<4x128xf32> to vector<1x128xf32>
    %c3_123 = arith.constant 3 : index
    %c0_124 = arith.constant 0 : index
    %c0_125 = arith.constant 0 : index
    %139 = vector.load %arg6[%c3_123, %c0_124, %c0_125] : memref<4x128x64xf32, #tpu.memory_space<vmem>>, vector<1x128x64xf32>
    %140 = vector.shape_cast %139 : vector<1x128x64xf32> to vector<128x64xf32>
    %cst_126 = arith.constant dense<0.000000e+00> : vector<1x64xf32>
    %141 = tpu.matmul %138, %140, %cst_126 {dimension_numbers = #tpu.dot_dimension_numbers<[1], [0], [0], [1], [0, 0, 1, 1], [], []>} : vector<1x128xf32>, vector<128x64xf32>, vector<1x64xf32> -> vector<1x64xf32>
    %142 = arith.addf %137, %141 : vector<1x64xf32>
    %cst_127 = arith.constant dense<0.000000e+00> : vector<1x128xf32>
    %143 = tpu.matmul %142, %4, %cst_127 {dimension_numbers = #tpu.dot_dimension_numbers<[1], [0], [0], [1], [0, 0, 1, 1], [], []>} : vector<1x64xf32>, vector<64x128xf32>, vector<1x128xf32> -> vector<1x128xf32>
    %144 = arith.addf %143, %3 : vector<1x128xf32>
    %c0_128 = arith.constant 0 : index
    %c0_129 = arith.constant 0 : index
    %c0_130 = arith.constant 0 : index
    %145 = vector.load %arg10[%c0_128, %c0_129, %c0_130] : memref<2x1x128xf32, #tpu.memory_space<vmem>>, vector<1x1x128xf32>
    %146 = vector.shape_cast %145 : vector<1x1x128xf32> to vector<1x128xf32>
    %147 = vector.shape_cast %144 : vector<1x128xf32> to vector<1x1x128xf32>
    tpu.vector_store %arg10[%c0_128, %c0_129, %c0_130], %147 {strides = array<i32>} : memref<2x1x128xf32, #tpu.memory_space<vmem>>, vector<1x1x128xf32>,
    %c1_131 = arith.constant 1 : index
    %c0_132 = arith.constant 0 : index
    %c0_133 = arith.constant 0 : index
    %148 = vector.load %arg1[%c1_131, %c0_132, %c0_133] : memref<2x28x32xf32, #tpu.memory_space<vmem>>, vector<1x28x32xf32>
    %149 = vector.shape_cast %148 : vector<1x28x32xf32> to vector<28x32xf32>
    %150 = vector.extract_strided_slice %149 {offsets = [0, 0], sizes = [24, 32], strides = [1, 1]} : vector<28x32xf32> to vector<24x32xf32>
    %c0_134 = arith.constant 0 : index
    %c0_135 = arith.constant 0 : index
    %c0_136 = arith.constant 0 : index
    %c0_137 = arith.constant 0 : index
    %151 = vector.load %arg2[%c0_134, %c0_135, %c0_136, %c0_137] : memref<2x5x32x128xf32, #tpu.memory_space<vmem>>, vector<1x1x32x128xf32>
    %152 = vector.shape_cast %151 : vector<1x1x32x128xf32> to vector<32x128xf32>
    %cst_138 = arith.constant dense<0.000000e+00> : vector<24x128xf32>
    %153 = tpu.matmul %150, %152, %cst_138 {dimension_numbers = #tpu.dot_dimension_numbers<[1], [0], [0], [1], [0, 0, 1, 1], [], []>} : vector<24x32xf32>, vector<32x128xf32>, vector<24x128xf32> -> vector<24x128xf32>
    %c1_139 = arith.constant 1 : index
    %c0_140 = arith.constant 0 : index
    %c0_141 = arith.constant 0 : index
    %c0_142 = arith.constant 0 : index
    %154 = vector.load %arg2[%c1_139, %c0_140, %c0_141, %c0_142] : memref<2x5x32x128xf32, #tpu.memory_space<vmem>>, vector<1x1x32x128xf32>
    %155 = vector.shape_cast %154 : vector<1x1x32x128xf32> to vector<32x128xf32>
    %cst_143 = arith.constant dense<0.000000e+00> : vector<24x128xf32>
    %156 = tpu.matmul %150, %155, %cst_143 {dimension_numbers = #tpu.dot_dimension_numbers<[1], [0], [0], [1], [0, 0, 1, 1], [], []>} : vector<24x32xf32>, vector<32x128xf32>, vector<24x128xf32> -> vector<24x128xf32>
    %157 = vector.extract_strided_slice %149 {offsets = [1, 0], sizes = [24, 32], strides = [1, 1]} : vector<28x32xf32> to vector<24x32xf32>
    %c0_144 = arith.constant 0 : index
    %c1_145 = arith.constant 1 : index
    %c0_146 = arith.constant 0 : index
    %c0_147 = arith.constant 0 : index
    %158 = vector.load %arg2[%c0_144, %c1_145, %c0_146, %c0_147] : memref<2x5x32x128xf32, #tpu.memory_space<vmem>>, vector<1x1x32x128xf32>
    %159 = vector.shape_cast %158 : vector<1x1x32x128xf32> to vector<32x128xf32>
    %cst_148 = arith.constant dense<0.000000e+00> : vector<24x128xf32>
    %160 = tpu.matmul %157, %159, %cst_148 {dimension_numbers = #tpu.dot_dimension_numbers<[1], [0], [0], [1], [0, 0, 1, 1], [], []>} : vector<24x32xf32>, vector<32x128xf32>, vector<24x128xf32> -> vector<24x128xf32>
    %c1_149 = arith.constant 1 : index
    %c1_150 = arith.constant 1 : index
    %c0_151 = arith.constant 0 : index
    %c0_152 = arith.constant 0 : index
    %161 = vector.load %arg2[%c1_149, %c1_150, %c0_151, %c0_152] : memref<2x5x32x128xf32, #tpu.memory_space<vmem>>, vector<1x1x32x128xf32>
    %162 = vector.shape_cast %161 : vector<1x1x32x128xf32> to vector<32x128xf32>
    %cst_153 = arith.constant dense<0.000000e+00> : vector<24x128xf32>
    %163 = tpu.matmul %157, %162, %cst_153 {dimension_numbers = #tpu.dot_dimension_numbers<[1], [0], [0], [1], [0, 0, 1, 1], [], []>} : vector<24x32xf32>, vector<32x128xf32>, vector<24x128xf32> -> vector<24x128xf32>
    %164 = arith.addf %153, %160 : vector<24x128xf32>
    %165 = arith.addf %156, %163 : vector<24x128xf32>
    %166 = vector.extract_strided_slice %149 {offsets = [2, 0], sizes = [24, 32], strides = [1, 1]} : vector<28x32xf32> to vector<24x32xf32>
    %c0_154 = arith.constant 0 : index
    %c2_155 = arith.constant 2 : index
    %c0_156 = arith.constant 0 : index
    %c0_157 = arith.constant 0 : index
    %167 = vector.load %arg2[%c0_154, %c2_155, %c0_156, %c0_157] : memref<2x5x32x128xf32, #tpu.memory_space<vmem>>, vector<1x1x32x128xf32>
    %168 = vector.shape_cast %167 : vector<1x1x32x128xf32> to vector<32x128xf32>
    %cst_158 = arith.constant dense<0.000000e+00> : vector<24x128xf32>
    %169 = tpu.matmul %166, %168, %cst_158 {dimension_numbers = #tpu.dot_dimension_numbers<[1], [0], [0], [1], [0, 0, 1, 1], [], []>} : vector<24x32xf32>, vector<32x128xf32>, vector<24x128xf32> -> vector<24x128xf32>
    %c1_159 = arith.constant 1 : index
    %c2_160 = arith.constant 2 : index
    %c0_161 = arith.constant 0 : index
    %c0_162 = arith.constant 0 : index
    %170 = vector.load %arg2[%c1_159, %c2_160, %c0_161, %c0_162] : memref<2x5x32x128xf32, #tpu.memory_space<vmem>>, vector<1x1x32x128xf32>
    %171 = vector.shape_cast %170 : vector<1x1x32x128xf32> to vector<32x128xf32>
    %cst_163 = arith.constant dense<0.000000e+00> : vector<24x128xf32>
    %172 = tpu.matmul %166, %171, %cst_163 {dimension_numbers = #tpu.dot_dimension_numbers<[1], [0], [0], [1], [0, 0, 1, 1], [], []>} : vector<24x32xf32>, vector<32x128xf32>, vector<24x128xf32> -> vector<24x128xf32>
    %173 = arith.addf %164, %169 : vector<24x128xf32>
    %174 = arith.addf %165, %172 : vector<24x128xf32>
    %175 = vector.extract_strided_slice %149 {offsets = [3, 0], sizes = [24, 32], strides = [1, 1]} : vector<28x32xf32> to vector<24x32xf32>
    %c0_164 = arith.constant 0 : index
    %c3_165 = arith.constant 3 : index
    %c0_166 = arith.constant 0 : index
    %c0_167 = arith.constant 0 : index
    %176 = vector.load %arg2[%c0_164, %c3_165, %c0_166, %c0_167] : memref<2x5x32x128xf32, #tpu.memory_space<vmem>>, vector<1x1x32x128xf32>
    %177 = vector.shape_cast %176 : vector<1x1x32x128xf32> to vector<32x128xf32>
    %cst_168 = arith.constant dense<0.000000e+00> : vector<24x128xf32>
    %178 = tpu.matmul %175, %177, %cst_168 {dimension_numbers = #tpu.dot_dimension_numbers<[1], [0], [0], [1], [0, 0, 1, 1], [], []>} : vector<24x32xf32>, vector<32x128xf32>, vector<24x128xf32> -> vector<24x128xf32>
    %c1_169 = arith.constant 1 : index
    %c3_170 = arith.constant 3 : index
    %c0_171 = arith.constant 0 : index
    %c0_172 = arith.constant 0 : index
    %179 = vector.load %arg2[%c1_169, %c3_170, %c0_171, %c0_172] : memref<2x5x32x128xf32, #tpu.memory_space<vmem>>, vector<1x1x32x128xf32>
    %180 = vector.shape_cast %179 : vector<1x1x32x128xf32> to vector<32x128xf32>
    %cst_173 = arith.constant dense<0.000000e+00> : vector<24x128xf32>
    %181 = tpu.matmul %175, %180, %cst_173 {dimension_numbers = #tpu.dot_dimension_numbers<[1], [0], [0], [1], [0, 0, 1, 1], [], []>} : vector<24x32xf32>, vector<32x128xf32>, vector<24x128xf32> -> vector<24x128xf32>
    %182 = arith.addf %173, %178 : vector<24x128xf32>
    %183 = arith.addf %174, %181 : vector<24x128xf32>
    %184 = vector.extract_strided_slice %149 {offsets = [4, 0], sizes = [24, 32], strides = [1, 1]} : vector<28x32xf32> to vector<24x32xf32>
    %c0_174 = arith.constant 0 : index
    %c4_175 = arith.constant 4 : index
    %c0_176 = arith.constant 0 : index
    %c0_177 = arith.constant 0 : index
    %185 = vector.load %arg2[%c0_174, %c4_175, %c0_176, %c0_177] : memref<2x5x32x128xf32, #tpu.memory_space<vmem>>, vector<1x1x32x128xf32>
    %186 = vector.shape_cast %185 : vector<1x1x32x128xf32> to vector<32x128xf32>
    %cst_178 = arith.constant dense<0.000000e+00> : vector<24x128xf32>
    %187 = tpu.matmul %184, %186, %cst_178 {dimension_numbers = #tpu.dot_dimension_numbers<[1], [0], [0], [1], [0, 0, 1, 1], [], []>} : vector<24x32xf32>, vector<32x128xf32>, vector<24x128xf32> -> vector<24x128xf32>
    %c1_179 = arith.constant 1 : index
    %c4_180 = arith.constant 4 : index
    %c0_181 = arith.constant 0 : index
    %c0_182 = arith.constant 0 : index
    %188 = vector.load %arg2[%c1_179, %c4_180, %c0_181, %c0_182] : memref<2x5x32x128xf32, #tpu.memory_space<vmem>>, vector<1x1x32x128xf32>
    %189 = vector.shape_cast %188 : vector<1x1x32x128xf32> to vector<32x128xf32>
    %cst_183 = arith.constant dense<0.000000e+00> : vector<24x128xf32>
    %190 = tpu.matmul %184, %189, %cst_183 {dimension_numbers = #tpu.dot_dimension_numbers<[1], [0], [0], [1], [0, 0, 1, 1], [], []>} : vector<24x32xf32>, vector<32x128xf32>, vector<24x128xf32> -> vector<24x128xf32>
    %191 = arith.addf %182, %187 : vector<24x128xf32>
    %192 = arith.addf %183, %190 : vector<24x128xf32>
    %193 = vector.broadcast %0 : vector<1x128xf32> to vector<24x128xf32>
    %194 = arith.addf %191, %193 : vector<24x128xf32>
    %cst_184 = arith.constant 0.000000e+00 : f32
    %195 = vector.broadcast %cst_184 : f32 to vector<24x128xf32>
    %196 = arith.maximumf %194, %195 : vector<24x128xf32>
    %197 = vector.broadcast %0 : vector<1x128xf32> to vector<24x128xf32>
    %198 = arith.addf %192, %197 : vector<24x128xf32>
    %cst_185 = arith.constant 0.000000e+00 : f32
    %199 = vector.broadcast %cst_185 : f32 to vector<24x128xf32>
    %200 = arith.maximumf %198, %199 : vector<24x128xf32>
    %201 = arith.maximumf %196, %200 : vector<24x128xf32>
    %202 = vector.shape_cast %201 : vector<24x128xf32> to vector<12x2x128xf32>
    %203 = vector.extract_strided_slice %202 {offsets = [0, 0, 0], sizes = [12, 1, 128], strides = [1, 1, 1]} : vector<12x2x128xf32> to vector<12x1x128xf32>
    %204 = vector.shape_cast %203 : vector<12x1x128xf32> to vector<12x128xf32>
    %205 = vector.extract_strided_slice %202 {offsets = [0, 1, 0], sizes = [12, 1, 128], strides = [1, 1, 1]} : vector<12x2x128xf32> to vector<12x1x128xf32>
    %206 = vector.shape_cast %205 : vector<12x1x128xf32> to vector<12x128xf32>
    %207 = arith.maximumf %204, %206 : vector<12x128xf32>
    %208 = vector.extract_strided_slice %207 {offsets = [0, 0], sizes = [8, 128], strides = [1, 1]} : vector<12x128xf32> to vector<8x128xf32>
    %c0_186 = arith.constant 0 : index
    %c0_187 = arith.constant 0 : index
    %c0_188 = arith.constant 0 : index
    %c0_189 = arith.constant 0 : index
    %209 = vector.load %arg4[%c0_186, %c0_187, %c0_188, %c0_189] : memref<2x5x128x128xf32, #tpu.memory_space<vmem>>, vector<1x1x128x128xf32>
    %210 = vector.shape_cast %209 : vector<1x1x128x128xf32> to vector<128x128xf32>
    %cst_190 = arith.constant dense<0.000000e+00> : vector<8x128xf32>
    %211 = tpu.matmul %208, %210, %cst_190 {dimension_numbers = #tpu.dot_dimension_numbers<[1], [0], [0], [1], [0, 0, 1, 1], [], []>} : vector<8x128xf32>, vector<128x128xf32>, vector<8x128xf32> -> vector<8x128xf32>
    %c1_191 = arith.constant 1 : index
    %c0_192 = arith.constant 0 : index
    %c0_193 = arith.constant 0 : index
    %c0_194 = arith.constant 0 : index
    %212 = vector.load %arg4[%c1_191, %c0_192, %c0_193, %c0_194] : memref<2x5x128x128xf32, #tpu.memory_space<vmem>>, vector<1x1x128x128xf32>
    %213 = vector.shape_cast %212 : vector<1x1x128x128xf32> to vector<128x128xf32>
    %cst_195 = arith.constant dense<0.000000e+00> : vector<8x128xf32>
    %214 = tpu.matmul %208, %213, %cst_195 {dimension_numbers = #tpu.dot_dimension_numbers<[1], [0], [0], [1], [0, 0, 1, 1], [], []>} : vector<8x128xf32>, vector<128x128xf32>, vector<8x128xf32> -> vector<8x128xf32>
    %215 = vector.extract_strided_slice %207 {offsets = [1, 0], sizes = [8, 128], strides = [1, 1]} : vector<12x128xf32> to vector<8x128xf32>
    %c0_196 = arith.constant 0 : index
    %c1_197 = arith.constant 1 : index
    %c0_198 = arith.constant 0 : index
    %c0_199 = arith.constant 0 : index
    %216 = vector.load %arg4[%c0_196, %c1_197, %c0_198, %c0_199] : memref<2x5x128x128xf32, #tpu.memory_space<vmem>>, vector<1x1x128x128xf32>
    %217 = vector.shape_cast %216 : vector<1x1x128x128xf32> to vector<128x128xf32>
    %cst_200 = arith.constant dense<0.000000e+00> : vector<8x128xf32>
    %218 = tpu.matmul %215, %217, %cst_200 {dimension_numbers = #tpu.dot_dimension_numbers<[1], [0], [0], [1], [0, 0, 1, 1], [], []>} : vector<8x128xf32>, vector<128x128xf32>, vector<8x128xf32> -> vector<8x128xf32>
    %c1_201 = arith.constant 1 : index
    %c1_202 = arith.constant 1 : index
    %c0_203 = arith.constant 0 : index
    %c0_204 = arith.constant 0 : index
    %219 = vector.load %arg4[%c1_201, %c1_202, %c0_203, %c0_204] : memref<2x5x128x128xf32, #tpu.memory_space<vmem>>, vector<1x1x128x128xf32>
    %220 = vector.shape_cast %219 : vector<1x1x128x128xf32> to vector<128x128xf32>
    %cst_205 = arith.constant dense<0.000000e+00> : vector<8x128xf32>
    %221 = tpu.matmul %215, %220, %cst_205 {dimension_numbers = #tpu.dot_dimension_numbers<[1], [0], [0], [1], [0, 0, 1, 1], [], []>} : vector<8x128xf32>, vector<128x128xf32>, vector<8x128xf32> -> vector<8x128xf32>
    %222 = arith.addf %211, %218 : vector<8x128xf32>
    %223 = arith.addf %214, %221 : vector<8x128xf32>
    %224 = vector.extract_strided_slice %207 {offsets = [2, 0], sizes = [8, 128], strides = [1, 1]} : vector<12x128xf32> to vector<8x128xf32>
    %c0_206 = arith.constant 0 : index
    %c2_207 = arith.constant 2 : index
    %c0_208 = arith.constant 0 : index
    %c0_209 = arith.constant 0 : index
    %225 = vector.load %arg4[%c0_206, %c2_207, %c0_208, %c0_209] : memref<2x5x128x128xf32, #tpu.memory_space<vmem>>, vector<1x1x128x128xf32>
    %226 = vector.shape_cast %225 : vector<1x1x128x128xf32> to vector<128x128xf32>
    %cst_210 = arith.constant dense<0.000000e+00> : vector<8x128xf32>
    %227 = tpu.matmul %224, %226, %cst_210 {dimension_numbers = #tpu.dot_dimension_numbers<[1], [0], [0], [1], [0, 0, 1, 1], [], []>} : vector<8x128xf32>, vector<128x128xf32>, vector<8x128xf32> -> vector<8x128xf32>
    %c1_211 = arith.constant 1 : index
    %c2_212 = arith.constant 2 : index
    %c0_213 = arith.constant 0 : index
    %c0_214 = arith.constant 0 : index
    %228 = vector.load %arg4[%c1_211, %c2_212, %c0_213, %c0_214] : memref<2x5x128x128xf32, #tpu.memory_space<vmem>>, vector<1x1x128x128xf32>
    %229 = vector.shape_cast %228 : vector<1x1x128x128xf32> to vector<128x128xf32>
    %cst_215 = arith.constant dense<0.000000e+00> : vector<8x128xf32>
    %230 = tpu.matmul %224, %229, %cst_215 {dimension_numbers = #tpu.dot_dimension_numbers<[1], [0], [0], [1], [0, 0, 1, 1], [], []>} : vector<8x128xf32>, vector<128x128xf32>, vector<8x128xf32> -> vector<8x128xf32>
    %231 = arith.addf %222, %227 : vector<8x128xf32>
    %232 = arith.addf %223, %230 : vector<8x128xf32>
    %233 = vector.extract_strided_slice %207 {offsets = [3, 0], sizes = [8, 128], strides = [1, 1]} : vector<12x128xf32> to vector<8x128xf32>
    %c0_216 = arith.constant 0 : index
    %c3_217 = arith.constant 3 : index
    %c0_218 = arith.constant 0 : index
    %c0_219 = arith.constant 0 : index
    %234 = vector.load %arg4[%c0_216, %c3_217, %c0_218, %c0_219] : memref<2x5x128x128xf32, #tpu.memory_space<vmem>>, vector<1x1x128x128xf32>
    %235 = vector.shape_cast %234 : vector<1x1x128x128xf32> to vector<128x128xf32>
    %cst_220 = arith.constant dense<0.000000e+00> : vector<8x128xf32>
    %236 = tpu.matmul %233, %235, %cst_220 {dimension_numbers = #tpu.dot_dimension_numbers<[1], [0], [0], [1], [0, 0, 1, 1], [], []>} : vector<8x128xf32>, vector<128x128xf32>, vector<8x128xf32> -> vector<8x128xf32>
    %c1_221 = arith.constant 1 : index
    %c3_222 = arith.constant 3 : index
    %c0_223 = arith.constant 0 : index
    %c0_224 = arith.constant 0 : index
    %237 = vector.load %arg4[%c1_221, %c3_222, %c0_223, %c0_224] : memref<2x5x128x128xf32, #tpu.memory_space<vmem>>, vector<1x1x128x128xf32>
    %238 = vector.shape_cast %237 : vector<1x1x128x128xf32> to vector<128x128xf32>
    %cst_225 = arith.constant dense<0.000000e+00> : vector<8x128xf32>
    %239 = tpu.matmul %233, %238, %cst_225 {dimension_numbers = #tpu.dot_dimension_numbers<[1], [0], [0], [1], [0, 0, 1, 1], [], []>} : vector<8x128xf32>, vector<128x128xf32>, vector<8x128xf32> -> vector<8x128xf32>
    %240 = arith.addf %231, %236 : vector<8x128xf32>
    %241 = arith.addf %232, %239 : vector<8x128xf32>
    %242 = vector.extract_strided_slice %207 {offsets = [4, 0], sizes = [8, 128], strides = [1, 1]} : vector<12x128xf32> to vector<8x128xf32>
    %c0_226 = arith.constant 0 : index
    %c4_227 = arith.constant 4 : index
    %c0_228 = arith.constant 0 : index
    %c0_229 = arith.constant 0 : index
    %243 = vector.load %arg4[%c0_226, %c4_227, %c0_228, %c0_229] : memref<2x5x128x128xf32, #tpu.memory_space<vmem>>, vector<1x1x128x128xf32>
    %244 = vector.shape_cast %243 : vector<1x1x128x128xf32> to vector<128x128xf32>
    %cst_230 = arith.constant dense<0.000000e+00> : vector<8x128xf32>
    %245 = tpu.matmul %242, %244, %cst_230 {dimension_numbers = #tpu.dot_dimension_numbers<[1], [0], [0], [1], [0, 0, 1, 1], [], []>} : vector<8x128xf32>, vector<128x128xf32>, vector<8x128xf32> -> vector<8x128xf32>
    %c1_231 = arith.constant 1 : index
    %c4_232 = arith.constant 4 : index
    %c0_233 = arith.constant 0 : index
    %c0_234 = arith.constant 0 : index
    %246 = vector.load %arg4[%c1_231, %c4_232, %c0_233, %c0_234] : memref<2x5x128x128xf32, #tpu.memory_space<vmem>>, vector<1x1x128x128xf32>
    %247 = vector.shape_cast %246 : vector<1x1x128x128xf32> to vector<128x128xf32>
    %cst_235 = arith.constant dense<0.000000e+00> : vector<8x128xf32>
    %248 = tpu.matmul %242, %247, %cst_235 {dimension_numbers = #tpu.dot_dimension_numbers<[1], [0], [0], [1], [0, 0, 1, 1], [], []>} : vector<8x128xf32>, vector<128x128xf32>, vector<8x128xf32> -> vector<8x128xf32>
    %249 = arith.addf %240, %245 : vector<8x128xf32>
    %250 = arith.addf %241, %248 : vector<8x128xf32>
    %251 = vector.broadcast %1 : vector<1x128xf32> to vector<8x128xf32>
    %252 = arith.addf %249, %251 : vector<8x128xf32>
    %cst_236 = arith.constant 0.000000e+00 : f32
    %253 = vector.broadcast %cst_236 : f32 to vector<8x128xf32>
    %254 = arith.maximumf %252, %253 : vector<8x128xf32>
    %255 = vector.broadcast %1 : vector<1x128xf32> to vector<8x128xf32>
    %256 = arith.addf %250, %255 : vector<8x128xf32>
    %cst_237 = arith.constant 0.000000e+00 : f32
    %257 = vector.broadcast %cst_237 : f32 to vector<8x128xf32>
    %258 = arith.maximumf %256, %257 : vector<8x128xf32>
    %259 = arith.maximumf %254, %258 : vector<8x128xf32>
    %260 = vector.shape_cast %259 : vector<8x128xf32> to vector<4x2x128xf32>
    %261 = vector.extract_strided_slice %260 {offsets = [0, 0, 0], sizes = [4, 1, 128], strides = [1, 1, 1]} : vector<4x2x128xf32> to vector<4x1x128xf32>
    %262 = vector.shape_cast %261 : vector<4x1x128xf32> to vector<4x128xf32>
    %263 = vector.extract_strided_slice %260 {offsets = [0, 1, 0], sizes = [4, 1, 128], strides = [1, 1, 1]} : vector<4x2x128xf32> to vector<4x1x128xf32>
    %264 = vector.shape_cast %263 : vector<4x1x128xf32> to vector<4x128xf32>
    %265 = arith.maximumf %262, %264 : vector<4x128xf32>
    %266 = vector.extract_strided_slice %265 {offsets = [0, 0], sizes = [1, 128], strides = [1, 1]} : vector<4x128xf32> to vector<1x128xf32>
    %c0_238 = arith.constant 0 : index
    %c0_239 = arith.constant 0 : index
    %c0_240 = arith.constant 0 : index
    %267 = vector.load %arg6[%c0_238, %c0_239, %c0_240] : memref<4x128x64xf32, #tpu.memory_space<vmem>>, vector<1x128x64xf32>
    %268 = vector.shape_cast %267 : vector<1x128x64xf32> to vector<128x64xf32>
    %cst_241 = arith.constant dense<0.000000e+00> : vector<1x64xf32>
    %269 = tpu.matmul %266, %268, %cst_241 {dimension_numbers = #tpu.dot_dimension_numbers<[1], [0], [0], [1], [0, 0, 1, 1], [], []>} : vector<1x128xf32>, vector<128x64xf32>, vector<1x64xf32> -> vector<1x64xf32>
    %270 = arith.addf %2, %269 : vector<1x64xf32>
    %271 = vector.extract_strided_slice %265 {offsets = [1, 0], sizes = [1, 128], strides = [1, 1]} : vector<4x128xf32> to vector<1x128xf32>
    %c1_242 = arith.constant 1 : index
    %c0_243 = arith.constant 0 : index
    %c0_244 = arith.constant 0 : index
    %272 = vector.load %arg6[%c1_242, %c0_243, %c0_244] : memref<4x128x64xf32, #tpu.memory_space<vmem>>, vector<1x128x64xf32>
    %273 = vector.shape_cast %272 : vector<1x128x64xf32> to vector<128x64xf32>
    %cst_245 = arith.constant dense<0.000000e+00> : vector<1x64xf32>
    %274 = tpu.matmul %271, %273, %cst_245 {dimension_numbers = #tpu.dot_dimension_numbers<[1], [0], [0], [1], [0, 0, 1, 1], [], []>} : vector<1x128xf32>, vector<128x64xf32>, vector<1x64xf32> -> vector<1x64xf32>
    %275 = arith.addf %270, %274 : vector<1x64xf32>
    %276 = vector.extract_strided_slice %265 {offsets = [2, 0], sizes = [1, 128], strides = [1, 1]} : vector<4x128xf32> to vector<1x128xf32>
    %c2_246 = arith.constant 2 : index
    %c0_247 = arith.constant 0 : index
    %c0_248 = arith.constant 0 : index
    %277 = vector.load %arg6[%c2_246, %c0_247, %c0_248] : memref<4x128x64xf32, #tpu.memory_space<vmem>>, vector<1x128x64xf32>
    %278 = vector.shape_cast %277 : vector<1x128x64xf32> to vector<128x64xf32>
    %cst_249 = arith.constant dense<0.000000e+00> : vector<1x64xf32>
    %279 = tpu.matmul %276, %278, %cst_249 {dimension_numbers = #tpu.dot_dimension_numbers<[1], [0], [0], [1], [0, 0, 1, 1], [], []>} : vector<1x128xf32>, vector<128x64xf32>, vector<1x64xf32> -> vector<1x64xf32>
    %280 = arith.addf %275, %279 : vector<1x64xf32>
    %281 = vector.extract_strided_slice %265 {offsets = [3, 0], sizes = [1, 128], strides = [1, 1]} : vector<4x128xf32> to vector<1x128xf32>
    %c3_250 = arith.constant 3 : index
    %c0_251 = arith.constant 0 : index
    %c0_252 = arith.constant 0 : index
    %282 = vector.load %arg6[%c3_250, %c0_251, %c0_252] : memref<4x128x64xf32, #tpu.memory_space<vmem>>, vector<1x128x64xf32>
    %283 = vector.shape_cast %282 : vector<1x128x64xf32> to vector<128x64xf32>
    %cst_253 = arith.constant dense<0.000000e+00> : vector<1x64xf32>
    %284 = tpu.matmul %281, %283, %cst_253 {dimension_numbers = #tpu.dot_dimension_numbers<[1], [0], [0], [1], [0, 0, 1, 1], [], []>} : vector<1x128xf32>, vector<128x64xf32>, vector<1x64xf32> -> vector<1x64xf32>
    %285 = arith.addf %280, %284 : vector<1x64xf32>
    %cst_254 = arith.constant dense<0.000000e+00> : vector<1x128xf32>
    %286 = tpu.matmul %285, %4, %cst_254 {dimension_numbers = #tpu.dot_dimension_numbers<[1], [0], [0], [1], [0, 0, 1, 1], [], []>} : vector<1x64xf32>, vector<64x128xf32>, vector<1x128xf32> -> vector<1x128xf32>
    %287 = arith.addf %286, %3 : vector<1x128xf32>
    %c1_255 = arith.constant 1 : index
    %c0_256 = arith.constant 0 : index
    %c0_257 = arith.constant 0 : index
    %288 = vector.load %arg10[%c1_255, %c0_256, %c0_257] : memref<2x1x128xf32, #tpu.memory_space<vmem>>, vector<1x1x128xf32>
    %289 = vector.shape_cast %288 : vector<1x1x128xf32> to vector<1x128xf32>
    %290 = vector.shape_cast %287 : vector<1x128xf32> to vector<1x1x128xf32>
    tpu.vector_store %arg10[%c1_255, %c0_256, %c0_257], %290 {strides = array<i32>} : memref<2x1x128xf32, #tpu.memory_space<vmem>>, vector<1x1x128xf32>,
    return
  }
  func.func @transform_0(%arg0: i32) -> (i32, i32, i32) {
    %c0_i32 = arith.constant 0 : i32
    %c0_i32_0 = arith.constant 0 : i32
    %c0_i32_1 = arith.constant 0 : i32
    return %arg0, %c0_i32, %c0_i32_0 : i32, i32, i32
  }
  func.func @transform_1(%arg0: i32) -> (i32, i32, i32, i32) {
    %c0_i32 = arith.constant 0 : i32
    %c0_i32_0 = arith.constant 0 : i32
    %c0_i32_1 = arith.constant 0 : i32
    %c0_i32_2 = arith.constant 0 : i32
    %c0_i32_3 = arith.constant 0 : i32
    return %c0_i32, %c0_i32_0, %c0_i32_1, %c0_i32_2 : i32, i32, i32, i32
  }
  func.func @transform_2(%arg0: i32) -> (i32, i32) {
    %c0_i32 = arith.constant 0 : i32
    %c0_i32_0 = arith.constant 0 : i32
    %c0_i32_1 = arith.constant 0 : i32
    return %c0_i32, %c0_i32_0 : i32, i32
  }
  func.func @transform_3(%arg0: i32) -> (i32, i32, i32, i32) {
    %c0_i32 = arith.constant 0 : i32
    %c0_i32_0 = arith.constant 0 : i32
    %c0_i32_1 = arith.constant 0 : i32
    %c0_i32_2 = arith.constant 0 : i32
    %c0_i32_3 = arith.constant 0 : i32
    return %c0_i32, %c0_i32_0, %c0_i32_1, %c0_i32_2 : i32, i32, i32, i32
  }
  func.func @transform_4(%arg0: i32) -> (i32, i32) {
    %c0_i32 = arith.constant 0 : i32
    %c0_i32_0 = arith.constant 0 : i32
    %c0_i32_1 = arith.constant 0 : i32
    return %c0_i32, %c0_i32_0 : i32, i32
  }
  func.func @transform_5(%arg0: i32) -> (i32, i32, i32) {
    %c0_i32 = arith.constant 0 : i32
    %c0_i32_0 = arith.constant 0 : i32
    %c0_i32_1 = arith.constant 0 : i32
    %c0_i32_2 = arith.constant 0 : i32
    return %c0_i32, %c0_i32_0, %c0_i32_1 : i32, i32, i32
  }
  func.func @transform_6(%arg0: i32) -> (i32, i32) {
    %c0_i32 = arith.constant 0 : i32
    %c0_i32_0 = arith.constant 0 : i32
    %c0_i32_1 = arith.constant 0 : i32
    return %c0_i32, %c0_i32_0 : i32, i32
  }
  func.func @transform_7(%arg0: i32) -> (i32, i32) {
    %c0_i32 = arith.constant 0 : i32
    %c0_i32_0 = arith.constant 0 : i32
    %c0_i32_1 = arith.constant 0 : i32
    return %c0_i32, %c0_i32_0 : i32, i32
  }
  func.func @transform_8(%arg0: i32) -> (i32, i32) {
    %c0_i32 = arith.constant 0 : i32
    %c0_i32_0 = arith.constant 0 : i32
    %c0_i32_1 = arith.constant 0 : i32
    return %c0_i32, %c0_i32_0 : i32, i32
  }
  func.func @transform_9(%arg0: i32) -> (i32, i32, i32) {
    %c0_i32 = arith.constant 0 : i32
    %c0_i32_0 = arith.constant 0 : i32
    %c0_i32_1 = arith.constant 0 : i32
    return %arg0, %c0_i32, %c0_i32_0 : i32, i32, i32
  }
}

</mosaic_0001>

<llo_original>
// kernel: net_forward.1
$region0: #{net_forward.1}
  #allocation0 [shape = 'u32[]', space=smem, size = 0x4, offset = 0x4, fixed_abs, tag = 'smem constant byte address 0x4 - core index']
  #allocation1 [shape = 'u32[144,128]{1,0:T(1,128)}', space=vmem, size = 0x12000, scoped, tag = 'internal scratch']
  %s0 = inlined_call_operand.vmem [shape: f32[2,28,32], index: 0, kind: input, shape index: {}]
  %s1 = inlined_call_operand.vmem [shape: f32[2,5,32,128], index: 1, kind: input, shape index: {}]
  %s2 = inlined_call_operand.vmem [shape: f32[1,128], index: 2, kind: input, shape index: {}]
  %s3 = inlined_call_operand.hbm [shape: f32[2,5,128,128], index: 3, kind: input, shape index: {}]
  %s4 = inlined_call_operand.vmem [shape: f32[1,128], index: 4, kind: input, shape index: {}]
  %s5 = inlined_call_operand.vmem [shape: f32[4,128,64], index: 5, kind: input, shape index: {}]
  %s6 = inlined_call_operand.vmem [shape: f32[1,64], index: 6, kind: input, shape index: {}]
  %s7 = inlined_call_operand.vmem [shape: f32[64,128], index: 7, kind: input, shape index: {}]
  %s8 = inlined_call_operand.vmem [shape: f32[1,128], index: 8, kind: input, shape index: {}]
  %s9 = inlined_call_operand.hbm [shape: f32[2,1,128], index: 9, kind: output, shape index: {}]
  %s10 = sld [smem:[#allocation0]]
  $region50: #{net_forward.1} parent=0
    _
  %s12 = ssub.s32 1, %s10
  %s13 = scalar_select 0, %s12, %s10
  $region1: #{net_forward.1} parent=0
    #allocation2 [shape = 'u8[655360]{0}', space=vmem, size = 0xa0000, scoped, tag = 'input window, operand 3, single buffered']
    #allocation3 [shape = 's32[1]{0}', space=sflag, size = 0x4, scoped, tag = 'scoped memory for net_forward.1']
    #allocation4 [shape = 's32[1]{0}', space=sflag, size = 0x4, scoped, tag = 'scoped memory for net_forward.1']
    #allocation5 [shape = 'u8[1024]{0}', space=vmem, size = 0x400, scoped, tag = 'output window, operand 0, single buffered']
    %14 = vsyncpa [#allocation3], 0
    %15 = vsyncpa [#allocation4], 0
    // Predicated region
    $region2: #{net_forward.1} parent=1 // pred_check
      _
    $region3: #{net_forward.1} parent=1 // pred_check_branch
      %17 = sbr.rel (0) target = $region5
    $region4: #{net_forward.1} parent=1 // pred_region
      _
    $region5: #{net_forward.1} parent=1 // pred_fallthru
      _
    // Predicated region
    $region6: #{net_forward.1} parent=1 // pred_check
      _
    $region7: #{net_forward.1} parent=1 // pred_check_branch
      %19 = sbr.rel (0) target = $region9
    $region8: #{net_forward.1} parent=1 // pred_region
      _
    $region9: #{net_forward.1} parent=1 // pred_fallthru
      _
    // Predicated region
    $region10: #{net_forward.1} parent=1 // pred_check
      _
    $region11: #{net_forward.1} parent=1 // pred_check_branch
      %21 = sbr.rel (0) target = $region13
    $region12: #{net_forward.1} parent=1 // pred_region
      _
    $region13: #{net_forward.1} parent=1 // pred_fallthru
      _
    // Predicated region
    $region14: #{net_forward.1} parent=1 // pred_check
      _
    $region15: #{net_forward.1} parent=1 // pred_check_branch
      %23 = sbr.rel (0) target = $region17
    $region16: #{net_forward.1} parent=1 // pred_region
      %s25 = ssub.s32 20480, 20480
      %26 = vsyncadd [#allocation3], %s25
      %s27 = sshll.u32 [#allocation2], 4
      %s28 = int_to_ptr.vmem [resolvable:$true] %s27
      %33 = dma.hbm_to_vmem [thread:$0]  %s3, 20480, %s28, [#allocation3], 128, 128, 8
    $region17: #{net_forward.1} parent=1 // pred_fallthru
      _
    // Predicated region
    $region18: #{net_forward.1} parent=1 // pred_check
      _
    $region19: #{net_forward.1} parent=1 // pred_check_branch
      %35 = sbr.rel (0) target = $region21
    $region20: #{net_forward.1} parent=1 // pred_region
      _
    $region21: #{net_forward.1} parent=1 // pred_fallthru
      _
    // Predicated region
    $region22: #{net_forward.1} parent=1 // pred_check
      _
    $region23: #{net_forward.1} parent=1 // pred_check_branch
      %37 = sbr.rel (0) target = $region25
    $region24: #{net_forward.1} parent=1 // pred_region
      _
    $region25: #{net_forward.1} parent=1 // pred_fallthru
      _
    // Predicated region
    $region26: #{net_forward.1} parent=1 // pred_check
      _
    $region27: #{net_forward.1} parent=1 // pred_check_branch
      %39 = sbr.rel (0) target = $region29
    $region28: #{net_forward.1} parent=1 // pred_region
      _
    $region29: #{net_forward.1} parent=1 // pred_fallthru
      _
    // Predicated region
    $region30: #{net_forward.1} parent=1 // pred_check
      _
    $region31: #{net_forward.1} parent=1 // pred_check_branch
      %41 = sbr.rel (0) target = $region33
    $region32: #{net_forward.1} parent=1 // pred_region
      _
    $region33: #{net_forward.1} parent=1 // pred_fallthru
      _
    // Predicated region
    $region34: #{net_forward.1} parent=1 // pred_check
      _
    $region35: #{net_forward.1} parent=1 // pred_check_branch
      %43 = sbr.rel (0) target = $region37
    $region36: #{net_forward.1} parent=1 // pred_region
      _
    $region37: #{net_forward.1} parent=1 // pred_fallthru
      _
    // Predicated region
    $region38: #{net_forward.1} parent=1 // pred_check
      _
    $region39: #{net_forward.1} parent=1 // pred_check_branch
      %45 = sbr.rel (0) target = $region41
    $region40: #{net_forward.1} parent=1 // pred_region
      %46 = dma.done [#allocation3], 20480
    $region41: #{net_forward.1} parent=1 // pred_fallthru
      _
    %v47 = vld [vmem:[%s2] sm:$0x1]
    %v48 = vld [vmem:[%s4] sm:$0x1]
    %v49 = vld [vmem:[%s6] sm:$0x1]
    %v50 = vld [vmem:[%s8] sm:$0x1]
    %v51 = vld [vmem:[%s7] sm:$0xff]
    %v52 = vld [vmem:[%s7 + $0x8] sm:$0xff]
    %v53 = vld [vmem:[%s7 + $0x10] sm:$0xff]
    %v54 = vld [vmem:[%s7 + $0x18] sm:$0xff]
    %v55 = vld [vmem:[%s7 + $0x20] sm:$0xff]
    %v56 = vld [vmem:[%s7 + $0x28] sm:$0xff]
    %v57 = vld [vmem:[%s7 + $0x30] sm:$0xff]
    %v58 = vld [vmem:[%s7 + $0x38] sm:$0xff]
    %v59 = vld [vmem:[%s0] sm:$0xff]
    %v60 = vld [vmem:[%s0 + $0x8] sm:$0xff]
    %v61 = vld [vmem:[%s0 + $0x10] sm:$0xff]
    %v62 = vld [vmem:[%s0 + $0x18] sm:$0xf]
    %v63 = vld [vmem:[%s1] sm:$0xff]
    %v64 = vld [vmem:[%s1 + $0x8] sm:$0xff]
    %v65 = vld [vmem:[%s1 + $0x10] sm:$0xff]
    %v66 = vld [vmem:[%s1 + $0x18] sm:$0xff]
    %s67 = scalar_lea.vmem %s1, 160
    %v68 = vld [vmem:[%s67] sm:$0xff]
    %v69 = vld [vmem:[%s67 + $0x8] sm:$0xff]
    %v70 = vld [vmem:[%s67 + $0x10] sm:$0xff]
    %v71 = vld [vmem:[%s67 + $0x18] sm:$0xff]
    %s72 = scalar_lea.vmem %s1, 32
    %v73 = vld [vmem:[%s72] sm:$0xff]
    %v74 = vld [vmem:[%s72 + $0x8] sm:$0xff]
    %v75 = vld [vmem:[%s72 + $0x10] sm:$0xff]
    %v76 = vld [vmem:[%s72 + $0x18] sm:$0xff]
    %vm81 = vcmask 1046528
    %v82 = vrot.slane %v59, 1
    %v83 = vrot.slane %v60, 1
    %v84 = vsel %vm81, %v82, %v83
    %v85 = vrot.slane %v61, 1
    %v86 = vsel %vm81, %v83, %v85
    %v87 = vrot.slane %v62, 1
    %v88 = vsel %vm81, %v85, %v87
    %vm89 = vcmask 261120
    %v90 = vsel %vm89, %v84, 0
    %v92 = vsel %vm89, %v86, 0
    %v94 = vsel %vm89, %v88, 0
    %96 = vmatprep.subr.mxu0 0.0
    %97 = vmatpush1.msra.mxu0 0.0
    %98 = vmatprep.subr.mxu0 0.0
    %99 = vmatpush1.msra.mxu0 0.0
    %100 = vmatprep.subr.mxu0 0.0
    %101 = vmatpush1.msra.mxu0 0.0
    %102 = vmatprep.subr.mxu0 0.0
    %103 = vmatpush1.msra.mxu0 0.0
    %104 = vmatprep.subr.mxu0 0.0
    %105 = vmatpush1.msra.mxu0 0.0
    %106 = vmatprep.subr.mxu0 0.0
    %107 = vmatpush1.msra.mxu0 0.0
    %108 = vmatprep.subr.mxu0 0.0
    %109 = vmatpush1.msra.mxu0 0.0
    %110 = vmatprep.subr.mxu0 0.0
    %111 = vmatpush1.msra.mxu0 0.0
    %112 = vmatprep.subr.mxu0 0.0
    %113 = vmatpush1.msra.mxu0 0.0
    %114 = vmatprep.subr.mxu0 0.0
    %115 = vmatpush1.msra.mxu0 0.0
    %116 = vmatprep.subr.mxu0 0.0
    %117 = vmatpush1.msra.mxu0 0.0
    %118 = vmatprep.subr.mxu0 0.0
    %119 = vmatpush1.msra.mxu0 0.0
    %120 = vmatprep.subr.mxu0 0.0
    %121 = vmatpush1.msra.mxu0 %v76
    %122 = vmatprep.subr.mxu0 0.0
    %123 = vmatpush1.msra.mxu0 %v75
    %124 = vmatprep.subr.mxu0 0.0
    %125 = vmatpush1.msra.mxu0 %v74
    %126 = vmatprep.subr.mxu0 0.0
    %127 = vmatpush1.msra.mxu0 %v73
    %128 = vmatprep.subr.mxu0 0.0
    %129 = vmatpush2.msra.mxu0 0.0
    %130 = vmatprep.subr.mxu0 0.0
    %131 = vmatpush2.msra.mxu0 0.0
    %132 = vmatprep.subr.mxu0 0.0
    %133 = vmatpush2.msra.mxu0 0.0
    %134 = vmatprep.subr.mxu0 0.0
    %135 = vmatpush2.msra.mxu0 0.0
    %136 = vmatprep.subr.mxu0 0.0
    %137 = vmatpush2.msra.mxu0 0.0
    %138 = vmatprep.subr.mxu0 0.0
    %139 = vmatpush2.msra.mxu0 0.0
    %140 = vmatprep.subr.mxu0 0.0
    %141 = vmatpush2.msra.mxu0 0.0
    %142 = vmatprep.subr.mxu0 0.0
    %143 = vmatpush2.msra.mxu0 0.0
    %144 = vmatprep.subr.mxu0 0.0
    %145 = vmatpush2.msra.mxu0 0.0
    %146 = vmatprep.subr.mxu0 0.0
    %147 = vmatpush2.msra.mxu0 0.0
    %148 = vmatprep.subr.mxu0 0.0
    %149 = vmatpush2.msra.mxu0 0.0
    %150 = vmatprep.subr.mxu0 0.0
    %151 = vmatpush2.msra.mxu0 0.0
    %152 = vmatprep.subr.mxu0 0.0
    %153 = vmatpush2.msra.mxu0 0.0
    %154 = vmatprep.subr.mxu0 0.0
    %155 = vmatpush2.msra.mxu0 0.0
    %156 = vmatprep.subr.mxu0 0.0
    %157 = vmatpush2.msra.mxu0 0.0
    %158 = vmatprep.subr.mxu0 0.0
    %159 = vmatpush2.msra.mxu0 0.0
    %160 = vmatprep.mubr.f32.mxu0 0.0
    %161 = vmatmul.mubr.f32.gmra.mxu0 %v90
    %v162 = vpop.f32.mrf.mxu0
    %v163 = vadd.f32 0.0, %v162
    %v164 = vpop.f32.mrf.mxu0
    %165 = vmatprep.mubr.f32.mxu0 0.0
    %166 = vmatmul.mubr.f32.gmra.mxu0 %v92
    %v167 = vpop.f32.mrf.mxu0
    %v168 = vadd.f32 0.0, %v167
    %v169 = vpop.f32.mrf.mxu0
    %170 = vmatprep.mubr.f32.mxu0 0.0
    %171 = vmatmul.mubr.f32.gmra.mxu0 %v94
    %v172 = vpop.f32.mrf.mxu0
    %v173 = vadd.f32 0.0, %v172
    %v174 = vpop.f32.mrf.mxu0
    %175 = vdwg.mxu0
    %s176 = scalar_lea.vmem %s1, 192
    %v177 = vld [vmem:[%s176] sm:$0xff]
    %v178 = vld [vmem:[%s176 + $0x8] sm:$0xff]
    %v179 = vld [vmem:[%s176 + $0x10] sm:$0xff]
    %v180 = vld [vmem:[%s176 + $0x18] sm:$0xff]
    %181 = vmatprep.subr.mxu0 0.0
    %182 = vmatpush1.msra.mxu0 0.0
    %183 = vmatprep.subr.mxu0 0.0
    %184 = vmatpush1.msra.mxu0 0.0
    %185 = vmatprep.subr.mxu0 0.0
    %186 = vmatpush1.msra.mxu0 0.0
    %187 = vmatprep.subr.mxu0 0.0
    %188 = vmatpush1.msra.mxu0 0.0
    %189 = vmatprep.subr.mxu0 0.0
    %190 = vmatpush1.msra.mxu0 0.0
    %191 = vmatprep.subr.mxu0 0.0
    %192 = vmatpush1.msra.mxu0 0.0
    %193 = vmatprep.subr.mxu0 0.0
    %194 = vmatpush1.msra.mxu0 0.0
    %195 = vmatprep.subr.mxu0 0.0
    %196 = vmatpush1.msra.mxu0 0.0
    %197 = vmatprep.subr.mxu0 0.0
    %198 = vmatpush1.msra.mxu0 0.0
    %199 = vmatprep.subr.mxu0 0.0
    %200 = vmatpush1.msra.mxu0 0.0
    %201 = vmatprep.subr.mxu0 0.0
    %202 = vmatpush1.msra.mxu0 0.0
    %203 = vmatprep.subr.mxu0 0.0
    %204 = vmatpush1.msra.mxu0 0.0
    %205 = vmatprep.subr.mxu0 0.0
    %206 = vmatpush1.msra.mxu0 %v180
    %207 = vmatprep.subr.mxu0 0.0
    %208 = vmatpush1.msra.mxu0 %v179
    %209 = vmatprep.subr.mxu0 0.0
    %210 = vmatpush1.msra.mxu0 %v178
    %211 = vmatprep.subr.mxu0 0.0
    %212 = vmatpush1.msra.mxu0 %v177
    %213 = vmatprep.subr.mxu0 0.0
    %214 = vmatpush2.msra.mxu0 0.0
    %215 = vmatprep.subr.mxu0 0.0
    %216 = vmatpush2.msra.mxu0 0.0
    %217 = vmatprep.subr.mxu0 0.0
    %218 = vmatpush2.msra.mxu0 0.0
    %219 = vmatprep.subr.mxu0 0.0
    %220 = vmatpush2.msra.mxu0 0.0
    %221 = vmatprep.subr.mxu0 0.0
    %222 = vmatpush2.msra.mxu0 0.0
    %223 = vmatprep.subr.mxu0 0.0
    %224 = vmatpush2.msra.mxu0 0.0
    %225 = vmatprep.subr.mxu0 0.0
    %226 = vmatpush2.msra.mxu0 0.0
    %227 = vmatprep.subr.mxu0 0.0
    %228 = vmatpush2.msra.mxu0 0.0
    %229 = vmatprep.subr.mxu0 0.0
    %230 = vmatpush2.msra.mxu0 0.0
    %231 = vmatprep.subr.mxu0 0.0
    %232 = vmatpush2.msra.mxu0 0.0
    %233 = vmatprep.subr.mxu0 0.0
    %234 = vmatpush2.msra.mxu0 0.0
    %235 = vmatprep.subr.mxu0 0.0
    %236 = vmatpush2.msra.mxu0 0.0
    %237 = vmatprep.subr.mxu0 0.0
    %238 = vmatpush2.msra.mxu0 0.0
    %239 = vmatprep.subr.mxu0 0.0
    %240 = vmatpush2.msra.mxu0 0.0
    %241 = vmatprep.subr.mxu0 0.0
    %242 = vmatpush2.msra.mxu0 0.0
    %243 = vmatprep.subr.mxu0 0.0
    %244 = vmatpush2.msra.mxu0 0.0
    %245 = vmatprep.mubr.f32.mxu0 0.0
    %246 = vmatmul.mubr.f32.gmra.mxu0 %v90
    %v247 = vpop.f32.mrf.mxu0
    %v248 = vadd.f32 0.0, %v247
    %v249 = vpop.f32.mrf.mxu0
    %250 = vmatprep.mubr.f32.mxu0 0.0
    %251 = vmatmul.mubr.f32.gmra.mxu0 %v92
    %v252 = vpop.f32.mrf.mxu0
    %v253 = vadd.f32 0.0, %v252
    %v254 = vpop.f32.mrf.mxu0
    %255 = vmatprep.mubr.f32.mxu0 0.0
    %256 = vmatmul.mubr.f32.gmra.mxu0 %v94
    %v257 = vpop.f32.mrf.mxu0
    %v258 = vadd.f32 0.0, %v257
    %v259 = vpop.f32.mrf.mxu0
    %260 = vdwg.mxu0
    %v261 = vsel %vm89, %v59, 0
    %v263 = vsel %vm89, %v60, 0
    %v265 = vsel %vm89, %v61, 0
    %267 = vmatprep.subr.mxu0 0.0
    %268 = vmatpush1.msra.mxu0 0.0
    %269 = vmatprep.subr.mxu0 0.0
    %270 = vmatpush1.msra.mxu0 0.0
    %271 = vmatprep.subr.mxu0 0.0
    %272 = vmatpush1.msra.mxu0 0.0
    %273 = vmatprep.subr.mxu0 0.0
    %274 = vmatpush1.msra.mxu0 0.0
    %275 = vmatprep.subr.mxu0 0.0
    %276 = vmatpush1.msra.mxu0 0.0
    %277 = vmatprep.subr.mxu0 0.0
    %278 = vmatpush1.msra.mxu0 0.0
    %279 = vmatprep.subr.mxu0 0.0
    %280 = vmatpush1.msra.mxu0 0.0
    %281 = vmatprep.subr.mxu0 0.0
    %282 = vmatpush1.msra.mxu0 0.0
    %283 = vmatprep.subr.mxu0 0.0
    %284 = vmatpush1.msra.mxu0 0.0
    %285 = vmatprep.subr.mxu0 0.0
    %286 = vmatpush1.msra.mxu0 0.0
    %287 = vmatprep.subr.mxu0 0.0
    %288 = vmatpush1.msra.mxu0 0.0
    %289 = vmatprep.subr.mxu0 0.0
    %290 = vmatpush1.msra.mxu0 0.0
    %291 = vmatprep.subr.mxu0 0.0
    %292 = vmatpush1.msra.mxu0 %v66
    %293 = vmatprep.subr.mxu0 0.0
    %294 = vmatpush1.msra.mxu0 %v65
    %295 = vmatprep.subr.mxu0 0.0
    %296 = vmatpush1.msra.mxu0 %v64
    %297 = vmatprep.subr.mxu0 0.0
    %298 = vmatpush1.msra.mxu0 %v63
    %299 = vmatprep.subr.mxu0 0.0
    %300 = vmatpush2.msra.mxu0 0.0
    %301 = vmatprep.subr.mxu0 0.0
    %302 = vmatpush2.msra.mxu0 0.0
    %303 = vmatprep.subr.mxu0 0.0
    %304 = vmatpush2.msra.mxu0 0.0
    %305 = vmatprep.subr.mxu0 0.0
    %306 = vmatpush2.msra.mxu0 0.0
    %307 = vmatprep.subr.mxu0 0.0
    %308 = vmatpush2.msra.mxu0 0.0
    %309 = vmatprep.subr.mxu0 0.0
    %310 = vmatpush2.msra.mxu0 0.0
    %311 = vmatprep.subr.mxu0 0.0
    %312 = vmatpush2.msra.mxu0 0.0
    %313 = vmatprep.subr.mxu0 0.0
    %314 = vmatpush2.msra.mxu0 0.0
    %315 = vmatprep.subr.mxu0 0.0
    %316 = vmatpush2.msra.mxu0 0.0
    %317 = vmatprep.subr.mxu0 0.0
    %318 = vmatpush2.msra.mxu0 0.0
    %319 = vmatprep.subr.mxu0 0.0
    %320 = vmatpush2.msra.mxu0 0.0
    %321 = vmatprep.subr.mxu0 0.0
    %322 = vmatpush2.msra.mxu0 0.0
    %323 = vmatprep.subr.mxu0 0.0
    %324 = vmatpush2.msra.mxu0 0.0
    %325 = vmatprep.subr.mxu0 0.0
    %326 = vmatpush2.msra.mxu0 0.0
    %327 = vmatprep.subr.mxu0 0.0
    %328 = vmatpush2.msra.mxu0 0.0
    %329 = vmatprep.subr.mxu0 0.0
    %330 = vmatpush2.msra.mxu0 0.0
    %331 = vmatprep.mubr.f32.mxu0 0.0
    %332 = vmatmul.mubr.f32.gmra.mxu0 %v261
    %v333 = vpop.f32.mrf.mxu0
    %v334 = vadd.f32 %v163, %v333
    %v335 = vpop.f32.mrf.mxu0
    %336 = vmatprep.mubr.f32.mxu0 0.0
    %337 = vmatmul.mubr.f32.gmra.mxu0 %v263
    %v338 = vpop.f32.mrf.mxu0
    %v339 = vadd.f32 %v168, %v338
    %v340 = vpop.f32.mrf.mxu0
    %341 = vmatprep.mubr.f32.mxu0 0.0
    %342 = vmatmul.mubr.f32.gmra.mxu0 %v265
    %v343 = vpop.f32.mrf.mxu0
    %v344 = vadd.f32 %v173, %v343
    %v345 = vpop.f32.mrf.mxu0
    %346 = vdwg.mxu0
    %347 = vmatprep.subr.mxu0 0.0
    %348 = vmatpush1.msra.mxu0 0.0
    %349 = vmatprep.subr.mxu0 0.0
    %350 = vmatpush1.msra.mxu0 0.0
    %351 = vmatprep.subr.mxu0 0.0
    %352 = vmatpush1.msra.mxu0 0.0
    %353 = vmatprep.subr.mxu0 0.0
    %354 = vmatpush1.msra.mxu0 0.0
    %355 = vmatprep.subr.mxu0 0.0
    %356 = vmatpush1.msra.mxu0 0.0
    %357 = vmatprep.subr.mxu0 0.0
    %358 = vmatpush1.msra.mxu0 0.0
    %359 = vmatprep.subr.mxu0 0.0
    %360 = vmatpush1.msra.mxu0 0.0
    %361 = vmatprep.subr.mxu0 0.0
    %362 = vmatpush1.msra.mxu0 0.0
    %363 = vmatprep.subr.mxu0 0.0
    %364 = vmatpush1.msra.mxu0 0.0
    %365 = vmatprep.subr.mxu0 0.0
    %366 = vmatpush1.msra.mxu0 0.0
    %367 = vmatprep.subr.mxu0 0.0
    %368 = vmatpush1.msra.mxu0 0.0
    %369 = vmatprep.subr.mxu0 0.0
    %370 = vmatpush1.msra.mxu0 0.0
    %371 = vmatprep.subr.mxu0 0.0
    %372 = vmatpush1.msra.mxu0 %v71
    %373 = vmatprep.subr.mxu0 0.0
    %374 = vmatpush1.msra.mxu0 %v70
    %375 = vmatprep.subr.mxu0 0.0
    %376 = vmatpush1.msra.mxu0 %v69
    %377 = vmatprep.subr.mxu0 0.0
    %378 = vmatpush1.msra.mxu0 %v68
    %379 = vmatprep.subr.mxu0 0.0
    %380 = vmatpush2.msra.mxu0 0.0
    %381 = vmatprep.subr.mxu0 0.0
    %382 = vmatpush2.msra.mxu0 0.0
    %383 = vmatprep.subr.mxu0 0.0
    %384 = vmatpush2.msra.mxu0 0.0
    %385 = vmatprep.subr.mxu0 0.0
    %386 = vmatpush2.msra.mxu0 0.0
    %387 = vmatprep.subr.mxu0 0.0
    %388 = vmatpush2.msra.mxu0 0.0
    %389 = vmatprep.subr.mxu0 0.0
    %390 = vmatpush2.msra.mxu0 0.0
    %391 = vmatprep.subr.mxu0 0.0
    %392 = vmatpush2.msra.mxu0 0.0
    %393 = vmatprep.subr.mxu0 0.0
    %394 = vmatpush2.msra.mxu0 0.0
    %395 = vmatprep.subr.mxu0 0.0
    %396 = vmatpush2.msra.mxu0 0.0
    %397 = vmatprep.subr.mxu0 0.0
    %398 = vmatpush2.msra.mxu0 0.0
    %399 = vmatprep.subr.mxu0 0.0
    %400 = vmatpush2.msra.mxu0 0.0
    %401 = vmatprep.subr.mxu0 0.0
    %402 = vmatpush2.msra.mxu0 0.0
    %403 = vmatprep.subr.mxu0 0.0
    %404 = vmatpush2.msra.mxu0 0.0
    %405 = vmatprep.subr.mxu0 0.0
    %406 = vmatpush2.msra.mxu0 0.0
    %407 = vmatprep.subr.mxu0 0.0
    %408 = vmatpush2.msra.mxu0 0.0
    %409 = vmatprep.subr.mxu0 0.0
    %410 = vmatpush2.msra.mxu0 0.0
    %411 = vmatprep.mubr.f32.mxu0 0.0
    %412 = vmatmul.mubr.f32.gmra.mxu0 %v261
    %v413 = vpop.f32.mrf.mxu0
    %v414 = vadd.f32 %v248, %v413
    %v415 = vpop.f32.mrf.mxu0
    %416 = vmatprep.mubr.f32.mxu0 0.0
    %417 = vmatmul.mubr.f32.gmra.mxu0 %v263
    %v418 = vpop.f32.mrf.mxu0
    %v419 = vadd.f32 %v253, %v418
    %v420 = vpop.f32.mrf.mxu0
    %421 = vmatprep.mubr.f32.mxu0 0.0
    %422 = vmatmul.mubr.f32.gmra.mxu0 %v265
    %v423 = vpop.f32.mrf.mxu0
    %v424 = vadd.f32 %v258, %v423
    %v425 = vpop.f32.mrf.mxu0
    %426 = vdwg.mxu0
    %s427 = scalar_lea.vmem %s1, 64
    %v428 = vld [vmem:[%s427] sm:$0xff]
    %v429 = vld [vmem:[%s427 + $0x8] sm:$0xff]
    %v430 = vld [vmem:[%s427 + $0x10] sm:$0xff]
    %v431 = vld [vmem:[%s427 + $0x18] sm:$0xff]
    %vm432 = vcmask 1045504
    %v433 = vrot.slane %v59, 2
    %v434 = vrot.slane %v60, 2
    %v435 = vsel %vm432, %v433, %v434
    %v436 = vrot.slane %v61, 2
    %v437 = vsel %vm432, %v434, %v436
    %v438 = vrot.slane %v62, 2
    %v439 = vsel %vm432, %v436, %v438
    %v440 = vsel %vm89, %v435, 0
    %v442 = vsel %vm89, %v437, 0
    %v444 = vsel %vm89, %v439, 0
    %446 = vmatprep.subr.mxu0 0.0
    %447 = vmatpush1.msra.mxu0 0.0
    %448 = vmatprep.subr.mxu0 0.0
    %449 = vmatpush1.msra.mxu0 0.0
    %450 = vmatprep.subr.mxu0 0.0
    %451 = vmatpush1.msra.mxu0 0.0
    %452 = vmatprep.subr.mxu0 0.0
    %453 = vmatpush1.msra.mxu0 0.0
    %454 = vmatprep.subr.mxu0 0.0
    %455 = vmatpush1.msra.mxu0 0.0
    %456 = vmatprep.subr.mxu0 0.0
    %457 = vmatpush1.msra.mxu0 0.0
    %458 = vmatprep.subr.mxu0 0.0
    %459 = vmatpush1.msra.mxu0 0.0
    %460 = vmatprep.subr.mxu0 0.0
    %461 = vmatpush1.msra.mxu0 0.0
    %462 = vmatprep.subr.mxu0 0.0
    %463 = vmatpush1.msra.mxu0 0.0
    %464 = vmatprep.subr.mxu0 0.0
    %465 = vmatpush1.msra.mxu0 0.0
    %466 = vmatprep.subr.mxu0 0.0
    %467 = vmatpush1.msra.mxu0 0.0
    %468 = vmatprep.subr.mxu0 0.0
    %469 = vmatpush1.msra.mxu0 0.0
    %470 = vmatprep.subr.mxu0 0.0
    %471 = vmatpush1.msra.mxu0 %v431
    %472 = vmatprep.subr.mxu0 0.0
    %473 = vmatpush1.msra.mxu0 %v430
    %474 = vmatprep.subr.mxu0 0.0
    %475 = vmatpush1.msra.mxu0 %v429
    %476 = vmatprep.subr.mxu0 0.0
    %477 = vmatpush1.msra.mxu0 %v428
    %478 = vmatprep.subr.mxu0 0.0
    %479 = vmatpush2.msra.mxu0 0.0
    %480 = vmatprep.subr.mxu0 0.0
    %481 = vmatpush2.msra.mxu0 0.0
    %482 = vmatprep.subr.mxu0 0.0
    %483 = vmatpush2.msra.mxu0 0.0
    %484 = vmatprep.subr.mxu0 0.0
    %485 = vmatpush2.msra.mxu0 0.0
    %486 = vmatprep.subr.mxu0 0.0
    %487 = vmatpush2.msra.mxu0 0.0
    %488 = vmatprep.subr.mxu0 0.0
    %489 = vmatpush2.msra.mxu0 0.0
    %490 = vmatprep.subr.mxu0 0.0
    %491 = vmatpush2.msra.mxu0 0.0
    %492 = vmatprep.subr.mxu0 0.0
    %493 = vmatpush2.msra.mxu0 0.0
    %494 = vmatprep.subr.mxu0 0.0
    %495 = vmatpush2.msra.mxu0 0.0
    %496 = vmatprep.subr.mxu0 0.0
    %497 = vmatpush2.msra.mxu0 0.0
    %498 = vmatprep.subr.mxu0 0.0
    %499 = vmatpush2.msra.mxu0 0.0
    %500 = vmatprep.subr.mxu0 0.0
    %501 = vmatpush2.msra.mxu0 0.0
    %502 = vmatprep.subr.mxu0 0.0
    %503 = vmatpush2.msra.mxu0 0.0
    %504 = vmatprep.subr.mxu0 0.0
    %505 = vmatpush2.msra.mxu0 0.0
    %506 = vmatprep.subr.mxu0 0.0
    %507 = vmatpush2.msra.mxu0 0.0
    %508 = vmatprep.subr.mxu0 0.0
    %509 = vmatpush2.msra.mxu0 0.0
    %510 = vmatprep.mubr.f32.mxu0 0.0
    %511 = vmatmul.mubr.f32.gmra.mxu0 %v440
    %v512 = vpop.f32.mrf.mxu0
    %v513 = vadd.f32 0.0, %v512
    %v514 = vpop.f32.mrf.mxu0
    %515 = vmatprep.mubr.f32.mxu0 0.0
    %516 = vmatmul.mubr.f32.gmra.mxu0 %v442
    %v517 = vpop.f32.mrf.mxu0
    %v518 = vadd.f32 0.0, %v517
    %v519 = vpop.f32.mrf.mxu0
    %520 = vmatprep.mubr.f32.mxu0 0.0
    %521 = vmatmul.mubr.f32.gmra.mxu0 %v444
    %v522 = vpop.f32.mrf.mxu0
    %v523 = vadd.f32 0.0, %v522
    %v524 = vpop.f32.mrf.mxu0
    %525 = vdwg.mxu0
    %s526 = scalar_lea.vmem %s1, 224
    %v527 = vld [vmem:[%s526] sm:$0xff]
    %v528 = vld [vmem:[%s526 + $0x8] sm:$0xff]
    %v529 = vld [vmem:[%s526 + $0x10] sm:$0xff]
    %v530 = vld [vmem:[%s526 + $0x18] sm:$0xff]
    %531 = vmatprep.subr.mxu0 0.0
    %532 = vmatpush1.msra.mxu0 0.0
    %533 = vmatprep.subr.mxu0 0.0
    %534 = vmatpush1.msra.mxu0 0.0
    %535 = vmatprep.subr.mxu0 0.0
    %536 = vmatpush1.msra.mxu0 0.0
    %537 = vmatprep.subr.mxu0 0.0
    %538 = vmatpush1.msra.mxu0 0.0
    %539 = vmatprep.subr.mxu0 0.0
    %540 = vmatpush1.msra.mxu0 0.0
    %541 = vmatprep.subr.mxu0 0.0
    %542 = vmatpush1.msra.mxu0 0.0
    %543 = vmatprep.subr.mxu0 0.0
    %544 = vmatpush1.msra.mxu0 0.0
    %545 = vmatprep.subr.mxu0 0.0
    %546 = vmatpush1.msra.mxu0 0.0
    %547 = vmatprep.subr.mxu0 0.0
    %548 = vmatpush1.msra.mxu0 0.0
    %549 = vmatprep.subr.mxu0 0.0
    %550 = vmatpush1.msra.mxu0 0.0
    %551 = vmatprep.subr.mxu0 0.0
    %552 = vmatpush1.msra.mxu0 0.0
    %553 = vmatprep.subr.mxu0 0.0
    %554 = vmatpush1.msra.mxu0 0.0
    %555 = vmatprep.subr.mxu0 0.0
    %556 = vmatpush1.msra.mxu0 %v530
    %557 = vmatprep.subr.mxu0 0.0
    %558 = vmatpush1.msra.mxu0 %v529
    %559 = vmatprep.subr.mxu0 0.0
    %560 = vmatpush1.msra.mxu0 %v528
    %561 = vmatprep.subr.mxu0 0.0
    %562 = vmatpush1.msra.mxu0 %v527
    %563 = vmatprep.subr.mxu0 0.0
    %564 = vmatpush2.msra.mxu0 0.0
    %565 = vmatprep.subr.mxu0 0.0
    %566 = vmatpush2.msra.mxu0 0.0
    %567 = vmatprep.subr.mxu0 0.0
    %568 = vmatpush2.msra.mxu0 0.0
    %569 = vmatprep.subr.mxu0 0.0
    %570 = vmatpush2.msra.mxu0 0.0
    %571 = vmatprep.subr.mxu0 0.0
    %572 = vmatpush2.msra.mxu0 0.0
    %573 = vmatprep.subr.mxu0 0.0
    %574 = vmatpush2.msra.mxu0 0.0
    %575 = vmatprep.subr.mxu0 0.0
    %576 = vmatpush2.msra.mxu0 0.0
    %577 = vmatprep.subr.mxu0 0.0
    %578 = vmatpush2.msra.mxu0 0.0
    %579 = vmatprep.subr.mxu0 0.0
    %580 = vmatpush2.msra.mxu0 0.0
    %581 = vmatprep.subr.mxu0 0.0
    %582 = vmatpush2.msra.mxu0 0.0
    %583 = vmatprep.subr.mxu0 0.0
    %584 = vmatpush2.msra.mxu0 0.0
    %585 = vmatprep.subr.mxu0 0.0
    %586 = vmatpush2.msra.mxu0 0.0
    %587 = vmatprep.subr.mxu0 0.0
    %588 = vmatpush2.msra.mxu0 0.0
    %589 = vmatprep.subr.mxu0 0.0
    %590 = vmatpush2.msra.mxu0 0.0
    %591 = vmatprep.subr.mxu0 0.0
    %592 = vmatpush2.msra.mxu0 0.0
    %593 = vmatprep.subr.mxu0 0.0
    %594 = vmatpush2.msra.mxu0 0.0
    %595 = vmatprep.mubr.f32.mxu0 0.0
    %596 = vmatmul.mubr.f32.gmra.mxu0 %v440
    %v597 = vpop.f32.mrf.mxu0
    %v598 = vadd.f32 0.0, %v597
    %v599 = vpop.f32.mrf.mxu0
    %600 = vmatprep.mubr.f32.mxu0 0.0
    %601 = vmatmul.mubr.f32.gmra.mxu0 %v442
    %v602 = vpop.f32.mrf.mxu0
    %v603 = vadd.f32 0.0, %v602
    %v604 = vpop.f32.mrf.mxu0
    %605 = vmatprep.mubr.f32.mxu0 0.0
    %606 = vmatmul.mubr.f32.gmra.mxu0 %v444
    %v607 = vpop.f32.mrf.mxu0
    %v608 = vadd.f32 0.0, %v607
    %v609 = vpop.f32.mrf.mxu0
    %610 = vdwg.mxu0
    %v611 = vadd.f32 %v334, %v513
    %v612 = vadd.f32 %v339, %v518
    %v613 = vadd.f32 %v344, %v523
    %v614 = vadd.f32 %v414, %v598
    %v615 = vadd.f32 %v419, %v603
    %v616 = vadd.f32 %v424, %v608
    %s617 = scalar_lea.vmem %s1, 96
    %v618 = vld [vmem:[%s617] sm:$0xff]
    %v619 = vld [vmem:[%s617 + $0x8] sm:$0xff]
    %v620 = vld [vmem:[%s617 + $0x10] sm:$0xff]
    %v621 = vld [vmem:[%s617 + $0x18] sm:$0xff]
    %vm622 = vcmask 1044480
    %v623 = vrot.slane %v59, 3
    %v624 = vrot.slane %v60, 3
    %v625 = vsel %vm622, %v623, %v624
    %v626 = vrot.slane %v61, 3
    %v627 = vsel %vm622, %v624, %v626
    %v628 = vrot.slane %v62, 3
    %v629 = vsel %vm622, %v626, %v628
    %v630 = vsel %vm89, %v625, 0
    %v632 = vsel %vm89, %v627, 0
    %v634 = vsel %vm89, %v629, 0
    %636 = vmatprep.subr.mxu0 0.0
    %637 = vmatpush1.msra.mxu0 0.0
    %638 = vmatprep.subr.mxu0 0.0
    %639 = vmatpush1.msra.mxu0 0.0
    %640 = vmatprep.subr.mxu0 0.0
    %641 = vmatpush1.msra.mxu0 0.0
    %642 = vmatprep.subr.mxu0 0.0
    %643 = vmatpush1.msra.mxu0 0.0
    %644 = vmatprep.subr.mxu0 0.0
    %645 = vmatpush1.msra.mxu0 0.0
    %646 = vmatprep.subr.mxu0 0.0
    %647 = vmatpush1.msra.mxu0 0.0
    %648 = vmatprep.subr.mxu0 0.0
    %649 = vmatpush1.msra.mxu0 0.0
    %650 = vmatprep.subr.mxu0 0.0
    %651 = vmatpush1.msra.mxu0 0.0
    %652 = vmatprep.subr.mxu0 0.0
    %653 = vmatpush1.msra.mxu0 0.0
    %654 = vmatprep.subr.mxu0 0.0
    %655 = vmatpush1.msra.mxu0 0.0
    %656 = vmatprep.subr.mxu0 0.0
    %657 = vmatpush1.msra.mxu0 0.0
    %658 = vmatprep.subr.mxu0 0.0
    %659 = vmatpush1.msra.mxu0 0.0
    %660 = vmatprep.subr.mxu0 0.0
    %661 = vmatpush1.msra.mxu0 %v621
    %662 = vmatprep.subr.mxu0 0.0
    %663 = vmatpush1.msra.mxu0 %v620
    %664 = vmatprep.subr.mxu0 0.0
    %665 = vmatpush1.msra.mxu0 %v619
    %666 = vmatprep.subr.mxu0 0.0
    %667 = vmatpush1.msra.mxu0 %v618
    %668 = vmatprep.subr.mxu0 0.0
    %669 = vmatpush2.msra.mxu0 0.0
    %670 = vmatprep.subr.mxu0 0.0
    %671 = vmatpush2.msra.mxu0 0.0
    %672 = vmatprep.subr.mxu0 0.0
    %673 = vmatpush2.msra.mxu0 0.0
    %674 = vmatprep.subr.mxu0 0.0
    %675 = vmatpush2.msra.mxu0 0.0
    %676 = vmatprep.subr.mxu0 0.0
    %677 = vmatpush2.msra.mxu0 0.0
    %678 = vmatprep.subr.mxu0 0.0
    %679 = vmatpush2.msra.mxu0 0.0
    %680 = vmatprep.subr.mxu0 0.0
    %681 = vmatpush2.msra.mxu0 0.0
    %682 = vmatprep.subr.mxu0 0.0
    %683 = vmatpush2.msra.mxu0 0.0
    %684 = vmatprep.subr.mxu0 0.0
    %685 = vmatpush2.msra.mxu0 0.0
    %686 = vmatprep.subr.mxu0 0.0
    %687 = vmatpush2.msra.mxu0 0.0
    %688 = vmatprep.subr.mxu0 0.0
    %689 = vmatpush2.msra.mxu0 0.0
    %690 = vmatprep.subr.mxu0 0.0
    %691 = vmatpush2.msra.mxu0 0.0
    %692 = vmatprep.subr.mxu0 0.0
    %693 = vmatpush2.msra.mxu0 0.0
    %694 = vmatprep.subr.mxu0 0.0
    %695 = vmatpush2.msra.mxu0 0.0
    %696 = vmatprep.subr.mxu0 0.0
    %697 = vmatpush2.msra.mxu0 0.0
    %698 = vmatprep.subr.mxu0 0.0
    %699 = vmatpush2.msra.mxu0 0.0
    %700 = vmatprep.mubr.f32.mxu0 0.0
    %701 = vmatmul.mubr.f32.gmra.mxu0 %v630
    %v702 = vpop.f32.mrf.mxu0
    %v703 = vadd.f32 0.0, %v702
    %v704 = vpop.f32.mrf.mxu0
    %705 = vmatprep.mubr.f32.mxu0 0.0
    %706 = vmatmul.mubr.f32.gmra.mxu0 %v632
    %v707 = vpop.f32.mrf.mxu0
    %v708 = vadd.f32 0.0, %v707
    %v709 = vpop.f32.mrf.mxu0
    %710 = vmatprep.mubr.f32.mxu0 0.0
    %711 = vmatmul.mubr.f32.gmra.mxu0 %v634
    %v712 = vpop.f32.mrf.mxu0
    %v713 = vadd.f32 0.0, %v712
    %v714 = vpop.f32.mrf.mxu0
    %715 = vdwg.mxu0
    %s716 = scalar_lea.vmem %s1, 256
    %v717 = vld [vmem:[%s716] sm:$0xff]
    %v718 = vld [vmem:[%s716 + $0x8] sm:$0xff]
    %v719 = vld [vmem:[%s716 + $0x10] sm:$0xff]
    %v720 = vld [vmem:[%s716 + $0x18] sm:$0xff]
    %721 = vmatprep.subr.mxu0 0.0
    %722 = vmatpush1.msra.mxu0 0.0
    %723 = vmatprep.subr.mxu0 0.0
    %724 = vmatpush1.msra.mxu0 0.0
    %725 = vmatprep.subr.mxu0 0.0
    %726 = vmatpush1.msra.mxu0 0.0
    %727 = vmatprep.subr.mxu0 0.0
    %728 = vmatpush1.msra.mxu0 0.0
    %729 = vmatprep.subr.mxu0 0.0
    %730 = vmatpush1.msra.mxu0 0.0
    %731 = vmatprep.subr.mxu0 0.0
    %732 = vmatpush1.msra.mxu0 0.0
    %733 = vmatprep.subr.mxu0 0.0
    %734 = vmatpush1.msra.mxu0 0.0
    %735 = vmatprep.subr.mxu0 0.0
    %736 = vmatpush1.msra.mxu0 0.0
    %737 = vmatprep.subr.mxu0 0.0
    %738 = vmatpush1.msra.mxu0 0.0
    %739 = vmatprep.subr.mxu0 0.0
    %740 = vmatpush1.msra.mxu0 0.0
    %741 = vmatprep.subr.mxu0 0.0
    %742 = vmatpush1.msra.mxu0 0.0
    %743 = vmatprep.subr.mxu0 0.0
    %744 = vmatpush1.msra.mxu0 0.0
    %745 = vmatprep.subr.mxu0 0.0
    %746 = vmatpush1.msra.mxu0 %v720
    %747 = vmatprep.subr.mxu0 0.0
    %748 = vmatpush1.msra.mxu0 %v719
    %749 = vmatprep.subr.mxu0 0.0
    %750 = vmatpush1.msra.mxu0 %v718
    %751 = vmatprep.subr.mxu0 0.0
    %752 = vmatpush1.msra.mxu0 %v717
    %753 = vmatprep.subr.mxu0 0.0
    %754 = vmatpush2.msra.mxu0 0.0
    %755 = vmatprep.subr.mxu0 0.0
    %756 = vmatpush2.msra.mxu0 0.0
    %757 = vmatprep.subr.mxu0 0.0
    %758 = vmatpush2.msra.mxu0 0.0
    %759 = vmatprep.subr.mxu0 0.0
    %760 = vmatpush2.msra.mxu0 0.0
    %761 = vmatprep.subr.mxu0 0.0
    %762 = vmatpush2.msra.mxu0 0.0
    %763 = vmatprep.subr.mxu0 0.0
    %764 = vmatpush2.msra.mxu0 0.0
    %765 = vmatprep.subr.mxu0 0.0
    %766 = vmatpush2.msra.mxu0 0.0
    %767 = vmatprep.subr.mxu0 0.0
    %768 = vmatpush2.msra.mxu0 0.0
    %769 = vmatprep.subr.mxu0 0.0
    %770 = vmatpush2.msra.mxu0 0.0
    %771 = vmatprep.subr.mxu0 0.0
    %772 = vmatpush2.msra.mxu0 0.0
    %773 = vmatprep.subr.mxu0 0.0
    %774 = vmatpush2.msra.mxu0 0.0
    %775 = vmatprep.subr.mxu0 0.0
    %776 = vmatpush2.msra.mxu0 0.0
    %777 = vmatprep.subr.mxu0 0.0
    %778 = vmatpush2.msra.mxu0 0.0
    %779 = vmatprep.subr.mxu0 0.0
    %780 = vmatpush2.msra.mxu0 0.0
    %781 = vmatprep.subr.mxu0 0.0
    %782 = vmatpush2.msra.mxu0 0.0
    %783 = vmatprep.subr.mxu0 0.0
    %784 = vmatpush2.msra.mxu0 0.0
    %785 = vmatprep.mubr.f32.mxu0 0.0
    %786 = vmatmul.mubr.f32.gmra.mxu0 %v630
    %v787 = vpop.f32.mrf.mxu0
    %v788 = vadd.f32 0.0, %v787
    %v789 = vpop.f32.mrf.mxu0
    %790 = vmatprep.mubr.f32.mxu0 0.0
    %791 = vmatmul.mubr.f32.gmra.mxu0 %v632
    %v792 = vpop.f32.mrf.mxu0
    %v793 = vadd.f32 0.0, %v792
    %v794 = vpop.f32.mrf.mxu0
    %795 = vmatprep.mubr.f32.mxu0 0.0
    %796 = vmatmul.mubr.f32.gmra.mxu0 %v634
    %v797 = vpop.f32.mrf.mxu0
    %v798 = vadd.f32 0.0, %v797
    %v799 = vpop.f32.mrf.mxu0
    %800 = vdwg.mxu0
    %v801 = vadd.f32 %v611, %v703
    %v802 = vadd.f32 %v612, %v708
    %v803 = vadd.f32 %v613, %v713
    %v804 = vadd.f32 %v614, %v788
    %v805 = vadd.f32 %v615, %v793
    %v806 = vadd.f32 %v616, %v798
    %s807 = scalar_lea.vmem %s1, 128
    %v808 = vld [vmem:[%s807] sm:$0xff]
    %v809 = vld [vmem:[%s807 + $0x8] sm:$0xff]
    %v810 = vld [vmem:[%s807 + $0x10] sm:$0xff]
    %v811 = vld [vmem:[%s807 + $0x18] sm:$0xff]
    %vm812 = vcmask 1043456
    %v813 = vrot.slane %v59, 4
    %v814 = vrot.slane %v60, 4
    %v815 = vsel %vm812, %v813, %v814
    %v816 = vrot.slane %v61, 4
    %v817 = vsel %vm812, %v814, %v816
    %v818 = vrot.slane %v62, 4
    %v819 = vsel %vm812, %v816, %v818
    %v820 = vsel %vm89, %v815, 0
    %v822 = vsel %vm89, %v817, 0
    %v824 = vsel %vm89, %v819, 0
    %826 = vmatprep.subr.mxu0 0.0
    %827 = vmatpush1.msra.mxu0 0.0
    %828 = vmatprep.subr.mxu0 0.0
    %829 = vmatpush1.msra.mxu0 0.0
    %830 = vmatprep.subr.mxu0 0.0
    %831 = vmatpush1.msra.mxu0 0.0
    %832 = vmatprep.subr.mxu0 0.0
    %833 = vmatpush1.msra.mxu0 0.0
    %834 = vmatprep.subr.mxu0 0.0
    %835 = vmatpush1.msra.mxu0 0.0
    %836 = vmatprep.subr.mxu0 0.0
    %837 = vmatpush1.msra.mxu0 0.0
    %838 = vmatprep.subr.mxu0 0.0
    %839 = vmatpush1.msra.mxu0 0.0
    %840 = vmatprep.subr.mxu0 0.0
    %841 = vmatpush1.msra.mxu0 0.0
    %842 = vmatprep.subr.mxu0 0.0
    %843 = vmatpush1.msra.mxu0 0.0
    %844 = vmatprep.subr.mxu0 0.0
    %845 = vmatpush1.msra.mxu0 0.0
    %846 = vmatprep.subr.mxu0 0.0
    %847 = vmatpush1.msra.mxu0 0.0
    %848 = vmatprep.subr.mxu0 0.0
    %849 = vmatpush1.msra.mxu0 0.0
    %850 = vmatprep.subr.mxu0 0.0
    %851 = vmatpush1.msra.mxu0 %v811
    %852 = vmatprep.subr.mxu0 0.0
    %853 = vmatpush1.msra.mxu0 %v810
    %854 = vmatprep.subr.mxu0 0.0
    %855 = vmatpush1.msra.mxu0 %v809
    %856 = vmatprep.subr.mxu0 0.0
    %857 = vmatpush1.msra.mxu0 %v808
    %858 = vmatprep.subr.mxu0 0.0
    %859 = vmatpush2.msra.mxu0 0.0
    %860 = vmatprep.subr.mxu0 0.0
    %861 = vmatpush2.msra.mxu0 0.0
    %862 = vmatprep.subr.mxu0 0.0
    %863 = vmatpush2.msra.mxu0 0.0
    %864 = vmatprep.subr.mxu0 0.0
    %865 = vmatpush2.msra.mxu0 0.0
    %866 = vmatprep.subr.mxu0 0.0
    %867 = vmatpush2.msra.mxu0 0.0
    %868 = vmatprep.subr.mxu0 0.0
    %869 = vmatpush2.msra.mxu0 0.0
    %870 = vmatprep.subr.mxu0 0.0
    %871 = vmatpush2.msra.mxu0 0.0
    %872 = vmatprep.subr.mxu0 0.0
    %873 = vmatpush2.msra.mxu0 0.0
    %874 = vmatprep.subr.mxu0 0.0
    %875 = vmatpush2.msra.mxu0 0.0
    %876 = vmatprep.subr.mxu0 0.0
    %877 = vmatpush2.msra.mxu0 0.0
    %878 = vmatprep.subr.mxu0 0.0
    %879 = vmatpush2.msra.mxu0 0.0
    %880 = vmatprep.subr.mxu0 0.0
    %881 = vmatpush2.msra.mxu0 0.0
    %882 = vmatprep.subr.mxu0 0.0
    %883 = vmatpush2.msra.mxu0 0.0
    %884 = vmatprep.subr.mxu0 0.0
    %885 = vmatpush2.msra.mxu0 0.0
    %886 = vmatprep.subr.mxu0 0.0
    %887 = vmatpush2.msra.mxu0 0.0
    %888 = vmatprep.subr.mxu0 0.0
    %889 = vmatpush2.msra.mxu0 0.0
    %890 = vmatprep.mubr.f32.mxu0 0.0
    %891 = vmatmul.mubr.f32.gmra.mxu0 %v820
    %v892 = vpop.f32.mrf.mxu0
    %v893 = vadd.f32 0.0, %v892
    %v894 = vpop.f32.mrf.mxu0
    %895 = vmatprep.mubr.f32.mxu0 0.0
    %896 = vmatmul.mubr.f32.gmra.mxu0 %v822
    %v897 = vpop.f32.mrf.mxu0
    %v898 = vadd.f32 0.0, %v897
    %v899 = vpop.f32.mrf.mxu0
    %900 = vmatprep.mubr.f32.mxu0 0.0
    %901 = vmatmul.mubr.f32.gmra.mxu0 %v824
    %v902 = vpop.f32.mrf.mxu0
    %v903 = vadd.f32 0.0, %v902
    %v904 = vpop.f32.mrf.mxu0
    %905 = vdwg.mxu0
    %s906 = scalar_lea.vmem %s1, 288
    %v907 = vld [vmem:[%s906] sm:$0xff]
    %v908 = vld [vmem:[%s906 + $0x8] sm:$0xff]
    %v909 = vld [vmem:[%s906 + $0x10] sm:$0xff]
    %v910 = vld [vmem:[%s906 + $0x18] sm:$0xff]
    %911 = vmatprep.subr.mxu0 0.0
    %912 = vmatpush1.msra.mxu0 0.0
    %913 = vmatprep.subr.mxu0 0.0
    %914 = vmatpush1.msra.mxu0 0.0
    %915 = vmatprep.subr.mxu0 0.0
    %916 = vmatpush1.msra.mxu0 0.0
    %917 = vmatprep.subr.mxu0 0.0
    %918 = vmatpush1.msra.mxu0 0.0
    %919 = vmatprep.subr.mxu0 0.0
    %920 = vmatpush1.msra.mxu0 0.0
    %921 = vmatprep.subr.mxu0 0.0
    %922 = vmatpush1.msra.mxu0 0.0
    %923 = vmatprep.subr.mxu0 0.0
    %924 = vmatpush1.msra.mxu0 0.0
    %925 = vmatprep.subr.mxu0 0.0
    %926 = vmatpush1.msra.mxu0 0.0
    %927 = vmatprep.subr.mxu0 0.0
    %928 = vmatpush1.msra.mxu0 0.0
    %929 = vmatprep.subr.mxu0 0.0
    %930 = vmatpush1.msra.mxu0 0.0
    %931 = vmatprep.subr.mxu0 0.0
    %932 = vmatpush1.msra.mxu0 0.0
    %933 = vmatprep.subr.mxu0 0.0
    %934 = vmatpush1.msra.mxu0 0.0
    %935 = vmatprep.subr.mxu0 0.0
    %936 = vmatpush1.msra.mxu0 %v910
    %937 = vmatprep.subr.mxu0 0.0
    %938 = vmatpush1.msra.mxu0 %v909
    %939 = vmatprep.subr.mxu0 0.0
    %940 = vmatpush1.msra.mxu0 %v908
    %941 = vmatprep.subr.mxu0 0.0
    %942 = vmatpush1.msra.mxu0 %v907
    %943 = vmatprep.subr.mxu0 0.0
    %944 = vmatpush2.msra.mxu0 0.0
    %945 = vmatprep.subr.mxu0 0.0
    %946 = vmatpush2.msra.mxu0 0.0
    %947 = vmatprep.subr.mxu0 0.0
    %948 = vmatpush2.msra.mxu0 0.0
    %949 = vmatprep.subr.mxu0 0.0
    %950 = vmatpush2.msra.mxu0 0.0
    %951 = vmatprep.subr.mxu0 0.0
    %952 = vmatpush2.msra.mxu0 0.0
    %953 = vmatprep.subr.mxu0 0.0
    %954 = vmatpush2.msra.mxu0 0.0
    %955 = vmatprep.subr.mxu0 0.0
    %956 = vmatpush2.msra.mxu0 0.0
    %957 = vmatprep.subr.mxu0 0.0
    %958 = vmatpush2.msra.mxu0 0.0
    %959 = vmatprep.subr.mxu0 0.0
    %960 = vmatpush2.msra.mxu0 0.0
    %961 = vmatprep.subr.mxu0 0.0
    %962 = vmatpush2.msra.mxu0 0.0
    %963 = vmatprep.subr.mxu0 0.0
    %964 = vmatpush2.msra.mxu0 0.0
    %965 = vmatprep.subr.mxu0 0.0
    %966 = vmatpush2.msra.mxu0 0.0
    %967 = vmatprep.subr.mxu0 0.0
    %968 = vmatpush2.msra.mxu0 0.0
    %969 = vmatprep.subr.mxu0 0.0
    %970 = vmatpush2.msra.mxu0 0.0
    %971 = vmatprep.subr.mxu0 0.0
    %972 = vmatpush2.msra.mxu0 0.0
    %973 = vmatprep.subr.mxu0 0.0
    %974 = vmatpush2.msra.mxu0 0.0
    %975 = vmatprep.mubr.f32.mxu0 0.0
    %976 = vmatmul.mubr.f32.gmra.mxu0 %v820
    %v977 = vpop.f32.mrf.mxu0
    %v978 = vadd.f32 0.0, %v977
    %v979 = vpop.f32.mrf.mxu0
    %980 = vmatprep.mubr.f32.mxu0 0.0
    %981 = vmatmul.mubr.f32.gmra.mxu0 %v822
    %v982 = vpop.f32.mrf.mxu0
    %v983 = vadd.f32 0.0, %v982
    %v984 = vpop.f32.mrf.mxu0
    %985 = vmatprep.mubr.f32.mxu0 0.0
    %986 = vmatmul.mubr.f32.gmra.mxu0 %v824
    %v987 = vpop.f32.mrf.mxu0
    %v988 = vadd.f32 0.0, %v987
    %v989 = vpop.f32.mrf.mxu0
    %990 = vdwg.mxu0
    %v991 = vadd.f32 %v801, %v893
    %v992 = vadd.f32 %v802, %v898
    %v993 = vadd.f32 %v803, %v903
    %v994 = vadd.f32 %v804, %v978
    %v995 = vadd.f32 %v805, %v983
    %v996 = vadd.f32 %v806, %v988
    %v998 = vlaneseq
    %v999 = vshrl.u32 %v998, 7
    %v1000 = vsub.s32 0, %v999
    %v1001 = vrot.slane %v47, %v1000
    %v1003 = vadd.f32 %v991, %v1001
    %v1004 = vadd.f32 %v992, %v1001
    %v1005 = vadd.f32 %v993, %v1001
    %v1006 = vmax.f32 %v1003, 0.0
    %v1007 = vmax.f32 %v1004, 0.0
    %v1008 = vmax.f32 %v1005, 0.0
    %v1009 = vadd.f32 %v994, %v1001
    %v1010 = vadd.f32 %v995, %v1001
    %v1011 = vadd.f32 %v996, %v1001
    %v1012 = vmax.f32 %v1009, 0.0
    %v1013 = vmax.f32 %v1010, 0.0
    %v1014 = vmax.f32 %v1011, 0.0
    %v1015 = vmax.f32 %v1006, %v1012
    %v1016 = vmax.f32 %v1007, %v1013
    %v1017 = vmax.f32 %v1008, %v1014
    %v1021 = vcombine.high %v1015, %v1015
    %v1023 = vunpack.c.l.s4 1983009808
    %v1024 = vunpack.c.0.s8 %v1023
    %v1025 = vlaneseq
    %v1026 = vshrl.u32 %v1025, 7
    %v1027 = vsub.s32 %v1024, %v1026
    %v1028 = vrot.slane %v1015, %v1027
    %v1030 = vunpack.c.l.s4 1983009808
    %v1031 = vunpack.c.0.s8 %v1030
    %v1032 = vlaneseq
    %v1033 = vshrl.u32 %v1032, 7
    %v1034 = vsub.s32 %v1031, %v1033
    %v1035 = vrot.slane %v1021, %v1034
    %v1036 = vcombine.high %v1028, %v1028
    %v1037 = vcombine.high %v1035, %v1035
    %v1038 = vcombine.high %v1016, %v1016
    %v1040 = vunpack.c.l.s4 1983009808
    %v1041 = vunpack.c.0.s8 %v1040
    %v1042 = vlaneseq
    %v1043 = vshrl.u32 %v1042, 7
    %v1044 = vsub.s32 %v1041, %v1043
    %v1045 = vrot.slane %v1016, %v1044
    %v1047 = vunpack.c.l.s4 1983009808
    %v1048 = vunpack.c.0.s8 %v1047
    %v1049 = vlaneseq
    %v1050 = vshrl.u32 %v1049, 7
    %v1051 = vsub.s32 %v1048, %v1050
    %v1052 = vrot.slane %v1038, %v1051
    %v1053 = vcombine.high %v1045, %v1045
    %v1054 = vcombine.high %v1052, %v1052
    %v1055 = vcombine.high %v1017, %v1017
    %v1057 = vunpack.c.l.s4 1983009808
    %v1058 = vunpack.c.0.s8 %v1057
    %v1059 = vlaneseq
    %v1060 = vshrl.u32 %v1059, 7
    %v1061 = vsub.s32 %v1058, %v1060
    %v1062 = vrot.slane %v1017, %v1061
    %v1064 = vunpack.c.l.s4 1983009808
    %v1065 = vunpack.c.0.s8 %v1064
    %v1066 = vlaneseq
    %v1067 = vshrl.u32 %v1066, 7
    %v1068 = vsub.s32 %v1065, %v1067
    %v1069 = vrot.slane %v1055, %v1068
    %v1070 = vcombine.high %v1062, %v1062
    %v1071 = vcombine.high %v1069, %v1069
    %v1084 = vrot.slane %v1028, 7
    %v1085 = vrot.slane %v1084, 2
    %v1086 = vrot.slane %v1036, 7
    %v1087 = vrot.slane %v1086, 2
    %v1088 = vrot.slane %v1035, 7
    %v1089 = vrot.slane %v1088, 2
    %v1090 = vrot.slane %v1037, 7
    %v1091 = vrot.slane %v1090, 2
    %v1092 = vrot.slane %v1045, 7
    %v1093 = vrot.slane %v1092, 2
    %v1094 = vrot.slane %v1053, 7
    %v1095 = vrot.slane %v1094, 2
    %v1096 = vrot.slane %v1052, 7
    %v1097 = vrot.slane %v1096, 2
    %v1098 = vrot.slane %v1054, 7
    %v1099 = vrot.slane %v1098, 2
    %v1100 = vrot.slane %v1062, 7
    %v1101 = vrot.slane %v1100, 2
    %v1102 = vrot.slane %v1070, 7
    %v1103 = vrot.slane %v1102, 2
    %v1104 = vrot.slane %v1069, 7
    %v1105 = vrot.slane %v1104, 2
    %v1106 = vrot.slane %v1071, 7
    %v1107 = vrot.slane %v1106, 2
    %v1120 = vmax.f32 %v1028, %v1085
    %v1121 = vmax.f32 %v1036, %v1087
    %v1122 = vmax.f32 %v1035, %v1089
    %v1123 = vmax.f32 %v1037, %v1091
    %v1124 = vmax.f32 %v1045, %v1093
    %v1125 = vmax.f32 %v1053, %v1095
    %v1126 = vmax.f32 %v1052, %v1097
    %v1127 = vmax.f32 %v1054, %v1099
    %v1128 = vmax.f32 %v1062, %v1101
    %v1129 = vmax.f32 %v1070, %v1103
    %v1130 = vmax.f32 %v1069, %v1105
    %v1131 = vmax.f32 %v1071, %v1107
    %v1132 = vld [vmem:[#allocation2] sm:$0xff]
    %v1133 = vld [vmem:[#allocation2 + $0x8] sm:$0xff]
    %v1134 = vld [vmem:[#allocation2 + $0x10] sm:$0xff]
    %v1135 = vld [vmem:[#allocation2 + $0x18] sm:$0xff]
    %v1136 = vld [vmem:[#allocation2 + $0x20] sm:$0xff]
    %v1137 = vld [vmem:[#allocation2 + $0x28] sm:$0xff]
    %v1138 = vld [vmem:[#allocation2 + $0x30] sm:$0xff]
    %v1139 = vld [vmem:[#allocation2 + $0x38] sm:$0xff]
    %v1140 = vld [vmem:[#allocation2 + $0x40] sm:$0xff]
    %v1141 = vld [vmem:[#allocation2 + $0x48] sm:$0xff]
    %v1142 = vld [vmem:[#allocation2 + $0x50] sm:$0xff]
    %v1143 = vld [vmem:[#allocation2 + $0x58] sm:$0xff]
    %v1144 = vld [vmem:[#allocation2 + $0x60] sm:$0xff]
    %v1145 = vld [vmem:[#allocation2 + $0x68] sm:$0xff]
    %v1146 = vld [vmem:[#allocation2 + $0x70] sm:$0xff]
    %v1147 = vld [vmem:[#allocation2 + $0x78] sm:$0xff]
    %s1148 = scalar_lea.vmem [#allocation2], 640
    %v1149 = vld [vmem:[%s1148] sm:$0xff]
    %v1150 = vld [vmem:[%s1148 + $0x8] sm:$0xff]
    %v1151 = vld [vmem:[%s1148 + $0x10] sm:$0xff]
    %v1152 = vld [vmem:[%s1148 + $0x18] sm:$0xff]
    %v1153 = vld [vmem:[%s1148 + $0x20] sm:$0xff]
    %v1154 = vld [vmem:[%s1148 + $0x28] sm:$0xff]
    %v1155 = vld [vmem:[%s1148 + $0x30] sm:$0xff]
    %v1156 = vld [vmem:[%s1148 + $0x38] sm:$0xff]
    %v1157 = vld [vmem:[%s1148 + $0x40] sm:$0xff]
    %v1158 = vld [vmem:[%s1148 + $0x48] sm:$0xff]
    %v1159 = vld [vmem:[%s1148 + $0x50] sm:$0xff]
    %v1160 = vld [vmem:[%s1148 + $0x58] sm:$0xff]
    %v1161 = vld [vmem:[%s1148 + $0x60] sm:$0xff]
    %v1162 = vld [vmem:[%s1148 + $0x68] sm:$0xff]
    %v1163 = vld [vmem:[%s1148 + $0x70] sm:$0xff]
    %v1164 = vld [vmem:[%s1148 + $0x78] sm:$0xff]
    %s1165 = scalar_lea.vmem [#allocation2], 128
    %v1166 = vld [vmem:[%s1165] sm:$0xff]
    %v1167 = vld [vmem:[%s1165 + $0x8] sm:$0xff]
    %v1168 = vld [vmem:[%s1165 + $0x10] sm:$0xff]
    %v1169 = vld [vmem:[%s1165 + $0x18] sm:$0xff]
    %v1170 = vld [vmem:[%s1165 + $0x20] sm:$0xff]
    %v1171 = vld [vmem:[%s1165 + $0x28] sm:$0xff]
    %v1172 = vld [vmem:[%s1165 + $0x30] sm:$0xff]
    %v1173 = vld [vmem:[%s1165 + $0x38] sm:$0xff]
    %v1174 = vld [vmem:[%s1165 + $0x40] sm:$0xff]
    %v1175 = vld [vmem:[%s1165 + $0x48] sm:$0xff]
    %v1176 = vld [vmem:[%s1165 + $0x50] sm:$0xff]
    %v1177 = vld [vmem:[%s1165 + $0x58] sm:$0xff]
    %v1178 = vld [vmem:[%s1165 + $0x60] sm:$0xff]
    %v1179 = vld [vmem:[%s1165 + $0x68] sm:$0xff]
    %v1180 = vld [vmem:[%s1165 + $0x70] sm:$0xff]
    %v1181 = vld [vmem:[%s1165 + $0x78] sm:$0xff]
    %v1190 = vlaneseq
    %v1191 = vshrl.u32 %v1190, 7
    %v1192 = vsub.s32 0, %v1191
    %v1193 = vrot.slane %v1121, %v1192
    %v1194 = vlaneseq
    %v1195 = vshrl.u32 %v1194, 7
    %v1196 = vsub.s32 0, %v1195
    %v1197 = vrot.slane %v1122, %v1196
    %v1198 = vlaneseq
    %v1199 = vshrl.u32 %v1198, 7
    %v1200 = vsub.s32 0, %v1199
    %v1201 = vrot.slane %v1123, %v1200
    %v1202 = vlaneseq
    %v1203 = vshrl.u32 %v1202, 7
    %v1204 = vsub.s32 0, %v1203
    %v1205 = vrot.slane %v1124, %v1204
    %v1206 = vlaneseq
    %v1207 = vshrl.u32 %v1206, 7
    %v1208 = vsub.s32 0, %v1207
    %v1209 = vrot.slane %v1125, %v1208
    %v1210 = vlaneseq
    %v1211 = vshrl.u32 %v1210, 7
    %v1212 = vsub.s32 0, %v1211
    %v1213 = vrot.slane %v1126, %v1212
    %v1214 = vlaneseq
    %v1215 = vshrl.u32 %v1214, 7
    %v1216 = vsub.s32 0, %v1215
    %v1217 = vrot.slane %v1127, %v1216
    %v1218 = vlaneseq
    %v1219 = vshrl.u32 %v1218, 7
    %v1220 = vsub.s32 0, %v1219
    %v1221 = vrot.slane %v1128, %v1220
    %vm1222 = vcmask 1041409
    %v1223 = vsel %vm1222, %v1197, %v1193
    %vm1224 = vcmask 1042434
    %v1225 = vsel %vm1224, %v1201, %v1223
    %vm1226 = vcmask 1043459
    %v1227 = vsel %vm1226, %v1205, %v1225
    %vm1228 = vcmask 1044484
    %v1229 = vsel %vm1228, %v1209, %v1227
    %vm1230 = vcmask 1045509
    %v1231 = vsel %vm1230, %v1213, %v1229
    %vm1232 = vcmask 1046534
    %v1233 = vsel %vm1232, %v1217, %v1231
    %vm1234 = vcmask 1047559
    %v1235 = vsel %vm1234, %v1221, %v1233
    %1237 = vmatprep.subr.mxu0 0.0
    %1238 = vmatpush1.msra.mxu0 %v1181
    %1239 = vmatprep.subr.mxu0 0.0
    %1240 = vmatpush1.msra.mxu0 %v1180
    %1241 = vmatprep.subr.mxu0 0.0
    %1242 = vmatpush1.msra.mxu0 %v1179
    %1243 = vmatprep.subr.mxu0 0.0
    %1244 = vmatpush1.msra.mxu0 %v1178
    %1245 = vmatprep.subr.mxu0 0.0
    %1246 = vmatpush1.msra.mxu0 %v1177
    %1247 = vmatprep.subr.mxu0 0.0
    %1248 = vmatpush1.msra.mxu0 %v1176
    %1249 = vmatprep.subr.mxu0 0.0
    %1250 = vmatpush1.msra.mxu0 %v1175
    %1251 = vmatprep.subr.mxu0 0.0
    %1252 = vmatpush1.msra.mxu0 %v1174
    %1253 = vmatprep.subr.mxu0 0.0
    %1254 = vmatpush1.msra.mxu0 %v1173
    %1255 = vmatprep.subr.mxu0 0.0
    %1256 = vmatpush1.msra.mxu0 %v1172
    %1257 = vmatprep.subr.mxu0 0.0
    %1258 = vmatpush1.msra.mxu0 %v1171
    %1259 = vmatprep.subr.mxu0 0.0
    %1260 = vmatpush1.msra.mxu0 %v1170
    %1261 = vmatprep.subr.mxu0 0.0
    %1262 = vmatpush1.msra.mxu0 %v1169
    %1263 = vmatprep.subr.mxu0 0.0
    %1264 = vmatpush1.msra.mxu0 %v1168
    %1265 = vmatprep.subr.mxu0 0.0
    %1266 = vmatpush1.msra.mxu0 %v1167
    %1267 = vmatprep.subr.mxu0 0.0
    %1268 = vmatpush1.msra.mxu0 %v1166
    %1269 = vmatprep.subr.mxu0 0.0
    %1270 = vmatpush2.msra.mxu0 0.0
    %1271 = vmatprep.subr.mxu0 0.0
    %1272 = vmatpush2.msra.mxu0 0.0
    %1273 = vmatprep.subr.mxu0 0.0
    %1274 = vmatpush2.msra.mxu0 0.0
    %1275 = vmatprep.subr.mxu0 0.0
    %1276 = vmatpush2.msra.mxu0 0.0
    %1277 = vmatprep.subr.mxu0 0.0
    %1278 = vmatpush2.msra.mxu0 0.0
    %1279 = vmatprep.subr.mxu0 0.0
    %1280 = vmatpush2.msra.mxu0 0.0
    %1281 = vmatprep.subr.mxu0 0.0
    %1282 = vmatpush2.msra.mxu0 0.0
    %1283 = vmatprep.subr.mxu0 0.0
    %1284 = vmatpush2.msra.mxu0 0.0
    %1285 = vmatprep.subr.mxu0 0.0
    %1286 = vmatpush2.msra.mxu0 0.0
    %1287 = vmatprep.subr.mxu0 0.0
    %1288 = vmatpush2.msra.mxu0 0.0
    %1289 = vmatprep.subr.mxu0 0.0
    %1290 = vmatpush2.msra.mxu0 0.0
    %1291 = vmatprep.subr.mxu0 0.0
    %1292 = vmatpush2.msra.mxu0 0.0
    %1293 = vmatprep.subr.mxu0 0.0
    %1294 = vmatpush2.msra.mxu0 0.0
    %1295 = vmatprep.subr.mxu0 0.0
    %1296 = vmatpush2.msra.mxu0 0.0
    %1297 = vmatprep.subr.mxu0 0.0
    %1298 = vmatpush2.msra.mxu0 0.0
    %1299 = vmatprep.subr.mxu0 0.0
    %1300 = vmatpush2.msra.mxu0 0.0
    %1301 = vmatprep.mubr.f32.mxu0 0.0
    %1302 = vmatmul.mubr.f32.gmra.mxu0 %v1235
    %v1303 = vpop.f32.mrf.mxu0
    %v1304 = vadd.f32 0.0, %v1303
    %v1305 = vpop.f32.mrf.mxu0
    %1306 = vdwg.mxu0
    %s1307 = scalar_lea.vmem [#allocation2], 768
    %v1308 = vld [vmem:[%s1307] sm:$0xff]
    %v1309 = vld [vmem:[%s1307 + $0x8] sm:$0xff]
    %v1310 = vld [vmem:[%s1307 + $0x10] sm:$0xff]
    %v1311 = vld [vmem:[%s1307 + $0x18] sm:$0xff]
    %v1312 = vld [vmem:[%s1307 + $0x20] sm:$0xff]
    %v1313 = vld [vmem:[%s1307 + $0x28] sm:$0xff]
    %v1314 = vld [vmem:[%s1307 + $0x30] sm:$0xff]
    %v1315 = vld [vmem:[%s1307 + $0x38] sm:$0xff]
    %v1316 = vld [vmem:[%s1307 + $0x40] sm:$0xff]
    %v1317 = vld [vmem:[%s1307 + $0x48] sm:$0xff]
    %v1318 = vld [vmem:[%s1307 + $0x50] sm:$0xff]
    %v1319 = vld [vmem:[%s1307 + $0x58] sm:$0xff]
    %v1320 = vld [vmem:[%s1307 + $0x60] sm:$0xff]
    %v1321 = vld [vmem:[%s1307 + $0x68] sm:$0xff]
    %v1322 = vld [vmem:[%s1307 + $0x70] sm:$0xff]
    %v1323 = vld [vmem:[%s1307 + $0x78] sm:$0xff]
    %1324 = vmatprep.subr.mxu0 0.0
    %1325 = vmatpush1.msra.mxu0 %v1323
    %1326 = vmatprep.subr.mxu0 0.0
    %1327 = vmatpush1.msra.mxu0 %v1322
    %1328 = vmatprep.subr.mxu0 0.0
    %1329 = vmatpush1.msra.mxu0 %v1321
    %1330 = vmatprep.subr.mxu0 0.0
    %1331 = vmatpush1.msra.mxu0 %v1320
    %1332 = vmatprep.subr.mxu0 0.0
    %1333 = vmatpush1.msra.mxu0 %v1319
    %1334 = vmatprep.subr.mxu0 0.0
    %1335 = vmatpush1.msra.mxu0 %v1318
    %1336 = vmatprep.subr.mxu0 0.0
    %1337 = vmatpush1.msra.mxu0 %v1317
    %1338 = vmatprep.subr.mxu0 0.0
    %1339 = vmatpush1.msra.mxu0 %v1316
    %1340 = vmatprep.subr.mxu0 0.0
    %1341 = vmatpush1.msra.mxu0 %v1315
    %1342 = vmatprep.subr.mxu0 0.0
    %1343 = vmatpush1.msra.mxu0 %v1314
    %1344 = vmatprep.subr.mxu0 0.0
    %1345 = vmatpush1.msra.mxu0 %v1313
    %1346 = vmatprep.subr.mxu0 0.0
    %1347 = vmatpush1.msra.mxu0 %v1312
    %1348 = vmatprep.subr.mxu0 0.0
    %1349 = vmatpush1.msra.mxu0 %v1311
    %1350 = vmatprep.subr.mxu0 0.0
    %1351 = vmatpush1.msra.mxu0 %v1310
    %1352 = vmatprep.subr.mxu0 0.0
    %1353 = vmatpush1.msra.mxu0 %v1309
    %1354 = vmatprep.subr.mxu0 0.0
    %1355 = vmatpush1.msra.mxu0 %v1308
    %1356 = vmatprep.subr.mxu0 0.0
    %1357 = vmatpush2.msra.mxu0 0.0
    %1358 = vmatprep.subr.mxu0 0.0
    %1359 = vmatpush2.msra.mxu0 0.0
    %1360 = vmatprep.subr.mxu0 0.0
    %1361 = vmatpush2.msra.mxu0 0.0
    %1362 = vmatprep.subr.mxu0 0.0
    %1363 = vmatpush2.msra.mxu0 0.0
    %1364 = vmatprep.subr.mxu0 0.0
    %1365 = vmatpush2.msra.mxu0 0.0
    %1366 = vmatprep.subr.mxu0 0.0
    %1367 = vmatpush2.msra.mxu0 0.0
    %1368 = vmatprep.subr.mxu0 0.0
    %1369 = vmatpush2.msra.mxu0 0.0
    %1370 = vmatprep.subr.mxu0 0.0
    %1371 = vmatpush2.msra.mxu0 0.0
    %1372 = vmatprep.subr.mxu0 0.0
    %1373 = vmatpush2.msra.mxu0 0.0
    %1374 = vmatprep.subr.mxu0 0.0
    %1375 = vmatpush2.msra.mxu0 0.0
    %1376 = vmatprep.subr.mxu0 0.0
    %1377 = vmatpush2.msra.mxu0 0.0
    %1378 = vmatprep.subr.mxu0 0.0
    %1379 = vmatpush2.msra.mxu0 0.0
    %1380 = vmatprep.subr.mxu0 0.0
    %1381 = vmatpush2.msra.mxu0 0.0
    %1382 = vmatprep.subr.mxu0 0.0
    %1383 = vmatpush2.msra.mxu0 0.0
    %1384 = vmatprep.subr.mxu0 0.0
    %1385 = vmatpush2.msra.mxu0 0.0
    %1386 = vmatprep.subr.mxu0 0.0
    %1387 = vmatpush2.msra.mxu0 0.0
    %1388 = vmatprep.mubr.f32.mxu0 0.0
    %1389 = vmatmul.mubr.f32.gmra.mxu0 %v1235
    %v1390 = vpop.f32.mrf.mxu0
    %v1391 = vadd.f32 0.0, %v1390
    %v1392 = vpop.f32.mrf.mxu0
    %1393 = vdwg.mxu0
    %v1395 = vlaneseq
    %v1396 = vshrl.u32 %v1395, 7
    %v1397 = vsub.s32 0, %v1396
    %v1398 = vrot.slane %v1120, %v1397
    %v1399 = vsel %vm1222, %v1193, %v1398
    %v1400 = vsel %vm1224, %v1197, %v1399
    %v1401 = vsel %vm1226, %v1201, %v1400
    %v1402 = vsel %vm1228, %v1205, %v1401
    %v1403 = vsel %vm1230, %v1209, %v1402
    %v1404 = vsel %vm1232, %v1213, %v1403
    %v1405 = vsel %vm1234, %v1217, %v1404
    %1407 = vmatprep.subr.mxu0 0.0
    %1408 = vmatpush1.msra.mxu0 %v1147
    %1409 = vmatprep.subr.mxu0 0.0
    %1410 = vmatpush1.msra.mxu0 %v1146
    %1411 = vmatprep.subr.mxu0 0.0
    %1412 = vmatpush1.msra.mxu0 %v1145
    %1413 = vmatprep.subr.mxu0 0.0
    %1414 = vmatpush1.msra.mxu0 %v1144
    %1415 = vmatprep.subr.mxu0 0.0
    %1416 = vmatpush1.msra.mxu0 %v1143
    %1417 = vmatprep.subr.mxu0 0.0
    %1418 = vmatpush1.msra.mxu0 %v1142
    %1419 = vmatprep.subr.mxu0 0.0
    %1420 = vmatpush1.msra.mxu0 %v1141
    %1421 = vmatprep.subr.mxu0 0.0
    %1422 = vmatpush1.msra.mxu0 %v1140
    %1423 = vmatprep.subr.mxu0 0.0
    %1424 = vmatpush1.msra.mxu0 %v1139
    %1425 = vmatprep.subr.mxu0 0.0
    %1426 = vmatpush1.msra.mxu0 %v1138
    %1427 = vmatprep.subr.mxu0 0.0
    %1428 = vmatpush1.msra.mxu0 %v1137
    %1429 = vmatprep.subr.mxu0 0.0
    %1430 = vmatpush1.msra.mxu0 %v1136
    %1431 = vmatprep.subr.mxu0 0.0
    %1432 = vmatpush1.msra.mxu0 %v1135
    %1433 = vmatprep.subr.mxu0 0.0
    %1434 = vmatpush1.msra.mxu0 %v1134
    %1435 = vmatprep.subr.mxu0 0.0
    %1436 = vmatpush1.msra.mxu0 %v1133
    %1437 = vmatprep.subr.mxu0 0.0
    %1438 = vmatpush1.msra.mxu0 %v1132
    %1439 = vmatprep.subr.mxu0 0.0
    %1440 = vmatpush2.msra.mxu0 0.0
    %1441 = vmatprep.subr.mxu0 0.0
    %1442 = vmatpush2.msra.mxu0 0.0
    %1443 = vmatprep.subr.mxu0 0.0
    %1444 = vmatpush2.msra.mxu0 0.0
    %1445 = vmatprep.subr.mxu0 0.0
    %1446 = vmatpush2.msra.mxu0 0.0
    %1447 = vmatprep.subr.mxu0 0.0
    %1448 = vmatpush2.msra.mxu0 0.0
    %1449 = vmatprep.subr.mxu0 0.0
    %1450 = vmatpush2.msra.mxu0 0.0
    %1451 = vmatprep.subr.mxu0 0.0
    %1452 = vmatpush2.msra.mxu0 0.0
    %1453 = vmatprep.subr.mxu0 0.0
    %1454 = vmatpush2.msra.mxu0 0.0
    %1455 = vmatprep.subr.mxu0 0.0
    %1456 = vmatpush2.msra.mxu0 0.0
    %1457 = vmatprep.subr.mxu0 0.0
    %1458 = vmatpush2.msra.mxu0 0.0
    %1459 = vmatprep.subr.mxu0 0.0
    %1460 = vmatpush2.msra.mxu0 0.0
    %1461 = vmatprep.subr.mxu0 0.0
    %1462 = vmatpush2.msra.mxu0 0.0
    %1463 = vmatprep.subr.mxu0 0.0
    %1464 = vmatpush2.msra.mxu0 0.0
    %1465 = vmatprep.subr.mxu0 0.0
    %1466 = vmatpush2.msra.mxu0 0.0
    %1467 = vmatprep.subr.mxu0 0.0
    %1468 = vmatpush2.msra.mxu0 0.0
    %1469 = vmatprep.subr.mxu0 0.0
    %1470 = vmatpush2.msra.mxu0 0.0
    %1471 = vmatprep.mubr.f32.mxu0 0.0
    %1472 = vmatmul.mubr.f32.gmra.mxu0 %v1405
    %v1473 = vpop.f32.mrf.mxu0
    %v1474 = vadd.f32 %v1304, %v1473
    %v1475 = vpop.f32.mrf.mxu0
    %1476 = vdwg.mxu0
    %1477 = vmatprep.subr.mxu0 0.0
    %1478 = vmatpush1.msra.mxu0 %v1164
    %1479 = vmatprep.subr.mxu0 0.0
    %1480 = vmatpush1.msra.mxu0 %v1163
    %1481 = vmatprep.subr.mxu0 0.0
    %1482 = vmatpush1.msra.mxu0 %v1162
    %1483 = vmatprep.subr.mxu0 0.0
    %1484 = vmatpush1.msra.mxu0 %v1161
    %1485 = vmatprep.subr.mxu0 0.0
    %1486 = vmatpush1.msra.mxu0 %v1160
    %1487 = vmatprep.subr.mxu0 0.0
    %1488 = vmatpush1.msra.mxu0 %v1159
    %1489 = vmatprep.subr.mxu0 0.0
    %1490 = vmatpush1.msra.mxu0 %v1158
    %1491 = vmatprep.subr.mxu0 0.0
    %1492 = vmatpush1.msra.mxu0 %v1157
    %1493 = vmatprep.subr.mxu0 0.0
    %1494 = vmatpush1.msra.mxu0 %v1156
    %1495 = vmatprep.subr.mxu0 0.0
    %1496 = vmatpush1.msra.mxu0 %v1155
    %1497 = vmatprep.subr.mxu0 0.0
    %1498 = vmatpush1.msra.mxu0 %v1154
    %1499 = vmatprep.subr.mxu0 0.0
    %1500 = vmatpush1.msra.mxu0 %v1153
    %1501 = vmatprep.subr.mxu0 0.0
    %1502 = vmatpush1.msra.mxu0 %v1152
    %1503 = vmatprep.subr.mxu0 0.0
    %1504 = vmatpush1.msra.mxu0 %v1151
    %1505 = vmatprep.subr.mxu0 0.0
    %1506 = vmatpush1.msra.mxu0 %v1150
    %1507 = vmatprep.subr.mxu0 0.0
    %1508 = vmatpush1.msra.mxu0 %v1149
    %1509 = vmatprep.subr.mxu0 0.0
    %1510 = vmatpush2.msra.mxu0 0.0
    %1511 = vmatprep.subr.mxu0 0.0
    %1512 = vmatpush2.msra.mxu0 0.0
    %1513 = vmatprep.subr.mxu0 0.0
    %1514 = vmatpush2.msra.mxu0 0.0
    %1515 = vmatprep.subr.mxu0 0.0
    %1516 = vmatpush2.msra.mxu0 0.0
    %1517 = vmatprep.subr.mxu0 0.0
    %1518 = vmatpush2.msra.mxu0 0.0
    %1519 = vmatprep.subr.mxu0 0.0
    %1520 = vmatpush2.msra.mxu0 0.0
    %1521 = vmatprep.subr.mxu0 0.0
    %1522 = vmatpush2.msra.mxu0 0.0
    %1523 = vmatprep.subr.mxu0 0.0
    %1524 = vmatpush2.msra.mxu0 0.0
    %1525 = vmatprep.subr.mxu0 0.0
    %1526 = vmatpush2.msra.mxu0 0.0
    %1527 = vmatprep.subr.mxu0 0.0
    %1528 = vmatpush2.msra.mxu0 0.0
    %1529 = vmatprep.subr.mxu0 0.0
    %1530 = vmatpush2.msra.mxu0 0.0
    %1531 = vmatprep.subr.mxu0 0.0
    %1532 = vmatpush2.msra.mxu0 0.0
    %1533 = vmatprep.subr.mxu0 0.0
    %1534 = vmatpush2.msra.mxu0 0.0
    %1535 = vmatprep.subr.mxu0 0.0
    %1536 = vmatpush2.msra.mxu0 0.0
    %1537 = vmatprep.subr.mxu0 0.0
    %1538 = vmatpush2.msra.mxu0 0.0
    %1539 = vmatprep.subr.mxu0 0.0
    %1540 = vmatpush2.msra.mxu0 0.0
    %1541 = vmatprep.mubr.f32.mxu0 0.0
    %1542 = vmatmul.mubr.f32.gmra.mxu0 %v1405
    %v1543 = vpop.f32.mrf.mxu0
    %v1544 = vadd.f32 %v1391, %v1543
    %v1545 = vpop.f32.mrf.mxu0
    %1546 = vdwg.mxu0
    %s1547 = scalar_lea.vmem [#allocation2], 256
    %v1548 = vld [vmem:[%s1547] sm:$0xff]
    %v1549 = vld [vmem:[%s1547 + $0x8] sm:$0xff]
    %v1550 = vld [vmem:[%s1547 + $0x10] sm:$0xff]
    %v1551 = vld [vmem:[%s1547 + $0x18] sm:$0xff]
    %v1552 = vld [vmem:[%s1547 + $0x20] sm:$0xff]
    %v1553 = vld [vmem:[%s1547 + $0x28] sm:$0xff]
    %v1554 = vld [vmem:[%s1547 + $0x30] sm:$0xff]
    %v1555 = vld [vmem:[%s1547 + $0x38] sm:$0xff]
    %v1556 = vld [vmem:[%s1547 + $0x40] sm:$0xff]
    %v1557 = vld [vmem:[%s1547 + $0x48] sm:$0xff]
    %v1558 = vld [vmem:[%s1547 + $0x50] sm:$0xff]
    %v1559 = vld [vmem:[%s1547 + $0x58] sm:$0xff]
    %v1560 = vld [vmem:[%s1547 + $0x60] sm:$0xff]
    %v1561 = vld [vmem:[%s1547 + $0x68] sm:$0xff]
    %v1562 = vld [vmem:[%s1547 + $0x70] sm:$0xff]
    %v1563 = vld [vmem:[%s1547 + $0x78] sm:$0xff]
    %v1565 = vlaneseq
    %v1566 = vshrl.u32 %v1565, 7
    %v1567 = vsub.s32 0, %v1566
    %v1568 = vrot.slane %v1129, %v1567
    %v1569 = vsel %vm1222, %v1201, %v1197
    %v1570 = vsel %vm1224, %v1205, %v1569
    %v1571 = vsel %vm1226, %v1209, %v1570
    %v1572 = vsel %vm1228, %v1213, %v1571
    %v1573 = vsel %vm1230, %v1217, %v1572
    %v1574 = vsel %vm1232, %v1221, %v1573
    %v1575 = vsel %vm1234, %v1568, %v1574
    %1577 = vmatprep.subr.mxu0 0.0
    %1578 = vmatpush1.msra.mxu0 %v1563
    %1579 = vmatprep.subr.mxu0 0.0
    %1580 = vmatpush1.msra.mxu0 %v1562
    %1581 = vmatprep.subr.mxu0 0.0
    %1582 = vmatpush1.msra.mxu0 %v1561
    %1583 = vmatprep.subr.mxu0 0.0
    %1584 = vmatpush1.msra.mxu0 %v1560
    %1585 = vmatprep.subr.mxu0 0.0
    %1586 = vmatpush1.msra.mxu0 %v1559
    %1587 = vmatprep.subr.mxu0 0.0
    %1588 = vmatpush1.msra.mxu0 %v1558
    %1589 = vmatprep.subr.mxu0 0.0
    %1590 = vmatpush1.msra.mxu0 %v1557
    %1591 = vmatprep.subr.mxu0 0.0
    %1592 = vmatpush1.msra.mxu0 %v1556
    %1593 = vmatprep.subr.mxu0 0.0
    %1594 = vmatpush1.msra.mxu0 %v1555
    %1595 = vmatprep.subr.mxu0 0.0
    %1596 = vmatpush1.msra.mxu0 %v1554
    %1597 = vmatprep.subr.mxu0 0.0
    %1598 = vmatpush1.msra.mxu0 %v1553
    %1599 = vmatprep.subr.mxu0 0.0
    %1600 = vmatpush1.msra.mxu0 %v1552
    %1601 = vmatprep.subr.mxu0 0.0
    %1602 = vmatpush1.msra.mxu0 %v1551
    %1603 = vmatprep.subr.mxu0 0.0
    %1604 = vmatpush1.msra.mxu0 %v1550
    %1605 = vmatprep.subr.mxu0 0.0
    %1606 = vmatpush1.msra.mxu0 %v1549
    %1607 = vmatprep.subr.mxu0 0.0
    %1608 = vmatpush1.msra.mxu0 %v1548
    %1609 = vmatprep.subr.mxu0 0.0
    %1610 = vmatpush2.msra.mxu0 0.0
    %1611 = vmatprep.subr.mxu0 0.0
    %1612 = vmatpush2.msra.mxu0 0.0
    %1613 = vmatprep.subr.mxu0 0.0
    %1614 = vmatpush2.msra.mxu0 0.0
    %1615 = vmatprep.subr.mxu0 0.0
    %1616 = vmatpush2.msra.mxu0 0.0
    %1617 = vmatprep.subr.mxu0 0.0
    %1618 = vmatpush2.msra.mxu0 0.0
    %1619 = vmatprep.subr.mxu0 0.0
    %1620 = vmatpush2.msra.mxu0 0.0
    %1621 = vmatprep.subr.mxu0 0.0
    %1622 = vmatpush2.msra.mxu0 0.0
    %1623 = vmatprep.subr.mxu0 0.0
    %1624 = vmatpush2.msra.mxu0 0.0
    %1625 = vmatprep.subr.mxu0 0.0
    %1626 = vmatpush2.msra.mxu0 0.0
    %1627 = vmatprep.subr.mxu0 0.0
    %1628 = vmatpush2.msra.mxu0 0.0
    %1629 = vmatprep.subr.mxu0 0.0
    %1630 = vmatpush2.msra.mxu0 0.0
    %1631 = vmatprep.subr.mxu0 0.0
    %1632 = vmatpush2.msra.mxu0 0.0
    %1633 = vmatprep.subr.mxu0 0.0
    %1634 = vmatpush2.msra.mxu0 0.0
    %1635 = vmatprep.subr.mxu0 0.0
    %1636 = vmatpush2.msra.mxu0 0.0
    %1637 = vmatprep.subr.mxu0 0.0
    %1638 = vmatpush2.msra.mxu0 0.0
    %1639 = vmatprep.subr.mxu0 0.0
    %1640 = vmatpush2.msra.mxu0 0.0
    %1641 = vmatprep.mubr.f32.mxu0 0.0
    %1642 = vmatmul.mubr.f32.gmra.mxu0 %v1575
    %v1643 = vpop.f32.mrf.mxu0
    %v1644 = vadd.f32 0.0, %v1643
    %v1645 = vpop.f32.mrf.mxu0
    %1646 = vdwg.mxu0
    %s1647 = scalar_lea.vmem [#allocation2], 896
    %v1648 = vld [vmem:[%s1647] sm:$0xff]
    %v1649 = vld [vmem:[%s1647 + $0x8] sm:$0xff]
    %v1650 = vld [vmem:[%s1647 + $0x10] sm:$0xff]
    %v1651 = vld [vmem:[%s1647 + $0x18] sm:$0xff]
    %v1652 = vld [vmem:[%s1647 + $0x20] sm:$0xff]
    %v1653 = vld [vmem:[%s1647 + $0x28] sm:$0xff]
    %v1654 = vld [vmem:[%s1647 + $0x30] sm:$0xff]
    %v1655 = vld [vmem:[%s1647 + $0x38] sm:$0xff]
    %v1656 = vld [vmem:[%s1647 + $0x40] sm:$0xff]
    %v1657 = vld [vmem:[%s1647 + $0x48] sm:$0xff]
    %v1658 = vld [vmem:[%s1647 + $0x50] sm:$0xff]
    %v1659 = vld [vmem:[%s1647 + $0x58] sm:$0xff]
    %v1660 = vld [vmem:[%s1647 + $0x60] sm:$0xff]
    %v1661 = vld [vmem:[%s1647 + $0x68] sm:$0xff]
    %v1662 = vld [vmem:[%s1647 + $0x70] sm:$0xff]
    %v1663 = vld [vmem:[%s1647 + $0x78] sm:$0xff]
    %1664 = vmatprep.subr.mxu0 0.0
    %1665 = vmatpush1.msra.mxu0 %v1663
    %1666 = vmatprep.subr.mxu0 0.0
    %1667 = vmatpush1.msra.mxu0 %v1662
    %1668 = vmatprep.subr.mxu0 0.0
    %1669 = vmatpush1.msra.mxu0 %v1661
    %1670 = vmatprep.subr.mxu0 0.0
    %1671 = vmatpush1.msra.mxu0 %v1660
    %1672 = vmatprep.subr.mxu0 0.0
    %1673 = vmatpush1.msra.mxu0 %v1659
    %1674 = vmatprep.subr.mxu0 0.0
    %1675 = vmatpush1.msra.mxu0 %v1658
    %1676 = vmatprep.subr.mxu0 0.0
    %1677 = vmatpush1.msra.mxu0 %v1657
    %1678 = vmatprep.subr.mxu0 0.0
    %1679 = vmatpush1.msra.mxu0 %v1656
    %1680 = vmatprep.subr.mxu0 0.0
    %1681 = vmatpush1.msra.mxu0 %v1655
    %1682 = vmatprep.subr.mxu0 0.0
    %1683 = vmatpush1.msra.mxu0 %v1654
    %1684 = vmatprep.subr.mxu0 0.0
    %1685 = vmatpush1.msra.mxu0 %v1653
    %1686 = vmatprep.subr.mxu0 0.0
    %1687 = vmatpush1.msra.mxu0 %v1652
    %1688 = vmatprep.subr.mxu0 0.0
    %1689 = vmatpush1.msra.mxu0 %v1651
    %1690 = vmatprep.subr.mxu0 0.0
    %1691 = vmatpush1.msra.mxu0 %v1650
    %1692 = vmatprep.subr.mxu0 0.0
    %1693 = vmatpush1.msra.mxu0 %v1649
    %1694 = vmatprep.subr.mxu0 0.0
    %1695 = vmatpush1.msra.mxu0 %v1648
    %1696 = vmatprep.subr.mxu0 0.0
    %1697 = vmatpush2.msra.mxu0 0.0
    %1698 = vmatprep.subr.mxu0 0.0
    %1699 = vmatpush2.msra.mxu0 0.0
    %1700 = vmatprep.subr.mxu0 0.0
    %1701 = vmatpush2.msra.mxu0 0.0
    %1702 = vmatprep.subr.mxu0 0.0
    %1703 = vmatpush2.msra.mxu0 0.0
    %1704 = vmatprep.subr.mxu0 0.0
    %1705 = vmatpush2.msra.mxu0 0.0
    %1706 = vmatprep.subr.mxu0 0.0
    %1707 = vmatpush2.msra.mxu0 0.0
    %1708 = vmatprep.subr.mxu0 0.0
    %1709 = vmatpush2.msra.mxu0 0.0
    %1710 = vmatprep.subr.mxu0 0.0
    %1711 = vmatpush2.msra.mxu0 0.0
    %1712 = vmatprep.subr.mxu0 0.0
    %1713 = vmatpush2.msra.mxu0 0.0
    %1714 = vmatprep.subr.mxu0 0.0
    %1715 = vmatpush2.msra.mxu0 0.0
    %1716 = vmatprep.subr.mxu0 0.0
    %1717 = vmatpush2.msra.mxu0 0.0
    %1718 = vmatprep.subr.mxu0 0.0
    %1719 = vmatpush2.msra.mxu0 0.0
    %1720 = vmatprep.subr.mxu0 0.0
    %1721 = vmatpush2.msra.mxu0 0.0
    %1722 = vmatprep.subr.mxu0 0.0
    %1723 = vmatpush2.msra.mxu0 0.0
    %1724 = vmatprep.subr.mxu0 0.0
    %1725 = vmatpush2.msra.mxu0 0.0
    %1726 = vmatprep.subr.mxu0 0.0
    %1727 = vmatpush2.msra.mxu0 0.0
    %1728 = vmatprep.mubr.f32.mxu0 0.0
    %1729 = vmatmul.mubr.f32.gmra.mxu0 %v1575
    %v1730 = vpop.f32.mrf.mxu0
    %v1731 = vadd.f32 0.0, %v1730
    %v1732 = vpop.f32.mrf.mxu0
    %1733 = vdwg.mxu0
    %v1734 = vadd.f32 %v1474, %v1644
    %v1735 = vadd.f32 %v1544, %v1731
    %s1736 = scalar_lea.vmem [#allocation2], 384
    %v1737 = vld [vmem:[%s1736] sm:$0xff]
    %v1738 = vld [vmem:[%s1736 + $0x8] sm:$0xff]
    %v1739 = vld [vmem:[%s1736 + $0x10] sm:$0xff]
    %v1740 = vld [vmem:[%s1736 + $0x18] sm:$0xff]
    %v1741 = vld [vmem:[%s1736 + $0x20] sm:$0xff]
    %v1742 = vld [vmem:[%s1736 + $0x28] sm:$0xff]
    %v1743 = vld [vmem:[%s1736 + $0x30] sm:$0xff]
    %v1744 = vld [vmem:[%s1736 + $0x38] sm:$0xff]
    %v1745 = vld [vmem:[%s1736 + $0x40] sm:$0xff]
    %v1746 = vld [vmem:[%s1736 + $0x48] sm:$0xff]
    %v1747 = vld [vmem:[%s1736 + $0x50] sm:$0xff]
    %v1748 = vld [vmem:[%s1736 + $0x58] sm:$0xff]
    %v1749 = vld [vmem:[%s1736 + $0x60] sm:$0xff]
    %v1750 = vld [vmem:[%s1736 + $0x68] sm:$0xff]
    %v1751 = vld [vmem:[%s1736 + $0x70] sm:$0xff]
    %v1752 = vld [vmem:[%s1736 + $0x78] sm:$0xff]
    %v1754 = vlaneseq
    %v1755 = vshrl.u32 %v1754, 7
    %v1756 = vsub.s32 0, %v1755
    %v1757 = vrot.slane %v1130, %v1756
    %v1758 = vsel %vm1222, %v1205, %v1201
    %v1759 = vsel %vm1224, %v1209, %v1758
    %v1760 = vsel %vm1226, %v1213, %v1759
    %v1761 = vsel %vm1228, %v1217, %v1760
    %v1762 = vsel %vm1230, %v1221, %v1761
    %v1763 = vsel %vm1232, %v1568, %v1762
    %v1764 = vsel %vm1234, %v1757, %v1763
    %1766 = vmatprep.subr.mxu0 0.0
    %1767 = vmatpush1.msra.mxu0 %v1752
    %1768 = vmatprep.subr.mxu0 0.0
    %1769 = vmatpush1.msra.mxu0 %v1751
    %1770 = vmatprep.subr.mxu0 0.0
    %1771 = vmatpush1.msra.mxu0 %v1750
    %1772 = vmatprep.subr.mxu0 0.0
    %1773 = vmatpush1.msra.mxu0 %v1749
    %1774 = vmatprep.subr.mxu0 0.0
    %1775 = vmatpush1.msra.mxu0 %v1748
    %1776 = vmatprep.subr.mxu0 0.0
    %1777 = vmatpush1.msra.mxu0 %v1747
    %1778 = vmatprep.subr.mxu0 0.0
    %1779 = vmatpush1.msra.mxu0 %v1746
    %1780 = vmatprep.subr.mxu0 0.0
    %1781 = vmatpush1.msra.mxu0 %v1745
    %1782 = vmatprep.subr.mxu0 0.0
    %1783 = vmatpush1.msra.mxu0 %v1744
    %1784 = vmatprep.subr.mxu0 0.0
    %1785 = vmatpush1.msra.mxu0 %v1743
    %1786 = vmatprep.subr.mxu0 0.0
    %1787 = vmatpush1.msra.mxu0 %v1742
    %1788 = vmatprep.subr.mxu0 0.0
    %1789 = vmatpush1.msra.mxu0 %v1741
    %1790 = vmatprep.subr.mxu0 0.0
    %1791 = vmatpush1.msra.mxu0 %v1740
    %1792 = vmatprep.subr.mxu0 0.0
    %1793 = vmatpush1.msra.mxu0 %v1739
    %1794 = vmatprep.subr.mxu0 0.0
    %1795 = vmatpush1.msra.mxu0 %v1738
    %1796 = vmatprep.subr.mxu0 0.0
    %1797 = vmatpush1.msra.mxu0 %v1737
    %1798 = vmatprep.subr.mxu0 0.0
    %1799 = vmatpush2.msra.mxu0 0.0
    %1800 = vmatprep.subr.mxu0 0.0
    %1801 = vmatpush2.msra.mxu0 0.0
    %1802 = vmatprep.subr.mxu0 0.0
    %1803 = vmatpush2.msra.mxu0 0.0
    %1804 = vmatprep.subr.mxu0 0.0
    %1805 = vmatpush2.msra.mxu0 0.0
    %1806 = vmatprep.subr.mxu0 0.0
    %1807 = vmatpush2.msra.mxu0 0.0
    %1808 = vmatprep.subr.mxu0 0.0
    %1809 = vmatpush2.msra.mxu0 0.0
    %1810 = vmatprep.subr.mxu0 0.0
    %1811 = vmatpush2.msra.mxu0 0.0
    %1812 = vmatprep.subr.mxu0 0.0
    %1813 = vmatpush2.msra.mxu0 0.0
    %1814 = vmatprep.subr.mxu0 0.0
    %1815 = vmatpush2.msra.mxu0 0.0
    %1816 = vmatprep.subr.mxu0 0.0
    %1817 = vmatpush2.msra.mxu0 0.0
    %1818 = vmatprep.subr.mxu0 0.0
    %1819 = vmatpush2.msra.mxu0 0.0
    %1820 = vmatprep.subr.mxu0 0.0
    %1821 = vmatpush2.msra.mxu0 0.0
    %1822 = vmatprep.subr.mxu0 0.0
    %1823 = vmatpush2.msra.mxu0 0.0
    %1824 = vmatprep.subr.mxu0 0.0
    %1825 = vmatpush2.msra.mxu0 0.0
    %1826 = vmatprep.subr.mxu0 0.0
    %1827 = vmatpush2.msra.mxu0 0.0
    %1828 = vmatprep.subr.mxu0 0.0
    %1829 = vmatpush2.msra.mxu0 0.0
    %1830 = vmatprep.mubr.f32.mxu0 0.0
    %1831 = vmatmul.mubr.f32.gmra.mxu0 %v1764
    %v1832 = vpop.f32.mrf.mxu0
    %v1833 = vadd.f32 0.0, %v1832
    %v1834 = vpop.f32.mrf.mxu0
    %1835 = vdwg.mxu0
    %s1836 = scalar_lea.vmem [#allocation2], 1024
    %v1837 = vld [vmem:[%s1836] sm:$0xff]
    %v1838 = vld [vmem:[%s1836 + $0x8] sm:$0xff]
    %v1839 = vld [vmem:[%s1836 + $0x10] sm:$0xff]
    %v1840 = vld [vmem:[%s1836 + $0x18] sm:$0xff]
    %v1841 = vld [vmem:[%s1836 + $0x20] sm:$0xff]
    %v1842 = vld [vmem:[%s1836 + $0x28] sm:$0xff]
    %v1843 = vld [vmem:[%s1836 + $0x30] sm:$0xff]
    %v1844 = vld [vmem:[%s1836 + $0x38] sm:$0xff]
    %v1845 = vld [vmem:[%s1836 + $0x40] sm:$0xff]
    %v1846 = vld [vmem:[%s1836 + $0x48] sm:$0xff]
    %v1847 = vld [vmem:[%s1836 + $0x50] sm:$0xff]
    %v1848 = vld [vmem:[%s1836 + $0x58] sm:$0xff]
    %v1849 = vld [vmem:[%s1836 + $0x60] sm:$0xff]
    %v1850 = vld [vmem:[%s1836 + $0x68] sm:$0xff]
    %v1851 = vld [vmem:[%s1836 + $0x70] sm:$0xff]
    %v1852 = vld [vmem:[%s1836 + $0x78] sm:$0xff]
    %1853 = vmatprep.subr.mxu0 0.0
    %1854 = vmatpush1.msra.mxu0 %v1852
    %1855 = vmatprep.subr.mxu0 0.0
    %1856 = vmatpush1.msra.mxu0 %v1851
    %1857 = vmatprep.subr.mxu0 0.0
    %1858 = vmatpush1.msra.mxu0 %v1850
    %1859 = vmatprep.subr.mxu0 0.0
    %1860 = vmatpush1.msra.mxu0 %v1849
    %1861 = vmatprep.subr.mxu0 0.0
    %1862 = vmatpush1.msra.mxu0 %v1848
    %1863 = vmatprep.subr.mxu0 0.0
    %1864 = vmatpush1.msra.mxu0 %v1847
    %1865 = vmatprep.subr.mxu0 0.0
    %1866 = vmatpush1.msra.mxu0 %v1846
    %1867 = vmatprep.subr.mxu0 0.0
    %1868 = vmatpush1.msra.mxu0 %v1845
    %1869 = vmatprep.subr.mxu0 0.0
    %1870 = vmatpush1.msra.mxu0 %v1844
    %1871 = vmatprep.subr.mxu0 0.0
    %1872 = vmatpush1.msra.mxu0 %v1843
    %1873 = vmatprep.subr.mxu0 0.0
    %1874 = vmatpush1.msra.mxu0 %v1842
    %1875 = vmatprep.subr.mxu0 0.0
    %1876 = vmatpush1.msra.mxu0 %v1841
    %1877 = vmatprep.subr.mxu0 0.0
    %1878 = vmatpush1.msra.mxu0 %v1840
    %1879 = vmatprep.subr.mxu0 0.0
    %1880 = vmatpush1.msra.mxu0 %v1839
    %1881 = vmatprep.subr.mxu0 0.0
    %1882 = vmatpush1.msra.mxu0 %v1838
    %1883 = vmatprep.subr.mxu0 0.0
    %1884 = vmatpush1.msra.mxu0 %v1837
    %1885 = vmatprep.subr.mxu0 0.0
    %1886 = vmatpush2.msra.mxu0 0.0
    %1887 = vmatprep.subr.mxu0 0.0
    %1888 = vmatpush2.msra.mxu0 0.0
    %1889 = vmatprep.subr.mxu0 0.0
    %1890 = vmatpush2.msra.mxu0 0.0
    %1891 = vmatprep.subr.mxu0 0.0
    %1892 = vmatpush2.msra.mxu0 0.0
    %1893 = vmatprep.subr.mxu0 0.0
    %1894 = vmatpush2.msra.mxu0 0.0
    %1895 = vmatprep.subr.mxu0 0.0
    %1896 = vmatpush2.msra.mxu0 0.0
    %1897 = vmatprep.subr.mxu0 0.0
    %1898 = vmatpush2.msra.mxu0 0.0
    %1899 = vmatprep.subr.mxu0 0.0
    %1900 = vmatpush2.msra.mxu0 0.0
    %1901 = vmatprep.subr.mxu0 0.0
    %1902 = vmatpush2.msra.mxu0 0.0
    %1903 = vmatprep.subr.mxu0 0.0
    %1904 = vmatpush2.msra.mxu0 0.0
    %1905 = vmatprep.subr.mxu0 0.0
    %1906 = vmatpush2.msra.mxu0 0.0
    %1907 = vmatprep.subr.mxu0 0.0
    %1908 = vmatpush2.msra.mxu0 0.0
    %1909 = vmatprep.subr.mxu0 0.0
    %1910 = vmatpush2.msra.mxu0 0.0
    %1911 = vmatprep.subr.mxu0 0.0
    %1912 = vmatpush2.msra.mxu0 0.0
    %1913 = vmatprep.subr.mxu0 0.0
    %1914 = vmatpush2.msra.mxu0 0.0
    %1915 = vmatprep.subr.mxu0 0.0
    %1916 = vmatpush2.msra.mxu0 0.0
    %1917 = vmatprep.mubr.f32.mxu0 0.0
    %1918 = vmatmul.mubr.f32.gmra.mxu0 %v1764
    %v1919 = vpop.f32.mrf.mxu0
    %v1920 = vadd.f32 0.0, %v1919
    %v1921 = vpop.f32.mrf.mxu0
    %1922 = vdwg.mxu0
    %v1923 = vadd.f32 %v1734, %v1833
    %v1924 = vadd.f32 %v1735, %v1920
    %s1925 = scalar_lea.vmem [#allocation2], 512
    %v1926 = vld [vmem:[%s1925] sm:$0xff]
    %v1927 = vld [vmem:[%s1925 + $0x8] sm:$0xff]
    %v1928 = vld [vmem:[%s1925 + $0x10] sm:$0xff]
    %v1929 = vld [vmem:[%s1925 + $0x18] sm:$0xff]
    %v1930 = vld [vmem:[%s1925 + $0x20] sm:$0xff]
    %v1931 = vld [vmem:[%s1925 + $0x28] sm:$0xff]
    %v1932 = vld [vmem:[%s1925 + $0x30] sm:$0xff]
    %v1933 = vld [vmem:[%s1925 + $0x38] sm:$0xff]
    %v1934 = vld [vmem:[%s1925 + $0x40] sm:$0xff]
    %v1935 = vld [vmem:[%s1925 + $0x48] sm:$0xff]
    %v1936 = vld [vmem:[%s1925 + $0x50] sm:$0xff]
    %v1937 = vld [vmem:[%s1925 + $0x58] sm:$0xff]
    %v1938 = vld [vmem:[%s1925 + $0x60] sm:$0xff]
    %v1939 = vld [vmem:[%s1925 + $0x68] sm:$0xff]
    %v1940 = vld [vmem:[%s1925 + $0x70] sm:$0xff]
    %v1941 = vld [vmem:[%s1925 + $0x78] sm:$0xff]
    %v1943 = vlaneseq
    %v1944 = vshrl.u32 %v1943, 7
    %v1945 = vsub.s32 0, %v1944
    %v1946 = vrot.slane %v1131, %v1945
    %v1947 = vsel %vm1222, %v1209, %v1205
    %v1948 = vsel %vm1224, %v1213, %v1947
    %v1949 = vsel %vm1226, %v1217, %v1948
    %v1950 = vsel %vm1228, %v1221, %v1949
    %v1951 = vsel %vm1230, %v1568, %v1950
    %v1952 = vsel %vm1232, %v1757, %v1951
    %v1953 = vsel %vm1234, %v1946, %v1952
    %1955 = vmatprep.subr.mxu0 0.0
    %1956 = vmatpush1.msra.mxu0 %v1941
    %1957 = vmatprep.subr.mxu0 0.0
    %1958 = vmatpush1.msra.mxu0 %v1940
    %1959 = vmatprep.subr.mxu0 0.0
    %1960 = vmatpush1.msra.mxu0 %v1939
    %1961 = vmatprep.subr.mxu0 0.0
    %1962 = vmatpush1.msra.mxu0 %v1938
    %1963 = vmatprep.subr.mxu0 0.0
    %1964 = vmatpush1.msra.mxu0 %v1937
    %1965 = vmatprep.subr.mxu0 0.0
    %1966 = vmatpush1.msra.mxu0 %v1936
    %1967 = vmatprep.subr.mxu0 0.0
    %1968 = vmatpush1.msra.mxu0 %v1935
    %1969 = vmatprep.subr.mxu0 0.0
    %1970 = vmatpush1.msra.mxu0 %v1934
    %1971 = vmatprep.subr.mxu0 0.0
    %1972 = vmatpush1.msra.mxu0 %v1933
    %1973 = vmatprep.subr.mxu0 0.0
    %1974 = vmatpush1.msra.mxu0 %v1932
    %1975 = vmatprep.subr.mxu0 0.0
    %1976 = vmatpush1.msra.mxu0 %v1931
    %1977 = vmatprep.subr.mxu0 0.0
    %1978 = vmatpush1.msra.mxu0 %v1930
    %1979 = vmatprep.subr.mxu0 0.0
    %1980 = vmatpush1.msra.mxu0 %v1929
    %1981 = vmatprep.subr.mxu0 0.0
    %1982 = vmatpush1.msra.mxu0 %v1928
    %1983 = vmatprep.subr.mxu0 0.0
    %1984 = vmatpush1.msra.mxu0 %v1927
    %1985 = vmatprep.subr.mxu0 0.0
    %1986 = vmatpush1.msra.mxu0 %v1926
    %1987 = vmatprep.subr.mxu0 0.0
    %1988 = vmatpush2.msra.mxu0 0.0
    %1989 = vmatprep.subr.mxu0 0.0
    %1990 = vmatpush2.msra.mxu0 0.0
    %1991 = vmatprep.subr.mxu0 0.0
    %1992 = vmatpush2.msra.mxu0 0.0
    %1993 = vmatprep.subr.mxu0 0.0
    %1994 = vmatpush2.msra.mxu0 0.0
    %1995 = vmatprep.subr.mxu0 0.0
    %1996 = vmatpush2.msra.mxu0 0.0
    %1997 = vmatprep.subr.mxu0 0.0
    %1998 = vmatpush2.msra.mxu0 0.0
    %1999 = vmatprep.subr.mxu0 0.0
    %2000 = vmatpush2.msra.mxu0 0.0
    %2001 = vmatprep.subr.mxu0 0.0
    %2002 = vmatpush2.msra.mxu0 0.0
    %2003 = vmatprep.subr.mxu0 0.0
    %2004 = vmatpush2.msra.mxu0 0.0
    %2005 = vmatprep.subr.mxu0 0.0
    %2006 = vmatpush2.msra.mxu0 0.0
    %2007 = vmatprep.subr.mxu0 0.0
    %2008 = vmatpush2.msra.mxu0 0.0
    %2009 = vmatprep.subr.mxu0 0.0
    %2010 = vmatpush2.msra.mxu0 0.0
    %2011 = vmatprep.subr.mxu0 0.0
    %2012 = vmatpush2.msra.mxu0 0.0
    %2013 = vmatprep.subr.mxu0 0.0
    %2014 = vmatpush2.msra.mxu0 0.0
    %2015 = vmatprep.subr.mxu0 0.0
    %2016 = vmatpush2.msra.mxu0 0.0
    %2017 = vmatprep.subr.mxu0 0.0
    %2018 = vmatpush2.msra.mxu0 0.0
    %2019 = vmatprep.mubr.f32.mxu0 0.0
    %2020 = vmatmul.mubr.f32.gmra.mxu0 %v1953
    %v2021 = vpop.f32.mrf.mxu0
    %v2022 = vadd.f32 0.0, %v2021
    %v2023 = vpop.f32.mrf.mxu0
    %2024 = vdwg.mxu0
    %s2025 = scalar_lea.vmem [#allocation2], 1152
    %v2026 = vld [vmem:[%s2025] sm:$0xff]
    %v2027 = vld [vmem:[%s2025 + $0x8] sm:$0xff]
    %v2028 = vld [vmem:[%s2025 + $0x10] sm:$0xff]
    %v2029 = vld [vmem:[%s2025 + $0x18] sm:$0xff]
    %v2030 = vld [vmem:[%s2025 + $0x20] sm:$0xff]
    %v2031 = vld [vmem:[%s2025 + $0x28] sm:$0xff]
    %v2032 = vld [vmem:[%s2025 + $0x30] sm:$0xff]
    %v2033 = vld [vmem:[%s2025 + $0x38] sm:$0xff]
    %v2034 = vld [vmem:[%s2025 + $0x40] sm:$0xff]
    %v2035 = vld [vmem:[%s2025 + $0x48] sm:$0xff]
    %v2036 = vld [vmem:[%s2025 + $0x50] sm:$0xff]
    %v2037 = vld [vmem:[%s2025 + $0x58] sm:$0xff]
    %v2038 = vld [vmem:[%s2025 + $0x60] sm:$0xff]
    %v2039 = vld [vmem:[%s2025 + $0x68] sm:$0xff]
    %v2040 = vld [vmem:[%s2025 + $0x70] sm:$0xff]
    %v2041 = vld [vmem:[%s2025 + $0x78] sm:$0xff]
    %2042 = vmatprep.subr.mxu0 0.0
    %2043 = vmatpush1.msra.mxu0 %v2041
    %2044 = vmatprep.subr.mxu0 0.0
    %2045 = vmatpush1.msra.mxu0 %v2040
    %2046 = vmatprep.subr.mxu0 0.0
    %2047 = vmatpush1.msra.mxu0 %v2039
    %2048 = vmatprep.subr.mxu0 0.0
    %2049 = vmatpush1.msra.mxu0 %v2038
    %2050 = vmatprep.subr.mxu0 0.0
    %2051 = vmatpush1.msra.mxu0 %v2037
    %2052 = vmatprep.subr.mxu0 0.0
    %2053 = vmatpush1.msra.mxu0 %v2036
    %2054 = vmatprep.subr.mxu0 0.0
    %2055 = vmatpush1.msra.mxu0 %v2035
    %2056 = vmatprep.subr.mxu0 0.0
    %2057 = vmatpush1.msra.mxu0 %v2034
    %2058 = vmatprep.subr.mxu0 0.0
    %2059 = vmatpush1.msra.mxu0 %v2033
    %2060 = vmatprep.subr.mxu0 0.0
    %2061 = vmatpush1.msra.mxu0 %v2032
    %2062 = vmatprep.subr.mxu0 0.0
    %2063 = vmatpush1.msra.mxu0 %v2031
    %2064 = vmatprep.subr.mxu0 0.0
    %2065 = vmatpush1.msra.mxu0 %v2030
    %2066 = vmatprep.subr.mxu0 0.0
    %2067 = vmatpush1.msra.mxu0 %v2029
    %2068 = vmatprep.subr.mxu0 0.0
    %2069 = vmatpush1.msra.mxu0 %v2028
    %2070 = vmatprep.subr.mxu0 0.0
    %2071 = vmatpush1.msra.mxu0 %v2027
    %2072 = vmatprep.subr.mxu0 0.0
    %2073 = vmatpush1.msra.mxu0 %v2026
    %2074 = vmatprep.subr.mxu0 0.0
    %2075 = vmatpush2.msra.mxu0 0.0
    %2076 = vmatprep.subr.mxu0 0.0
    %2077 = vmatpush2.msra.mxu0 0.0
    %2078 = vmatprep.subr.mxu0 0.0
    %2079 = vmatpush2.msra.mxu0 0.0
    %2080 = vmatprep.subr.mxu0 0.0
    %2081 = vmatpush2.msra.mxu0 0.0
    %2082 = vmatprep.subr.mxu0 0.0
    %2083 = vmatpush2.msra.mxu0 0.0
    %2084 = vmatprep.subr.mxu0 0.0
    %2085 = vmatpush2.msra.mxu0 0.0
    %2086 = vmatprep.subr.mxu0 0.0
    %2087 = vmatpush2.msra.mxu0 0.0
    %2088 = vmatprep.subr.mxu0 0.0
    %2089 = vmatpush2.msra.mxu0 0.0
    %2090 = vmatprep.subr.mxu0 0.0
    %2091 = vmatpush2.msra.mxu0 0.0
    %2092 = vmatprep.subr.mxu0 0.0
    %2093 = vmatpush2.msra.mxu0 0.0
    %2094 = vmatprep.subr.mxu0 0.0
    %2095 = vmatpush2.msra.mxu0 0.0
    %2096 = vmatprep.subr.mxu0 0.0
    %2097 = vmatpush2.msra.mxu0 0.0
    %2098 = vmatprep.subr.mxu0 0.0
    %2099 = vmatpush2.msra.mxu0 0.0
    %2100 = vmatprep.subr.mxu0 0.0
    %2101 = vmatpush2.msra.mxu0 0.0
    %2102 = vmatprep.subr.mxu0 0.0
    %2103 = vmatpush2.msra.mxu0 0.0
    %2104 = vmatprep.subr.mxu0 0.0
    %2105 = vmatpush2.msra.mxu0 0.0
    %2106 = vmatprep.mubr.f32.mxu0 0.0
    %2107 = vmatmul.mubr.f32.gmra.mxu0 %v1953
    %v2108 = vpop.f32.mrf.mxu0
    %v2109 = vadd.f32 0.0, %v2108
    %v2110 = vpop.f32.mrf.mxu0
    %2111 = vdwg.mxu0
    %v2112 = vadd.f32 %v1923, %v2022
    %v2113 = vadd.f32 %v1924, %v2109
    %v2115 = vlaneseq
    %v2116 = vshrl.u32 %v2115, 7
    %v2117 = vsub.s32 0, %v2116
    %v2118 = vrot.slane %v48, %v2117
    %v2120 = vadd.f32 %v2112, %v2118
    %v2121 = vmax.f32 %v2120, 0.0
    %v2122 = vadd.f32 %v2113, %v2118
    %v2123 = vmax.f32 %v2122, 0.0
    %v2124 = vmax.f32 %v2121, %v2123
    %v2126 = vcombine.high %v2124, %v2124
    %v2128 = vunpack.c.l.s4 1983009808
    %v2129 = vunpack.c.0.s8 %v2128
    %v2130 = vlaneseq
    %v2131 = vshrl.u32 %v2130, 7
    %v2132 = vsub.s32 %v2129, %v2131
    %v2133 = vrot.slane %v2124, %v2132
    %v2135 = vunpack.c.l.s4 1983009808
    %v2136 = vunpack.c.0.s8 %v2135
    %v2137 = vlaneseq
    %v2138 = vshrl.u32 %v2137, 7
    %v2139 = vsub.s32 %v2136, %v2138
    %v2140 = vrot.slane %v2126, %v2139
    %v2141 = vcombine.high %v2133, %v2133
    %v2142 = vcombine.high %v2140, %v2140
    %v2147 = vrot.slane %v2133, 7
    %v2148 = vrot.slane %v2147, 2
    %v2149 = vrot.slane %v2141, 7
    %v2150 = vrot.slane %v2149, 2
    %v2151 = vrot.slane %v2140, 7
    %v2152 = vrot.slane %v2151, 2
    %v2153 = vrot.slane %v2142, 7
    %v2154 = vrot.slane %v2153, 2
    %v2159 = vmax.f32 %v2133, %v2148
    %v2160 = vmax.f32 %v2141, %v2150
    %v2161 = vmax.f32 %v2140, %v2152
    %v2162 = vmax.f32 %v2142, %v2154
    %v2163 = vld [vmem:[%s5] sm:$0xff]
    %v2164 = vld [vmem:[%s5 + $0x8] sm:$0xff]
    %v2165 = vld [vmem:[%s5 + $0x10] sm:$0xff]
    %v2166 = vld [vmem:[%s5 + $0x18] sm:$0xff]
    %v2167 = vld [vmem:[%s5 + $0x20] sm:$0xff]
    %v2168 = vld [vmem:[%s5 + $0x28] sm:$0xff]
    %v2169 = vld [vmem:[%s5 + $0x30] sm:$0xff]
    %v2170 = vld [vmem:[%s5 + $0x38] sm:$0xff]
    %v2171 = vld [vmem:[%s5 + $0x40] sm:$0xff]
    %v2172 = vld [vmem:[%s5 + $0x48] sm:$0xff]
    %v2173 = vld [vmem:[%s5 + $0x50] sm:$0xff]
    %v2174 = vld [vmem:[%s5 + $0x58] sm:$0xff]
    %v2175 = vld [vmem:[%s5 + $0x60] sm:$0xff]
    %v2176 = vld [vmem:[%s5 + $0x68] sm:$0xff]
    %v2177 = vld [vmem:[%s5 + $0x70] sm:$0xff]
    %v2178 = vld [vmem:[%s5 + $0x78] sm:$0xff]
    %2179 = vmatprep.subr.mxu0 0.0
    %2180 = vmatpush1.msra.mxu0 %v2178
    %2181 = vmatprep.subr.mxu0 0.0
    %2182 = vmatpush1.msra.mxu0 %v2177
    %2183 = vmatprep.subr.mxu0 0.0
    %2184 = vmatpush1.msra.mxu0 %v2176
    %2185 = vmatprep.subr.mxu0 0.0
    %2186 = vmatpush1.msra.mxu0 %v2175
    %2187 = vmatprep.subr.mxu0 0.0
    %2188 = vmatpush1.msra.mxu0 %v2174
    %2189 = vmatprep.subr.mxu0 0.0
    %2190 = vmatpush1.msra.mxu0 %v2173
    %2191 = vmatprep.subr.mxu0 0.0
    %2192 = vmatpush1.msra.mxu0 %v2172
    %2193 = vmatprep.subr.mxu0 0.0
    %2194 = vmatpush1.msra.mxu0 %v2171
    %2195 = vmatprep.subr.mxu0 0.0
    %2196 = vmatpush1.msra.mxu0 %v2170
    %2197 = vmatprep.subr.mxu0 0.0
    %2198 = vmatpush1.msra.mxu0 %v2169
    %2199 = vmatprep.subr.mxu0 0.0
    %2200 = vmatpush1.msra.mxu0 %v2168
    %2201 = vmatprep.subr.mxu0 0.0
    %2202 = vmatpush1.msra.mxu0 %v2167
    %2203 = vmatprep.subr.mxu0 0.0
    %2204 = vmatpush1.msra.mxu0 %v2166
    %2205 = vmatprep.subr.mxu0 0.0
    %2206 = vmatpush1.msra.mxu0 %v2165
    %2207 = vmatprep.subr.mxu0 0.0
    %2208 = vmatpush1.msra.mxu0 %v2164
    %2209 = vmatprep.subr.mxu0 0.0
    %2210 = vmatpush1.msra.mxu0 %v2163
    %2211 = vmatprep.subr.mxu0 0.0
    %2212 = vmatpush2.msra.mxu0 0.0
    %2213 = vmatprep.subr.mxu0 0.0
    %2214 = vmatpush2.msra.mxu0 0.0
    %2215 = vmatprep.subr.mxu0 0.0
    %2216 = vmatpush2.msra.mxu0 0.0
    %2217 = vmatprep.subr.mxu0 0.0
    %2218 = vmatpush2.msra.mxu0 0.0
    %2219 = vmatprep.subr.mxu0 0.0
    %2220 = vmatpush2.msra.mxu0 0.0
    %2221 = vmatprep.subr.mxu0 0.0
    %2222 = vmatpush2.msra.mxu0 0.0
    %2223 = vmatprep.subr.mxu0 0.0
    %2224 = vmatpush2.msra.mxu0 0.0
    %2225 = vmatprep.subr.mxu0 0.0
    %2226 = vmatpush2.msra.mxu0 0.0
    %2227 = vmatprep.subr.mxu0 0.0
    %2228 = vmatpush2.msra.mxu0 0.0
    %2229 = vmatprep.subr.mxu0 0.0
    %2230 = vmatpush2.msra.mxu0 0.0
    %2231 = vmatprep.subr.mxu0 0.0
    %2232 = vmatpush2.msra.mxu0 0.0
    %2233 = vmatprep.subr.mxu0 0.0
    %2234 = vmatpush2.msra.mxu0 0.0
    %2235 = vmatprep.subr.mxu0 0.0
    %2236 = vmatpush2.msra.mxu0 0.0
    %2237 = vmatprep.subr.mxu0 0.0
    %2238 = vmatpush2.msra.mxu0 0.0
    %2239 = vmatprep.subr.mxu0 0.0
    %2240 = vmatpush2.msra.mxu0 0.0
    %2241 = vmatprep.subr.mxu0 0.0
    %2242 = vmatpush2.msra.mxu0 0.0
    %2243 = vmatprep.mubr.f32.mxu0 0.0
    %2244 = vmatmul.mubr.f32.gmra.mxu0 %v2159
    %v2245 = vpop.f32.mrf.mxu0
    %v2246 = vadd.f32 0.0, %v2245
    %v2247 = vpop.f32.mrf.mxu0
    %2248 = vdwg.mxu0
    %v2249 = vadd.f32 %v49, %v2246
    %s2250 = scalar_lea.vmem %s5, 128
    %v2251 = vld [vmem:[%s2250] sm:$0xff]
    %v2252 = vld [vmem:[%s2250 + $0x8] sm:$0xff]
    %v2253 = vld [vmem:[%s2250 + $0x10] sm:$0xff]
    %v2254 = vld [vmem:[%s2250 + $0x18] sm:$0xff]
    %v2255 = vld [vmem:[%s2250 + $0x20] sm:$0xff]
    %v2256 = vld [vmem:[%s2250 + $0x28] sm:$0xff]
    %v2257 = vld [vmem:[%s2250 + $0x30] sm:$0xff]
    %v2258 = vld [vmem:[%s2250 + $0x38] sm:$0xff]
    %v2259 = vld [vmem:[%s2250 + $0x40] sm:$0xff]
    %v2260 = vld [vmem:[%s2250 + $0x48] sm:$0xff]
    %v2261 = vld [vmem:[%s2250 + $0x50] sm:$0xff]
    %v2262 = vld [vmem:[%s2250 + $0x58] sm:$0xff]
    %v2263 = vld [vmem:[%s2250 + $0x60] sm:$0xff]
    %v2264 = vld [vmem:[%s2250 + $0x68] sm:$0xff]
    %v2265 = vld [vmem:[%s2250 + $0x70] sm:$0xff]
    %v2266 = vld [vmem:[%s2250 + $0x78] sm:$0xff]
    %2267 = vmatprep.subr.mxu0 0.0
    %2268 = vmatpush1.msra.mxu0 %v2266
    %2269 = vmatprep.subr.mxu0 0.0
    %2270 = vmatpush1.msra.mxu0 %v2265
    %2271 = vmatprep.subr.mxu0 0.0
    %2272 = vmatpush1.msra.mxu0 %v2264
    %2273 = vmatprep.subr.mxu0 0.0
    %2274 = vmatpush1.msra.mxu0 %v2263
    %2275 = vmatprep.subr.mxu0 0.0
    %2276 = vmatpush1.msra.mxu0 %v2262
    %2277 = vmatprep.subr.mxu0 0.0
    %2278 = vmatpush1.msra.mxu0 %v2261
    %2279 = vmatprep.subr.mxu0 0.0
    %2280 = vmatpush1.msra.mxu0 %v2260
    %2281 = vmatprep.subr.mxu0 0.0
    %2282 = vmatpush1.msra.mxu0 %v2259
    %2283 = vmatprep.subr.mxu0 0.0
    %2284 = vmatpush1.msra.mxu0 %v2258
    %2285 = vmatprep.subr.mxu0 0.0
    %2286 = vmatpush1.msra.mxu0 %v2257
    %2287 = vmatprep.subr.mxu0 0.0
    %2288 = vmatpush1.msra.mxu0 %v2256
    %2289 = vmatprep.subr.mxu0 0.0
    %2290 = vmatpush1.msra.mxu0 %v2255
    %2291 = vmatprep.subr.mxu0 0.0
    %2292 = vmatpush1.msra.mxu0 %v2254
    %2293 = vmatprep.subr.mxu0 0.0
    %2294 = vmatpush1.msra.mxu0 %v2253
    %2295 = vmatprep.subr.mxu0 0.0
    %2296 = vmatpush1.msra.mxu0 %v2252
    %2297 = vmatprep.subr.mxu0 0.0
    %2298 = vmatpush1.msra.mxu0 %v2251
    %2299 = vmatprep.subr.mxu0 0.0
    %2300 = vmatpush2.msra.mxu0 0.0
    %2301 = vmatprep.subr.mxu0 0.0
    %2302 = vmatpush2.msra.mxu0 0.0
    %2303 = vmatprep.subr.mxu0 0.0
    %2304 = vmatpush2.msra.mxu0 0.0
    %2305 = vmatprep.subr.mxu0 0.0
    %2306 = vmatpush2.msra.mxu0 0.0
    %2307 = vmatprep.subr.mxu0 0.0
    %2308 = vmatpush2.msra.mxu0 0.0
    %2309 = vmatprep.subr.mxu0 0.0
    %2310 = vmatpush2.msra.mxu0 0.0
    %2311 = vmatprep.subr.mxu0 0.0
    %2312 = vmatpush2.msra.mxu0 0.0
    %2313 = vmatprep.subr.mxu0 0.0
    %2314 = vmatpush2.msra.mxu0 0.0
    %2315 = vmatprep.subr.mxu0 0.0
    %2316 = vmatpush2.msra.mxu0 0.0
    %2317 = vmatprep.subr.mxu0 0.0
    %2318 = vmatpush2.msra.mxu0 0.0
    %2319 = vmatprep.subr.mxu0 0.0
    %2320 = vmatpush2.msra.mxu0 0.0
    %2321 = vmatprep.subr.mxu0 0.0
    %2322 = vmatpush2.msra.mxu0 0.0
    %2323 = vmatprep.subr.mxu0 0.0
    %2324 = vmatpush2.msra.mxu0 0.0
    %2325 = vmatprep.subr.mxu0 0.0
    %2326 = vmatpush2.msra.mxu0 0.0
    %2327 = vmatprep.subr.mxu0 0.0
    %2328 = vmatpush2.msra.mxu0 0.0
    %2329 = vmatprep.subr.mxu0 0.0
    %2330 = vmatpush2.msra.mxu0 0.0
    %2331 = vmatprep.mubr.f32.mxu0 0.0
    %2332 = vmatmul.mubr.f32.gmra.mxu0 %v2160
    %v2333 = vpop.f32.mrf.mxu0
    %v2334 = vadd.f32 0.0, %v2333
    %v2335 = vpop.f32.mrf.mxu0
    %2336 = vdwg.mxu0
    %v2337 = vadd.f32 %v2249, %v2334
    %s2338 = scalar_lea.vmem %s5, 256
    %v2339 = vld [vmem:[%s2338] sm:$0xff]
    %v2340 = vld [vmem:[%s2338 + $0x8] sm:$0xff]
    %v2341 = vld [vmem:[%s2338 + $0x10] sm:$0xff]
    %v2342 = vld [vmem:[%s2338 + $0x18] sm:$0xff]
    %v2343 = vld [vmem:[%s2338 + $0x20] sm:$0xff]
    %v2344 = vld [vmem:[%s2338 + $0x28] sm:$0xff]
    %v2345 = vld [vmem:[%s2338 + $0x30] sm:$0xff]
    %v2346 = vld [vmem:[%s2338 + $0x38] sm:$0xff]
    %v2347 = vld [vmem:[%s2338 + $0x40] sm:$0xff]
    %v2348 = vld [vmem:[%s2338 + $0x48] sm:$0xff]
    %v2349 = vld [vmem:[%s2338 + $0x50] sm:$0xff]
    %v2350 = vld [vmem:[%s2338 + $0x58] sm:$0xff]
    %v2351 = vld [vmem:[%s2338 + $0x60] sm:$0xff]
    %v2352 = vld [vmem:[%s2338 + $0x68] sm:$0xff]
    %v2353 = vld [vmem:[%s2338 + $0x70] sm:$0xff]
    %v2354 = vld [vmem:[%s2338 + $0x78] sm:$0xff]
    %2355 = vmatprep.subr.mxu0 0.0
    %2356 = vmatpush1.msra.mxu0 %v2354
    %2357 = vmatprep.subr.mxu0 0.0
    %2358 = vmatpush1.msra.mxu0 %v2353
    %2359 = vmatprep.subr.mxu0 0.0
    %2360 = vmatpush1.msra.mxu0 %v2352
    %2361 = vmatprep.subr.mxu0 0.0
    %2362 = vmatpush1.msra.mxu0 %v2351
    %2363 = vmatprep.subr.mxu0 0.0
    %2364 = vmatpush1.msra.mxu0 %v2350
    %2365 = vmatprep.subr.mxu0 0.0
    %2366 = vmatpush1.msra.mxu0 %v2349
    %2367 = vmatprep.subr.mxu0 0.0
    %2368 = vmatpush1.msra.mxu0 %v2348
    %2369 = vmatprep.subr.mxu0 0.0
    %2370 = vmatpush1.msra.mxu0 %v2347
    %2371 = vmatprep.subr.mxu0 0.0
    %2372 = vmatpush1.msra.mxu0 %v2346
    %2373 = vmatprep.subr.mxu0 0.0
    %2374 = vmatpush1.msra.mxu0 %v2345
    %2375 = vmatprep.subr.mxu0 0.0
    %2376 = vmatpush1.msra.mxu0 %v2344
    %2377 = vmatprep.subr.mxu0 0.0
    %2378 = vmatpush1.msra.mxu0 %v2343
    %2379 = vmatprep.subr.mxu0 0.0
    %2380 = vmatpush1.msra.mxu0 %v2342
    %2381 = vmatprep.subr.mxu0 0.0
    %2382 = vmatpush1.msra.mxu0 %v2341
    %2383 = vmatprep.subr.mxu0 0.0
    %2384 = vmatpush1.msra.mxu0 %v2340
    %2385 = vmatprep.subr.mxu0 0.0
    %2386 = vmatpush1.msra.mxu0 %v2339
    %2387 = vmatprep.subr.mxu0 0.0
    %2388 = vmatpush2.msra.mxu0 0.0
    %2389 = vmatprep.subr.mxu0 0.0
    %2390 = vmatpush2.msra.mxu0 0.0
    %2391 = vmatprep.subr.mxu0 0.0
    %2392 = vmatpush2.msra.mxu0 0.0
    %2393 = vmatprep.subr.mxu0 0.0
    %2394 = vmatpush2.msra.mxu0 0.0
    %2395 = vmatprep.subr.mxu0 0.0
    %2396 = vmatpush2.msra.mxu0 0.0
    %2397 = vmatprep.subr.mxu0 0.0
    %2398 = vmatpush2.msra.mxu0 0.0
    %2399 = vmatprep.subr.mxu0 0.0
    %2400 = vmatpush2.msra.mxu0 0.0
    %2401 = vmatprep.subr.mxu0 0.0
    %2402 = vmatpush2.msra.mxu0 0.0
    %2403 = vmatprep.subr.mxu0 0.0
    %2404 = vmatpush2.msra.mxu0 0.0
    %2405 = vmatprep.subr.mxu0 0.0
    %2406 = vmatpush2.msra.mxu0 0.0
    %2407 = vmatprep.subr.mxu0 0.0
    %2408 = vmatpush2.msra.mxu0 0.0
    %2409 = vmatprep.subr.mxu0 0.0
    %2410 = vmatpush2.msra.mxu0 0.0
    %2411 = vmatprep.subr.mxu0 0.0
    %2412 = vmatpush2.msra.mxu0 0.0
    %2413 = vmatprep.subr.mxu0 0.0
    %2414 = vmatpush2.msra.mxu0 0.0
    %2415 = vmatprep.subr.mxu0 0.0
    %2416 = vmatpush2.msra.mxu0 0.0
    %2417 = vmatprep.subr.mxu0 0.0
    %2418 = vmatpush2.msra.mxu0 0.0
    %2419 = vmatprep.mubr.f32.mxu0 0.0
    %2420 = vmatmul.mubr.f32.gmra.mxu0 %v2161
    %v2421 = vpop.f32.mrf.mxu0
    %v2422 = vadd.f32 0.0, %v2421
    %v2423 = vpop.f32.mrf.mxu0
    %2424 = vdwg.mxu0
    %v2425 = vadd.f32 %v2337, %v2422
    %s2426 = scalar_lea.vmem %s5, 384
    %v2427 = vld [vmem:[%s2426] sm:$0xff]
    %v2428 = vld [vmem:[%s2426 + $0x8] sm:$0xff]
    %v2429 = vld [vmem:[%s2426 + $0x10] sm:$0xff]
    %v2430 = vld [vmem:[%s2426 + $0x18] sm:$0xff]
    %v2431 = vld [vmem:[%s2426 + $0x20] sm:$0xff]
    %v2432 = vld [vmem:[%s2426 + $0x28] sm:$0xff]
    %v2433 = vld [vmem:[%s2426 + $0x30] sm:$0xff]
    %v2434 = vld [vmem:[%s2426 + $0x38] sm:$0xff]
    %v2435 = vld [vmem:[%s2426 + $0x40] sm:$0xff]
    %v2436 = vld [vmem:[%s2426 + $0x48] sm:$0xff]
    %v2437 = vld [vmem:[%s2426 + $0x50] sm:$0xff]
    %v2438 = vld [vmem:[%s2426 + $0x58] sm:$0xff]
    %v2439 = vld [vmem:[%s2426 + $0x60] sm:$0xff]
    %v2440 = vld [vmem:[%s2426 + $0x68] sm:$0xff]
    %v2441 = vld [vmem:[%s2426 + $0x70] sm:$0xff]
    %v2442 = vld [vmem:[%s2426 + $0x78] sm:$0xff]
    %2443 = vmatprep.subr.mxu0 0.0
    %2444 = vmatpush1.msra.mxu0 %v2442
    %2445 = vmatprep.subr.mxu0 0.0
    %2446 = vmatpush1.msra.mxu0 %v2441
    %2447 = vmatprep.subr.mxu0 0.0
    %2448 = vmatpush1.msra.mxu0 %v2440
    %2449 = vmatprep.subr.mxu0 0.0
    %2450 = vmatpush1.msra.mxu0 %v2439
    %2451 = vmatprep.subr.mxu0 0.0
    %2452 = vmatpush1.msra.mxu0 %v2438
    %2453 = vmatprep.subr.mxu0 0.0
    %2454 = vmatpush1.msra.mxu0 %v2437
    %2455 = vmatprep.subr.mxu0 0.0
    %2456 = vmatpush1.msra.mxu0 %v2436
    %2457 = vmatprep.subr.mxu0 0.0
    %2458 = vmatpush1.msra.mxu0 %v2435
    %2459 = vmatprep.subr.mxu0 0.0
    %2460 = vmatpush1.msra.mxu0 %v2434
    %2461 = vmatprep.subr.mxu0 0.0
    %2462 = vmatpush1.msra.mxu0 %v2433
    %2463 = vmatprep.subr.mxu0 0.0
    %2464 = vmatpush1.msra.mxu0 %v2432
    %2465 = vmatprep.subr.mxu0 0.0
    %2466 = vmatpush1.msra.mxu0 %v2431
    %2467 = vmatprep.subr.mxu0 0.0
    %2468 = vmatpush1.msra.mxu0 %v2430
    %2469 = vmatprep.subr.mxu0 0.0
    %2470 = vmatpush1.msra.mxu0 %v2429
    %2471 = vmatprep.subr.mxu0 0.0
    %2472 = vmatpush1.msra.mxu0 %v2428
    %2473 = vmatprep.subr.mxu0 0.0
    %2474 = vmatpush1.msra.mxu0 %v2427
    %2475 = vmatprep.subr.mxu0 0.0
    %2476 = vmatpush2.msra.mxu0 0.0
    %2477 = vmatprep.subr.mxu0 0.0
    %2478 = vmatpush2.msra.mxu0 0.0
    %2479 = vmatprep.subr.mxu0 0.0
    %2480 = vmatpush2.msra.mxu0 0.0
    %2481 = vmatprep.subr.mxu0 0.0
    %2482 = vmatpush2.msra.mxu0 0.0
    %2483 = vmatprep.subr.mxu0 0.0
    %2484 = vmatpush2.msra.mxu0 0.0
    %2485 = vmatprep.subr.mxu0 0.0
    %2486 = vmatpush2.msra.mxu0 0.0
    %2487 = vmatprep.subr.mxu0 0.0
    %2488 = vmatpush2.msra.mxu0 0.0
    %2489 = vmatprep.subr.mxu0 0.0
    %2490 = vmatpush2.msra.mxu0 0.0
    %2491 = vmatprep.subr.mxu0 0.0
    %2492 = vmatpush2.msra.mxu0 0.0
    %2493 = vmatprep.subr.mxu0 0.0
    %2494 = vmatpush2.msra.mxu0 0.0
    %2495 = vmatprep.subr.mxu0 0.0
    %2496 = vmatpush2.msra.mxu0 0.0
    %2497 = vmatprep.subr.mxu0 0.0
    %2498 = vmatpush2.msra.mxu0 0.0
    %2499 = vmatprep.subr.mxu0 0.0
    %2500 = vmatpush2.msra.mxu0 0.0
    %2501 = vmatprep.subr.mxu0 0.0
    %2502 = vmatpush2.msra.mxu0 0.0
    %2503 = vmatprep.subr.mxu0 0.0
    %2504 = vmatpush2.msra.mxu0 0.0
    %2505 = vmatprep.subr.mxu0 0.0
    %2506 = vmatpush2.msra.mxu0 0.0
    %2507 = vmatprep.mubr.f32.mxu0 0.0
    %2508 = vmatmul.mubr.f32.gmra.mxu0 %v2162
    %v2509 = vpop.f32.mrf.mxu0
    %v2510 = vadd.f32 0.0, %v2509
    %v2511 = vpop.f32.mrf.mxu0
    %2512 = vdwg.mxu0
    %v2513 = vadd.f32 %v2425, %v2510
    %vm2514 = vcmask 523264
    %v2516 = vsel %vm2514, %v2513, 0
    %2518 = vmatprep.subr.mxu0 0.0
    %2519 = vmatpush1.msra.mxu0 0.0
    %2520 = vmatprep.subr.mxu0 0.0
    %2521 = vmatpush1.msra.mxu0 0.0
    %2522 = vmatprep.subr.mxu0 0.0
    %2523 = vmatpush1.msra.mxu0 0.0
    %2524 = vmatprep.subr.mxu0 0.0
    %2525 = vmatpush1.msra.mxu0 0.0
    %2526 = vmatprep.subr.mxu0 0.0
    %2527 = vmatpush1.msra.mxu0 0.0
    %2528 = vmatprep.subr.mxu0 0.0
    %2529 = vmatpush1.msra.mxu0 0.0
    %2530 = vmatprep.subr.mxu0 0.0
    %2531 = vmatpush1.msra.mxu0 0.0
    %2532 = vmatprep.subr.mxu0 0.0
    %2533 = vmatpush1.msra.mxu0 0.0
    %2534 = vmatprep.subr.mxu0 0.0
    %2535 = vmatpush1.msra.mxu0 %v58
    %2536 = vmatprep.subr.mxu0 0.0
    %2537 = vmatpush1.msra.mxu0 %v57
    %2538 = vmatprep.subr.mxu0 0.0
    %2539 = vmatpush1.msra.mxu0 %v56
    %2540 = vmatprep.subr.mxu0 0.0
    %2541 = vmatpush1.msra.mxu0 %v55
    %2542 = vmatprep.subr.mxu0 0.0
    %2543 = vmatpush1.msra.mxu0 %v54
    %2544 = vmatprep.subr.mxu0 0.0
    %2545 = vmatpush1.msra.mxu0 %v53
    %2546 = vmatprep.subr.mxu0 0.0
    %2547 = vmatpush1.msra.mxu0 %v52
    %2548 = vmatprep.subr.mxu0 0.0
    %2549 = vmatpush1.msra.mxu0 %v51
    %2550 = vmatprep.subr.mxu0 0.0
    %2551 = vmatpush2.msra.mxu0 0.0
    %2552 = vmatprep.subr.mxu0 0.0
    %2553 = vmatpush2.msra.mxu0 0.0
    %2554 = vmatprep.subr.mxu0 0.0
    %2555 = vmatpush2.msra.mxu0 0.0
    %2556 = vmatprep.subr.mxu0 0.0
    %2557 = vmatpush2.msra.mxu0 0.0
    %2558 = vmatprep.subr.mxu0 0.0
    %2559 = vmatpush2.msra.mxu0 0.0
    %2560 = vmatprep.subr.mxu0 0.0
    %2561 = vmatpush2.msra.mxu0 0.0
    %2562 = vmatprep.subr.mxu0 0.0
    %2563 = vmatpush2.msra.mxu0 0.0
    %2564 = vmatprep.subr.mxu0 0.0
    %2565 = vmatpush2.msra.mxu0 0.0
    %2566 = vmatprep.subr.mxu0 0.0
    %2567 = vmatpush2.msra.mxu0 0.0
    %2568 = vmatprep.subr.mxu0 0.0
    %2569 = vmatpush2.msra.mxu0 0.0
    %2570 = vmatprep.subr.mxu0 0.0
    %2571 = vmatpush2.msra.mxu0 0.0
    %2572 = vmatprep.subr.mxu0 0.0
    %2573 = vmatpush2.msra.mxu0 0.0
    %2574 = vmatprep.subr.mxu0 0.0
    %2575 = vmatpush2.msra.mxu0 0.0
    %2576 = vmatprep.subr.mxu0 0.0
    %2577 = vmatpush2.msra.mxu0 0.0
    %2578 = vmatprep.subr.mxu0 0.0
    %2579 = vmatpush2.msra.mxu0 0.0
    %2580 = vmatprep.subr.mxu0 0.0
    %2581 = vmatpush2.msra.mxu0 0.0
    %2582 = vmatprep.mubr.f32.mxu0 0.0
    %2583 = vmatmul.mubr.f32.gmra.mxu0 %v2516
    %v2584 = vpop.f32.mrf.mxu0
    %v2585 = vadd.f32 %v50, %v2584
    %v2586 = vpop.f32.mrf.mxu0
    %2587 = vdwg.mxu0
    %2588 = vst [vmem:[#allocation5] sm:$0x1] %v2585
    %s2589 = scalar_lea.vmem %s0, 32
    %v2590 = vld [vmem:[%s2589] sm:$0xff]
    %v2591 = vld [vmem:[%s2589 + $0x8] sm:$0xff]
    %v2592 = vld [vmem:[%s2589 + $0x10] sm:$0xff]
    %v2593 = vld [vmem:[%s2589 + $0x18] sm:$0xf]
    %v2594 = vld [vmem:[%s1] sm:$0xff]
    %v2595 = vld [vmem:[%s1 + $0x8] sm:$0xff]
    %v2596 = vld [vmem:[%s1 + $0x10] sm:$0xff]
    %v2597 = vld [vmem:[%s1 + $0x18] sm:$0xff]
    %v2598 = vld [vmem:[%s67] sm:$0xff]
    %v2599 = vld [vmem:[%s67 + $0x8] sm:$0xff]
    %v2600 = vld [vmem:[%s67 + $0x10] sm:$0xff]
    %v2601 = vld [vmem:[%s67 + $0x18] sm:$0xff]
    %v2602 = vld [vmem:[%s72] sm:$0xff]
    %v2603 = vld [vmem:[%s72 + $0x8] sm:$0xff]
    %v2604 = vld [vmem:[%s72 + $0x10] sm:$0xff]
    %v2605 = vld [vmem:[%s72 + $0x18] sm:$0xff]
    %v2610 = vrot.slane %v2590, 1
    %v2611 = vrot.slane %v2591, 1
    %v2612 = vsel %vm81, %v2610, %v2611
    %v2613 = vrot.slane %v2592, 1
    %v2614 = vsel %vm81, %v2611, %v2613
    %v2615 = vrot.slane %v2593, 1
    %v2616 = vsel %vm81, %v2613, %v2615
    %v2617 = vsel %vm89, %v2612, 0
    %v2619 = vsel %vm89, %v2614, 0
    %v2621 = vsel %vm89, %v2616, 0
    %2623 = vmatprep.subr.mxu0 0.0
    %2624 = vmatpush1.msra.mxu0 0.0
    %2625 = vmatprep.subr.mxu0 0.0
    %2626 = vmatpush1.msra.mxu0 0.0
    %2627 = vmatprep.subr.mxu0 0.0
    %2628 = vmatpush1.msra.mxu0 0.0
    %2629 = vmatprep.subr.mxu0 0.0
    %2630 = vmatpush1.msra.mxu0 0.0
    %2631 = vmatprep.subr.mxu0 0.0
    %2632 = vmatpush1.msra.mxu0 0.0
    %2633 = vmatprep.subr.mxu0 0.0
    %2634 = vmatpush1.msra.mxu0 0.0
    %2635 = vmatprep.subr.mxu0 0.0
    %2636 = vmatpush1.msra.mxu0 0.0
    %2637 = vmatprep.subr.mxu0 0.0
    %2638 = vmatpush1.msra.mxu0 0.0
    %2639 = vmatprep.subr.mxu0 0.0
    %2640 = vmatpush1.msra.mxu0 0.0
    %2641 = vmatprep.subr.mxu0 0.0
    %2642 = vmatpush1.msra.mxu0 0.0
    %2643 = vmatprep.subr.mxu0 0.0
    %2644 = vmatpush1.msra.mxu0 0.0
    %2645 = vmatprep.subr.mxu0 0.0
    %2646 = vmatpush1.msra.mxu0 0.0
    %2647 = vmatprep.subr.mxu0 0.0
    %2648 = vmatpush1.msra.mxu0 %v2605
    %2649 = vmatprep.subr.mxu0 0.0
    %2650 = vmatpush1.msra.mxu0 %v2604
    %2651 = vmatprep.subr.mxu0 0.0
    %2652 = vmatpush1.msra.mxu0 %v2603
    %2653 = vmatprep.subr.mxu0 0.0
    %2654 = vmatpush1.msra.mxu0 %v2602
    %2655 = vmatprep.subr.mxu0 0.0
    %2656 = vmatpush2.msra.mxu0 0.0
    %2657 = vmatprep.subr.mxu0 0.0
    %2658 = vmatpush2.msra.mxu0 0.0
    %2659 = vmatprep.subr.mxu0 0.0
    %2660 = vmatpush2.msra.mxu0 0.0
    %2661 = vmatprep.subr.mxu0 0.0
    %2662 = vmatpush2.msra.mxu0 0.0
    %2663 = vmatprep.subr.mxu0 0.0
    %2664 = vmatpush2.msra.mxu0 0.0
    %2665 = vmatprep.subr.mxu0 0.0
    %2666 = vmatpush2.msra.mxu0 0.0
    %2667 = vmatprep.subr.mxu0 0.0
    %2668 = vmatpush2.msra.mxu0 0.0
    %2669 = vmatprep.subr.mxu0 0.0
    %2670 = vmatpush2.msra.mxu0 0.0
    %2671 = vmatprep.subr.mxu0 0.0
    %2672 = vmatpush2.msra.mxu0 0.0
    %2673 = vmatprep.subr.mxu0 0.0
    %2674 = vmatpush2.msra.mxu0 0.0
    %2675 = vmatprep.subr.mxu0 0.0
    %2676 = vmatpush2.msra.mxu0 0.0
    %2677 = vmatprep.subr.mxu0 0.0
    %2678 = vmatpush2.msra.mxu0 0.0
    %2679 = vmatprep.subr.mxu0 0.0
    %2680 = vmatpush2.msra.mxu0 0.0
    %2681 = vmatprep.subr.mxu0 0.0
    %2682 = vmatpush2.msra.mxu0 0.0
    %2683 = vmatprep.subr.mxu0 0.0
    %2684 = vmatpush2.msra.mxu0 0.0
    %2685 = vmatprep.subr.mxu0 0.0
    %2686 = vmatpush2.msra.mxu0 0.0
    %2687 = vmatprep.mubr.f32.mxu0 0.0
    %2688 = vmatmul.mubr.f32.gmra.mxu0 %v2617
    %v2689 = vpop.f32.mrf.mxu0
    %v2690 = vadd.f32 0.0, %v2689
    %v2691 = vpop.f32.mrf.mxu0
    %2692 = vmatprep.mubr.f32.mxu0 0.0
    %2693 = vmatmul.mubr.f32.gmra.mxu0 %v2619
    %v2694 = vpop.f32.mrf.mxu0
    %v2695 = vadd.f32 0.0, %v2694
    %v2696 = vpop.f32.mrf.mxu0
    %2697 = vmatprep.mubr.f32.mxu0 0.0
    %2698 = vmatmul.mubr.f32.gmra.mxu0 %v2621
    %v2699 = vpop.f32.mrf.mxu0
    %v2700 = vadd.f32 0.0, %v2699
    %v2701 = vpop.f32.mrf.mxu0
    %2702 = vdwg.mxu0
    %v2703 = vld [vmem:[%s176] sm:$0xff]
    %v2704 = vld [vmem:[%s176 + $0x8] sm:$0xff]
    %v2705 = vld [vmem:[%s176 + $0x10] sm:$0xff]
    %v2706 = vld [vmem:[%s176 + $0x18] sm:$0xff]
    %2707 = vmatprep.subr.mxu0 0.0
    %2708 = vmatpush1.msra.mxu0 0.0
    %2709 = vmatprep.subr.mxu0 0.0
    %2710 = vmatpush1.msra.mxu0 0.0
    %2711 = vmatprep.subr.mxu0 0.0
    %2712 = vmatpush1.msra.mxu0 0.0
    %2713 = vmatprep.subr.mxu0 0.0
    %2714 = vmatpush1.msra.mxu0 0.0
    %2715 = vmatprep.subr.mxu0 0.0
    %2716 = vmatpush1.msra.mxu0 0.0
    %2717 = vmatprep.subr.mxu0 0.0
    %2718 = vmatpush1.msra.mxu0 0.0
    %2719 = vmatprep.subr.mxu0 0.0
    %2720 = vmatpush1.msra.mxu0 0.0
    %2721 = vmatprep.subr.mxu0 0.0
    %2722 = vmatpush1.msra.mxu0 0.0
    %2723 = vmatprep.subr.mxu0 0.0
    %2724 = vmatpush1.msra.mxu0 0.0
    %2725 = vmatprep.subr.mxu0 0.0
    %2726 = vmatpush1.msra.mxu0 0.0
    %2727 = vmatprep.subr.mxu0 0.0
    %2728 = vmatpush1.msra.mxu0 0.0
    %2729 = vmatprep.subr.mxu0 0.0
    %2730 = vmatpush1.msra.mxu0 0.0
    %2731 = vmatprep.subr.mxu0 0.0
    %2732 = vmatpush1.msra.mxu0 %v2706
    %2733 = vmatprep.subr.mxu0 0.0
    %2734 = vmatpush1.msra.mxu0 %v2705
    %2735 = vmatprep.subr.mxu0 0.0
    %2736 = vmatpush1.msra.mxu0 %v2704
    %2737 = vmatprep.subr.mxu0 0.0
    %2738 = vmatpush1.msra.mxu0 %v2703
    %2739 = vmatprep.subr.mxu0 0.0
    %2740 = vmatpush2.msra.mxu0 0.0
    %2741 = vmatprep.subr.mxu0 0.0
    %2742 = vmatpush2.msra.mxu0 0.0
    %2743 = vmatprep.subr.mxu0 0.0
    %2744 = vmatpush2.msra.mxu0 0.0
    %2745 = vmatprep.subr.mxu0 0.0
    %2746 = vmatpush2.msra.mxu0 0.0
    %2747 = vmatprep.subr.mxu0 0.0
    %2748 = vmatpush2.msra.mxu0 0.0
    %2749 = vmatprep.subr.mxu0 0.0
    %2750 = vmatpush2.msra.mxu0 0.0
    %2751 = vmatprep.subr.mxu0 0.0
    %2752 = vmatpush2.msra.mxu0 0.0
    %2753 = vmatprep.subr.mxu0 0.0
    %2754 = vmatpush2.msra.mxu0 0.0
    %2755 = vmatprep.subr.mxu0 0.0
    %2756 = vmatpush2.msra.mxu0 0.0
    %2757 = vmatprep.subr.mxu0 0.0
    %2758 = vmatpush2.msra.mxu0 0.0
    %2759 = vmatprep.subr.mxu0 0.0
    %2760 = vmatpush2.msra.mxu0 0.0
    %2761 = vmatprep.subr.mxu0 0.0
    %2762 = vmatpush2.msra.mxu0 0.0
    %2763 = vmatprep.subr.mxu0 0.0
    %2764 = vmatpush2.msra.mxu0 0.0
    %2765 = vmatprep.subr.mxu0 0.0
    %2766 = vmatpush2.msra.mxu0 0.0
    %2767 = vmatprep.subr.mxu0 0.0
    %2768 = vmatpush2.msra.mxu0 0.0
    %2769 = vmatprep.subr.mxu0 0.0
    %2770 = vmatpush2.msra.mxu0 0.0
    %2771 = vmatprep.mubr.f32.mxu0 0.0
    %2772 = vmatmul.mubr.f32.gmra.mxu0 %v2617
    %v2773 = vpop.f32.mrf.mxu0
    %v2774 = vadd.f32 0.0, %v2773
    %v2775 = vpop.f32.mrf.mxu0
    %2776 = vmatprep.mubr.f32.mxu0 0.0
    %2777 = vmatmul.mubr.f32.gmra.mxu0 %v2619
    %v2778 = vpop.f32.mrf.mxu0
    %v2779 = vadd.f32 0.0, %v2778
    %v2780 = vpop.f32.mrf.mxu0
    %2781 = vmatprep.mubr.f32.mxu0 0.0
    %2782 = vmatmul.mubr.f32.gmra.mxu0 %v2621
    %v2783 = vpop.f32.mrf.mxu0
    %v2784 = vadd.f32 0.0, %v2783
    %v2785 = vpop.f32.mrf.mxu0
    %2786 = vdwg.mxu0
    %v2787 = vsel %vm89, %v2590, 0
    %v2789 = vsel %vm89, %v2591, 0
    %v2791 = vsel %vm89, %v2592, 0
    %2793 = vmatprep.subr.mxu0 0.0
    %2794 = vmatpush1.msra.mxu0 0.0
    %2795 = vmatprep.subr.mxu0 0.0
    %2796 = vmatpush1.msra.mxu0 0.0
    %2797 = vmatprep.subr.mxu0 0.0
    %2798 = vmatpush1.msra.mxu0 0.0
    %2799 = vmatprep.subr.mxu0 0.0
    %2800 = vmatpush1.msra.mxu0 0.0
    %2801 = vmatprep.subr.mxu0 0.0
    %2802 = vmatpush1.msra.mxu0 0.0
    %2803 = vmatprep.subr.mxu0 0.0
    %2804 = vmatpush1.msra.mxu0 0.0
    %2805 = vmatprep.subr.mxu0 0.0
    %2806 = vmatpush1.msra.mxu0 0.0
    %2807 = vmatprep.subr.mxu0 0.0
    %2808 = vmatpush1.msra.mxu0 0.0
    %2809 = vmatprep.subr.mxu0 0.0
    %2810 = vmatpush1.msra.mxu0 0.0
    %2811 = vmatprep.subr.mxu0 0.0
    %2812 = vmatpush1.msra.mxu0 0.0
    %2813 = vmatprep.subr.mxu0 0.0
    %2814 = vmatpush1.msra.mxu0 0.0
    %2815 = vmatprep.subr.mxu0 0.0
    %2816 = vmatpush1.msra.mxu0 0.0
    %2817 = vmatprep.subr.mxu0 0.0
    %2818 = vmatpush1.msra.mxu0 %v2597
    %2819 = vmatprep.subr.mxu0 0.0
    %2820 = vmatpush1.msra.mxu0 %v2596
    %2821 = vmatprep.subr.mxu0 0.0
    %2822 = vmatpush1.msra.mxu0 %v2595
    %2823 = vmatprep.subr.mxu0 0.0
    %2824 = vmatpush1.msra.mxu0 %v2594
    %2825 = vmatprep.subr.mxu0 0.0
    %2826 = vmatpush2.msra.mxu0 0.0
    %2827 = vmatprep.subr.mxu0 0.0
    %2828 = vmatpush2.msra.mxu0 0.0
    %2829 = vmatprep.subr.mxu0 0.0
    %2830 = vmatpush2.msra.mxu0 0.0
    %2831 = vmatprep.subr.mxu0 0.0
    %2832 = vmatpush2.msra.mxu0 0.0
    %2833 = vmatprep.subr.mxu0 0.0
    %2834 = vmatpush2.msra.mxu0 0.0
    %2835 = vmatprep.subr.mxu0 0.0
    %2836 = vmatpush2.msra.mxu0 0.0
    %2837 = vmatprep.subr.mxu0 0.0
    %2838 = vmatpush2.msra.mxu0 0.0
    %2839 = vmatprep.subr.mxu0 0.0
    %2840 = vmatpush2.msra.mxu0 0.0
    %2841 = vmatprep.subr.mxu0 0.0
    %2842 = vmatpush2.msra.mxu0 0.0
    %2843 = vmatprep.subr.mxu0 0.0
    %2844 = vmatpush2.msra.mxu0 0.0
    %2845 = vmatprep.subr.mxu0 0.0
    %2846 = vmatpush2.msra.mxu0 0.0
    %2847 = vmatprep.subr.mxu0 0.0
    %2848 = vmatpush2.msra.mxu0 0.0
    %2849 = vmatprep.subr.mxu0 0.0
    %2850 = vmatpush2.msra.mxu0 0.0
    %2851 = vmatprep.subr.mxu0 0.0
    %2852 = vmatpush2.msra.mxu0 0.0
    %2853 = vmatprep.subr.mxu0 0.0
    %2854 = vmatpush2.msra.mxu0 0.0
    %2855 = vmatprep.subr.mxu0 0.0
    %2856 = vmatpush2.msra.mxu0 0.0
    %2857 = vmatprep.mubr.f32.mxu0 0.0
    %2858 = vmatmul.mubr.f32.gmra.mxu0 %v2787
    %v2859 = vpop.f32.mrf.mxu0
    %v2860 = vadd.f32 %v2690, %v2859
    %v2861 = vpop.f32.mrf.mxu0
    %2862 = vmatprep.mubr.f32.mxu0 0.0
    %2863 = vmatmul.mubr.f32.gmra.mxu0 %v2789
    %v2864 = vpop.f32.mrf.mxu0
    %v2865 = vadd.f32 %v2695, %v2864
    %v2866 = vpop.f32.mrf.mxu0
    %2867 = vmatprep.mubr.f32.mxu0 0.0
    %2868 = vmatmul.mubr.f32.gmra.mxu0 %v2791
    %v2869 = vpop.f32.mrf.mxu0
    %v2870 = vadd.f32 %v2700, %v2869
    %v2871 = vpop.f32.mrf.mxu0
    %2872 = vdwg.mxu0
    %2873 = vmatprep.subr.mxu0 0.0
    %2874 = vmatpush1.msra.mxu0 0.0
    %2875 = vmatprep.subr.mxu0 0.0
    %2876 = vmatpush1.msra.mxu0 0.0
    %2877 = vmatprep.subr.mxu0 0.0
    %2878 = vmatpush1.msra.mxu0 0.0
    %2879 = vmatprep.subr.mxu0 0.0
    %2880 = vmatpush1.msra.mxu0 0.0
    %2881 = vmatprep.subr.mxu0 0.0
    %2882 = vmatpush1.msra.mxu0 0.0
    %2883 = vmatprep.subr.mxu0 0.0
    %2884 = vmatpush1.msra.mxu0 0.0
    %2885 = vmatprep.subr.mxu0 0.0
    %2886 = vmatpush1.msra.mxu0 0.0
    %2887 = vmatprep.subr.mxu0 0.0
    %2888 = vmatpush1.msra.mxu0 0.0
    %2889 = vmatprep.subr.mxu0 0.0
    %2890 = vmatpush1.msra.mxu0 0.0
    %2891 = vmatprep.subr.mxu0 0.0
    %2892 = vmatpush1.msra.mxu0 0.0
    %2893 = vmatprep.subr.mxu0 0.0
    %2894 = vmatpush1.msra.mxu0 0.0
    %2895 = vmatprep.subr.mxu0 0.0
    %2896 = vmatpush1.msra.mxu0 0.0
    %2897 = vmatprep.subr.mxu0 0.0
    %2898 = vmatpush1.msra.mxu0 %v2601
    %2899 = vmatprep.subr.mxu0 0.0
    %2900 = vmatpush1.msra.mxu0 %v2600
    %2901 = vmatprep.subr.mxu0 0.0
    %2902 = vmatpush1.msra.mxu0 %v2599
    %2903 = vmatprep.subr.mxu0 0.0
    %2904 = vmatpush1.msra.mxu0 %v2598
    %2905 = vmatprep.subr.mxu0 0.0
    %2906 = vmatpush2.msra.mxu0 0.0
    %2907 = vmatprep.subr.mxu0 0.0
    %2908 = vmatpush2.msra.mxu0 0.0
    %2909 = vmatprep.subr.mxu0 0.0
    %2910 = vmatpush2.msra.mxu0 0.0
    %2911 = vmatprep.subr.mxu0 0.0
    %2912 = vmatpush2.msra.mxu0 0.0
    %2913 = vmatprep.subr.mxu0 0.0
    %2914 = vmatpush2.msra.mxu0 0.0
    %2915 = vmatprep.subr.mxu0 0.0
    %2916 = vmatpush2.msra.mxu0 0.0
    %2917 = vmatprep.subr.mxu0 0.0
    %2918 = vmatpush2.msra.mxu0 0.0
    %2919 = vmatprep.subr.mxu0 0.0
    %2920 = vmatpush2.msra.mxu0 0.0
    %2921 = vmatprep.subr.mxu0 0.0
    %2922 = vmatpush2.msra.mxu0 0.0
    %2923 = vmatprep.subr.mxu0 0.0
    %2924 = vmatpush2.msra.mxu0 0.0
    %2925 = vmatprep.subr.mxu0 0.0
    %2926 = vmatpush2.msra.mxu0 0.0
    %2927 = vmatprep.subr.mxu0 0.0
    %2928 = vmatpush2.msra.mxu0 0.0
    %2929 = vmatprep.subr.mxu0 0.0
    %2930 = vmatpush2.msra.mxu0 0.0
    %2931 = vmatprep.subr.mxu0 0.0
    %2932 = vmatpush2.msra.mxu0 0.0
    %2933 = vmatprep.subr.mxu0 0.0
    %2934 = vmatpush2.msra.mxu0 0.0
    %2935 = vmatprep.subr.mxu0 0.0
    %2936 = vmatpush2.msra.mxu0 0.0
    %2937 = vmatprep.mubr.f32.mxu0 0.0
    %2938 = vmatmul.mubr.f32.gmra.mxu0 %v2787
    %v2939 = vpop.f32.mrf.mxu0
    %v2940 = vadd.f32 %v2774, %v2939
    %v2941 = vpop.f32.mrf.mxu0
    %2942 = vmatprep.mubr.f32.mxu0 0.0
    %2943 = vmatmul.mubr.f32.gmra.mxu0 %v2789
    %v2944 = vpop.f32.mrf.mxu0
    %v2945 = vadd.f32 %v2779, %v2944
    %v2946 = vpop.f32.mrf.mxu0
    %2947 = vmatprep.mubr.f32.mxu0 0.0
    %2948 = vmatmul.mubr.f32.gmra.mxu0 %v2791
    %v2949 = vpop.f32.mrf.mxu0
    %v2950 = vadd.f32 %v2784, %v2949
    %v2951 = vpop.f32.mrf.mxu0
    %2952 = vdwg.mxu0
    %v2953 = vld [vmem:[%s427] sm:$0xff]
    %v2954 = vld [vmem:[%s427 + $0x8] sm:$0xff]
    %v2955 = vld [vmem:[%s427 + $0x10] sm:$0xff]
    %v2956 = vld [vmem:[%s427 + $0x18] sm:$0xff]
    %v2957 = vrot.slane %v2590, 2
    %v2958 = vrot.slane %v2591, 2
    %v2959 = vsel %vm432, %v2957, %v2958
    %v2960 = vrot.slane %v2592, 2
    %v2961 = vsel %vm432, %v2958, %v2960
    %v2962 = vrot.slane %v2593, 2
    %v2963 = vsel %vm432, %v2960, %v2962
    %v2964 = vsel %vm89, %v2959, 0
    %v2966 = vsel %vm89, %v2961, 0
    %v2968 = vsel %vm89, %v2963, 0
    %2970 = vmatprep.subr.mxu0 0.0
    %2971 = vmatpush1.msra.mxu0 0.0
    %2972 = vmatprep.subr.mxu0 0.0
    %2973 = vmatpush1.msra.mxu0 0.0
    %2974 = vmatprep.subr.mxu0 0.0
    %2975 = vmatpush1.msra.mxu0 0.0
    %2976 = vmatprep.subr.mxu0 0.0
    %2977 = vmatpush1.msra.mxu0 0.0
    %2978 = vmatprep.subr.mxu0 0.0
    %2979 = vmatpush1.msra.mxu0 0.0
    %2980 = vmatprep.subr.mxu0 0.0
    %2981 = vmatpush1.msra.mxu0 0.0
    %2982 = vmatprep.subr.mxu0 0.0
    %2983 = vmatpush1.msra.mxu0 0.0
    %2984 = vmatprep.subr.mxu0 0.0
    %2985 = vmatpush1.msra.mxu0 0.0
    %2986 = vmatprep.subr.mxu0 0.0
    %2987 = vmatpush1.msra.mxu0 0.0
    %2988 = vmatprep.subr.mxu0 0.0
    %2989 = vmatpush1.msra.mxu0 0.0
    %2990 = vmatprep.subr.mxu0 0.0
    %2991 = vmatpush1.msra.mxu0 0.0
    %2992 = vmatprep.subr.mxu0 0.0
    %2993 = vmatpush1.msra.mxu0 0.0
    %2994 = vmatprep.subr.mxu0 0.0
    %2995 = vmatpush1.msra.mxu0 %v2956
    %2996 = vmatprep.subr.mxu0 0.0
    %2997 = vmatpush1.msra.mxu0 %v2955
    %2998 = vmatprep.subr.mxu0 0.0
    %2999 = vmatpush1.msra.mxu0 %v2954
    %3000 = vmatprep.subr.mxu0 0.0
    %3001 = vmatpush1.msra.mxu0 %v2953
    %3002 = vmatprep.subr.mxu0 0.0
    %3003 = vmatpush2.msra.mxu0 0.0
    %3004 = vmatprep.subr.mxu0 0.0
    %3005 = vmatpush2.msra.mxu0 0.0
    %3006 = vmatprep.subr.mxu0 0.0
    %3007 = vmatpush2.msra.mxu0 0.0
    %3008 = vmatprep.subr.mxu0 0.0
    %3009 = vmatpush2.msra.mxu0 0.0
    %3010 = vmatprep.subr.mxu0 0.0
    %3011 = vmatpush2.msra.mxu0 0.0
    %3012 = vmatprep.subr.mxu0 0.0
    %3013 = vmatpush2.msra.mxu0 0.0
    %3014 = vmatprep.subr.mxu0 0.0
    %3015 = vmatpush2.msra.mxu0 0.0
    %3016 = vmatprep.subr.mxu0 0.0
    %3017 = vmatpush2.msra.mxu0 0.0
    %3018 = vmatprep.subr.mxu0 0.0
    %3019 = vmatpush2.msra.mxu0 0.0
    %3020 = vmatprep.subr.mxu0 0.0
    %3021 = vmatpush2.msra.mxu0 0.0
    %3022 = vmatprep.subr.mxu0 0.0
    %3023 = vmatpush2.msra.mxu0 0.0
    %3024 = vmatprep.subr.mxu0 0.0
    %3025 = vmatpush2.msra.mxu0 0.0
    %3026 = vmatprep.subr.mxu0 0.0
    %3027 = vmatpush2.msra.mxu0 0.0
    %3028 = vmatprep.subr.mxu0 0.0
    %3029 = vmatpush2.msra.mxu0 0.0
    %3030 = vmatprep.subr.mxu0 0.0
    %3031 = vmatpush2.msra.mxu0 0.0
    %3032 = vmatprep.subr.mxu0 0.0
    %3033 = vmatpush2.msra.mxu0 0.0
    %3034 = vmatprep.mubr.f32.mxu0 0.0
    %3035 = vmatmul.mubr.f32.gmra.mxu0 %v2964
    %v3036 = vpop.f32.mrf.mxu0
    %v3037 = vadd.f32 0.0, %v3036
    %v3038 = vpop.f32.mrf.mxu0
    %3039 = vmatprep.mubr.f32.mxu0 0.0
    %3040 = vmatmul.mubr.f32.gmra.mxu0 %v2966
    %v3041 = vpop.f32.mrf.mxu0
    %v3042 = vadd.f32 0.0, %v3041
    %v3043 = vpop.f32.mrf.mxu0
    %3044 = vmatprep.mubr.f32.mxu0 0.0
    %3045 = vmatmul.mubr.f32.gmra.mxu0 %v2968
    %v3046 = vpop.f32.mrf.mxu0
    %v3047 = vadd.f32 0.0, %v3046
    %v3048 = vpop.f32.mrf.mxu0
    %3049 = vdwg.mxu0
    %v3050 = vld [vmem:[%s526] sm:$0xff]
    %v3051 = vld [vmem:[%s526 + $0x8] sm:$0xff]
    %v3052 = vld [vmem:[%s526 + $0x10] sm:$0xff]
    %v3053 = vld [vmem:[%s526 + $0x18] sm:$0xff]
    %3054 = vmatprep.subr.mxu0 0.0
    %3055 = vmatpush1.msra.mxu0 0.0
    %3056 = vmatprep.subr.mxu0 0.0
    %3057 = vmatpush1.msra.mxu0 0.0
    %3058 = vmatprep.subr.mxu0 0.0
    %3059 = vmatpush1.msra.mxu0 0.0
    %3060 = vmatprep.subr.mxu0 0.0
    %3061 = vmatpush1.msra.mxu0 0.0
    %3062 = vmatprep.subr.mxu0 0.0
    %3063 = vmatpush1.msra.mxu0 0.0
    %3064 = vmatprep.subr.mxu0 0.0
    %3065 = vmatpush1.msra.mxu0 0.0
    %3066 = vmatprep.subr.mxu0 0.0
    %3067 = vmatpush1.msra.mxu0 0.0
    %3068 = vmatprep.subr.mxu0 0.0
    %3069 = vmatpush1.msra.mxu0 0.0
    %3070 = vmatprep.subr.mxu0 0.0
    %3071 = vmatpush1.msra.mxu0 0.0
    %3072 = vmatprep.subr.mxu0 0.0
    %3073 = vmatpush1.msra.mxu0 0.0
    %3074 = vmatprep.subr.mxu0 0.0
    %3075 = vmatpush1.msra.mxu0 0.0
    %3076 = vmatprep.subr.mxu0 0.0
    %3077 = vmatpush1.msra.mxu0 0.0
    %3078 = vmatprep.subr.mxu0 0.0
    %3079 = vmatpush1.msra.mxu0 %v3053
    %3080 = vmatprep.subr.mxu0 0.0
    %3081 = vmatpush1.msra.mxu0 %v3052
    %3082 = vmatprep.subr.mxu0 0.0
    %3083 = vmatpush1.msra.mxu0 %v3051
    %3084 = vmatprep.subr.mxu0 0.0
    %3085 = vmatpush1.msra.mxu0 %v3050
    %3086 = vmatprep.subr.mxu0 0.0
    %3087 = vmatpush2.msra.mxu0 0.0
    %3088 = vmatprep.subr.mxu0 0.0
    %3089 = vmatpush2.msra.mxu0 0.0
    %3090 = vmatprep.subr.mxu0 0.0
    %3091 = vmatpush2.msra.mxu0 0.0
    %3092 = vmatprep.subr.mxu0 0.0
    %3093 = vmatpush2.msra.mxu0 0.0
    %3094 = vmatprep.subr.mxu0 0.0
    %3095 = vmatpush2.msra.mxu0 0.0
    %3096 = vmatprep.subr.mxu0 0.0
    %3097 = vmatpush2.msra.mxu0 0.0
    %3098 = vmatprep.subr.mxu0 0.0
    %3099 = vmatpush2.msra.mxu0 0.0
    %3100 = vmatprep.subr.mxu0 0.0
    %3101 = vmatpush2.msra.mxu0 0.0
    %3102 = vmatprep.subr.mxu0 0.0
    %3103 = vmatpush2.msra.mxu0 0.0
    %3104 = vmatprep.subr.mxu0 0.0
    %3105 = vmatpush2.msra.mxu0 0.0
    %3106 = vmatprep.subr.mxu0 0.0
    %3107 = vmatpush2.msra.mxu0 0.0
    %3108 = vmatprep.subr.mxu0 0.0
    %3109 = vmatpush2.msra.mxu0 0.0
    %3110 = vmatprep.subr.mxu0 0.0
    %3111 = vmatpush2.msra.mxu0 0.0
    %3112 = vmatprep.subr.mxu0 0.0
    %3113 = vmatpush2.msra.mxu0 0.0
    %3114 = vmatprep.subr.mxu0 0.0
    %3115 = vmatpush2.msra.mxu0 0.0
    %3116 = vmatprep.subr.mxu0 0.0
    %3117 = vmatpush2.msra.mxu0 0.0
    %3118 = vmatprep.mubr.f32.mxu0 0.0
    %3119 = vmatmul.mubr.f32.gmra.mxu0 %v2964
    %v3120 = vpop.f32.mrf.mxu0
    %v3121 = vadd.f32 0.0, %v3120
    %v3122 = vpop.f32.mrf.mxu0
    %3123 = vmatprep.mubr.f32.mxu0 0.0
    %3124 = vmatmul.mubr.f32.gmra.mxu0 %v2966
    %v3125 = vpop.f32.mrf.mxu0
    %v3126 = vadd.f32 0.0, %v3125
    %v3127 = vpop.f32.mrf.mxu0
    %3128 = vmatprep.mubr.f32.mxu0 0.0
    %3129 = vmatmul.mubr.f32.gmra.mxu0 %v2968
    %v3130 = vpop.f32.mrf.mxu0
    %v3131 = vadd.f32 0.0, %v3130
    %v3132 = vpop.f32.mrf.mxu0
    %3133 = vdwg.mxu0
    %v3134 = vadd.f32 %v2860, %v3037
    %v3135 = vadd.f32 %v2865, %v3042
    %v3136 = vadd.f32 %v2870, %v3047
    %v3137 = vadd.f32 %v2940, %v3121
    %v3138 = vadd.f32 %v2945, %v3126
    %v3139 = vadd.f32 %v2950, %v3131
    %v3140 = vld [vmem:[%s617] sm:$0xff]
    %v3141 = vld [vmem:[%s617 + $0x8] sm:$0xff]
    %v3142 = vld [vmem:[%s617 + $0x10] sm:$0xff]
    %v3143 = vld [vmem:[%s617 + $0x18] sm:$0xff]
    %v3144 = vrot.slane %v2590, 3
    %v3145 = vrot.slane %v2591, 3
    %v3146 = vsel %vm622, %v3144, %v3145
    %v3147 = vrot.slane %v2592, 3
    %v3148 = vsel %vm622, %v3145, %v3147
    %v3149 = vrot.slane %v2593, 3
    %v3150 = vsel %vm622, %v3147, %v3149
    %v3151 = vsel %vm89, %v3146, 0
    %v3153 = vsel %vm89, %v3148, 0
    %v3155 = vsel %vm89, %v3150, 0
    %3157 = vmatprep.subr.mxu0 0.0
    %3158 = vmatpush1.msra.mxu0 0.0
    %3159 = vmatprep.subr.mxu0 0.0
    %3160 = vmatpush1.msra.mxu0 0.0
    %3161 = vmatprep.subr.mxu0 0.0
    %3162 = vmatpush1.msra.mxu0 0.0
    %3163 = vmatprep.subr.mxu0 0.0
    %3164 = vmatpush1.msra.mxu0 0.0
    %3165 = vmatprep.subr.mxu0 0.0
    %3166 = vmatpush1.msra.mxu0 0.0
    %3167 = vmatprep.subr.mxu0 0.0
    %3168 = vmatpush1.msra.mxu0 0.0
    %3169 = vmatprep.subr.mxu0 0.0
    %3170 = vmatpush1.msra.mxu0 0.0
    %3171 = vmatprep.subr.mxu0 0.0
    %3172 = vmatpush1.msra.mxu0 0.0
    %3173 = vmatprep.subr.mxu0 0.0
    %3174 = vmatpush1.msra.mxu0 0.0
    %3175 = vmatprep.subr.mxu0 0.0
    %3176 = vmatpush1.msra.mxu0 0.0
    %3177 = vmatprep.subr.mxu0 0.0
    %3178 = vmatpush1.msra.mxu0 0.0
    %3179 = vmatprep.subr.mxu0 0.0
    %3180 = vmatpush1.msra.mxu0 0.0
    %3181 = vmatprep.subr.mxu0 0.0
    %3182 = vmatpush1.msra.mxu0 %v3143
    %3183 = vmatprep.subr.mxu0 0.0
    %3184 = vmatpush1.msra.mxu0 %v3142
    %3185 = vmatprep.subr.mxu0 0.0
    %3186 = vmatpush1.msra.mxu0 %v3141
    %3187 = vmatprep.subr.mxu0 0.0
    %3188 = vmatpush1.msra.mxu0 %v3140
    %3189 = vmatprep.subr.mxu0 0.0
    %3190 = vmatpush2.msra.mxu0 0.0
    %3191 = vmatprep.subr.mxu0 0.0
    %3192 = vmatpush2.msra.mxu0 0.0
    %3193 = vmatprep.subr.mxu0 0.0
    %3194 = vmatpush2.msra.mxu0 0.0
    %3195 = vmatprep.subr.mxu0 0.0
    %3196 = vmatpush2.msra.mxu0 0.0
    %3197 = vmatprep.subr.mxu0 0.0
    %3198 = vmatpush2.msra.mxu0 0.0
    %3199 = vmatprep.subr.mxu0 0.0
    %3200 = vmatpush2.msra.mxu0 0.0
    %3201 = vmatprep.subr.mxu0 0.0
    %3202 = vmatpush2.msra.mxu0 0.0
    %3203 = vmatprep.subr.mxu0 0.0
    %3204 = vmatpush2.msra.mxu0 0.0
    %3205 = vmatprep.subr.mxu0 0.0
    %3206 = vmatpush2.msra.mxu0 0.0
    %3207 = vmatprep.subr.mxu0 0.0
    %3208 = vmatpush2.msra.mxu0 0.0
    %3209 = vmatprep.subr.mxu0 0.0
    %3210 = vmatpush2.msra.mxu0 0.0
    %3211 = vmatprep.subr.mxu0 0.0
    %3212 = vmatpush2.msra.mxu0 0.0
    %3213 = vmatprep.subr.mxu0 0.0
    %3214 = vmatpush2.msra.mxu0 0.0
    %3215 = vmatprep.subr.mxu0 0.0
    %3216 = vmatpush2.msra.mxu0 0.0
    %3217 = vmatprep.subr.mxu0 0.0
    %3218 = vmatpush2.msra.mxu0 0.0
    %3219 = vmatprep.subr.mxu0 0.0
    %3220 = vmatpush2.msra.mxu0 0.0
    %3221 = vmatprep.mubr.f32.mxu0 0.0
    %3222 = vmatmul.mubr.f32.gmra.mxu0 %v3151
    %v3223 = vpop.f32.mrf.mxu0
    %v3224 = vadd.f32 0.0, %v3223
    %v3225 = vpop.f32.mrf.mxu0
    %3226 = vmatprep.mubr.f32.mxu0 0.0
    %3227 = vmatmul.mubr.f32.gmra.mxu0 %v3153
    %v3228 = vpop.f32.mrf.mxu0
    %v3229 = vadd.f32 0.0, %v3228
    %v3230 = vpop.f32.mrf.mxu0
    %3231 = vmatprep.mubr.f32.mxu0 0.0
    %3232 = vmatmul.mubr.f32.gmra.mxu0 %v3155
    %v3233 = vpop.f32.mrf.mxu0
    %v3234 = vadd.f32 0.0, %v3233
    %v3235 = vpop.f32.mrf.mxu0
    %3236 = vdwg.mxu0
    %v3237 = vld [vmem:[%s716] sm:$0xff]
    %v3238 = vld [vmem:[%s716 + $0x8] sm:$0xff]
    %v3239 = vld [vmem:[%s716 + $0x10] sm:$0xff]
    %v3240 = vld [vmem:[%s716 + $0x18] sm:$0xff]
    %3241 = vmatprep.subr.mxu0 0.0
    %3242 = vmatpush1.msra.mxu0 0.0
    %3243 = vmatprep.subr.mxu0 0.0
    %3244 = vmatpush1.msra.mxu0 0.0
    %3245 = vmatprep.subr.mxu0 0.0
    %3246 = vmatpush1.msra.mxu0 0.0
    %3247 = vmatprep.subr.mxu0 0.0
    %3248 = vmatpush1.msra.mxu0 0.0
    %3249 = vmatprep.subr.mxu0 0.0
    %3250 = vmatpush1.msra.mxu0 0.0
    %3251 = vmatprep.subr.mxu0 0.0
    %3252 = vmatpush1.msra.mxu0 0.0
    %3253 = vmatprep.subr.mxu0 0.0
    %3254 = vmatpush1.msra.mxu0 0.0
    %3255 = vmatprep.subr.mxu0 0.0
    %3256 = vmatpush1.msra.mxu0 0.0
    %3257 = vmatprep.subr.mxu0 0.0
    %3258 = vmatpush1.msra.mxu0 0.0
    %3259 = vmatprep.subr.mxu0 0.0
    %3260 = vmatpush1.msra.mxu0 0.0
    %3261 = vmatprep.subr.mxu0 0.0
    %3262 = vmatpush1.msra.mxu0 0.0
    %3263 = vmatprep.subr.mxu0 0.0
    %3264 = vmatpush1.msra.mxu0 0.0
    %3265 = vmatprep.subr.mxu0 0.0
    %3266 = vmatpush1.msra.mxu0 %v3240
    %3267 = vmatprep.subr.mxu0 0.0
    %3268 = vmatpush1.msra.mxu0 %v3239
    %3269 = vmatprep.subr.mxu0 0.0
    %3270 = vmatpush1.msra.mxu0 %v3238
    %3271 = vmatprep.subr.mxu0 0.0
    %3272 = vmatpush1.msra.mxu0 %v3237
    %3273 = vmatprep.subr.mxu0 0.0
    %3274 = vmatpush2.msra.mxu0 0.0
    %3275 = vmatprep.subr.mxu0 0.0
    %3276 = vmatpush2.msra.mxu0 0.0
    %3277 = vmatprep.subr.mxu0 0.0
    %3278 = vmatpush2.msra.mxu0 0.0
    %3279 = vmatprep.subr.mxu0 0.0
    %3280 = vmatpush2.msra.mxu0 0.0
    %3281 = vmatprep.subr.mxu0 0.0
    %3282 = vmatpush2.msra.mxu0 0.0
    %3283 = vmatprep.subr.mxu0 0.0
    %3284 = vmatpush2.msra.mxu0 0.0
    %3285 = vmatprep.subr.mxu0 0.0
    %3286 = vmatpush2.msra.mxu0 0.0
    %3287 = vmatprep.subr.mxu0 0.0
    %3288 = vmatpush2.msra.mxu0 0.0
    %3289 = vmatprep.subr.mxu0 0.0
    %3290 = vmatpush2.msra.mxu0 0.0
    %3291 = vmatprep.subr.mxu0 0.0
    %3292 = vmatpush2.msra.mxu0 0.0
    %3293 = vmatprep.subr.mxu0 0.0
    %3294 = vmatpush2.msra.mxu0 0.0
    %3295 = vmatprep.subr.mxu0 0.0
    %3296 = vmatpush2.msra.mxu0 0.0
    %3297 = vmatprep.subr.mxu0 0.0
    %3298 = vmatpush2.msra.mxu0 0.0
    %3299 = vmatprep.subr.mxu0 0.0
    %3300 = vmatpush2.msra.mxu0 0.0
    %3301 = vmatprep.subr.mxu0 0.0
    %3302 = vmatpush2.msra.mxu0 0.0
    %3303 = vmatprep.subr.mxu0 0.0
    %3304 = vmatpush2.msra.mxu0 0.0
    %3305 = vmatprep.mubr.f32.mxu0 0.0
    %3306 = vmatmul.mubr.f32.gmra.mxu0 %v3151
    %v3307 = vpop.f32.mrf.mxu0
    %v3308 = vadd.f32 0.0, %v3307
    %v3309 = vpop.f32.mrf.mxu0
    %3310 = vmatprep.mubr.f32.mxu0 0.0
    %3311 = vmatmul.mubr.f32.gmra.mxu0 %v3153
    %v3312 = vpop.f32.mrf.mxu0
    %v3313 = vadd.f32 0.0, %v3312
    %v3314 = vpop.f32.mrf.mxu0
    %3315 = vmatprep.mubr.f32.mxu0 0.0
    %3316 = vmatmul.mubr.f32.gmra.mxu0 %v3155
    %v3317 = vpop.f32.mrf.mxu0
    %v3318 = vadd.f32 0.0, %v3317
    %v3319 = vpop.f32.mrf.mxu0
    %3320 = vdwg.mxu0
    %v3321 = vadd.f32 %v3134, %v3224
    %v3322 = vadd.f32 %v3135, %v3229
    %v3323 = vadd.f32 %v3136, %v3234
    %v3324 = vadd.f32 %v3137, %v3308
    %v3325 = vadd.f32 %v3138, %v3313
    %v3326 = vadd.f32 %v3139, %v3318
    %v3327 = vld [vmem:[%s807] sm:$0xff]
    %v3328 = vld [vmem:[%s807 + $0x8] sm:$0xff]
    %v3329 = vld [vmem:[%s807 + $0x10] sm:$0xff]
    %v3330 = vld [vmem:[%s807 + $0x18] sm:$0xff]
    %v3331 = vrot.slane %v2590, 4
    %v3332 = vrot.slane %v2591, 4
    %v3333 = vsel %vm812, %v3331, %v3332
    %v3334 = vrot.slane %v2592, 4
    %v3335 = vsel %vm812, %v3332, %v3334
    %v3336 = vrot.slane %v2593, 4
    %v3337 = vsel %vm812, %v3334, %v3336
    %v3338 = vsel %vm89, %v3333, 0
    %v3340 = vsel %vm89, %v3335, 0
    %v3342 = vsel %vm89, %v3337, 0
    %3344 = vmatprep.subr.mxu0 0.0
    %3345 = vmatpush1.msra.mxu0 0.0
    %3346 = vmatprep.subr.mxu0 0.0
    %3347 = vmatpush1.msra.mxu0 0.0
    %3348 = vmatprep.subr.mxu0 0.0
    %3349 = vmatpush1.msra.mxu0 0.0
    %3350 = vmatprep.subr.mxu0 0.0
    %3351 = vmatpush1.msra.mxu0 0.0
    %3352 = vmatprep.subr.mxu0 0.0
    %3353 = vmatpush1.msra.mxu0 0.0
    %3354 = vmatprep.subr.mxu0 0.0
    %3355 = vmatpush1.msra.mxu0 0.0
    %3356 = vmatprep.subr.mxu0 0.0
    %3357 = vmatpush1.msra.mxu0 0.0
    %3358 = vmatprep.subr.mxu0 0.0
    %3359 = vmatpush1.msra.mxu0 0.0
    %3360 = vmatprep.subr.mxu0 0.0
    %3361 = vmatpush1.msra.mxu0 0.0
    %3362 = vmatprep.subr.mxu0 0.0
    %3363 = vmatpush1.msra.mxu0 0.0
    %3364 = vmatprep.subr.mxu0 0.0
    %3365 = vmatpush1.msra.mxu0 0.0
    %3366 = vmatprep.subr.mxu0 0.0
    %3367 = vmatpush1.msra.mxu0 0.0
    %3368 = vmatprep.subr.mxu0 0.0
    %3369 = vmatpush1.msra.mxu0 %v3330
    %3370 = vmatprep.subr.mxu0 0.0
    %3371 = vmatpush1.msra.mxu0 %v3329
    %3372 = vmatprep.subr.mxu0 0.0
    %3373 = vmatpush1.msra.mxu0 %v3328
    %3374 = vmatprep.subr.mxu0 0.0
    %3375 = vmatpush1.msra.mxu0 %v3327
    %3376 = vmatprep.subr.mxu0 0.0
    %3377 = vmatpush2.msra.mxu0 0.0
    %3378 = vmatprep.subr.mxu0 0.0
    %3379 = vmatpush2.msra.mxu0 0.0
    %3380 = vmatprep.subr.mxu0 0.0
    %3381 = vmatpush2.msra.mxu0 0.0
    %3382 = vmatprep.subr.mxu0 0.0
    %3383 = vmatpush2.msra.mxu0 0.0
    %3384 = vmatprep.subr.mxu0 0.0
    %3385 = vmatpush2.msra.mxu0 0.0
    %3386 = vmatprep.subr.mxu0 0.0
    %3387 = vmatpush2.msra.mxu0 0.0
    %3388 = vmatprep.subr.mxu0 0.0
    %3389 = vmatpush2.msra.mxu0 0.0
    %3390 = vmatprep.subr.mxu0 0.0
    %3391 = vmatpush2.msra.mxu0 0.0
    %3392 = vmatprep.subr.mxu0 0.0
    %3393 = vmatpush2.msra.mxu0 0.0
    %3394 = vmatprep.subr.mxu0 0.0
    %3395 = vmatpush2.msra.mxu0 0.0
    %3396 = vmatprep.subr.mxu0 0.0
    %3397 = vmatpush2.msra.mxu0 0.0
    %3398 = vmatprep.subr.mxu0 0.0
    %3399 = vmatpush2.msra.mxu0 0.0
    %3400 = vmatprep.subr.mxu0 0.0
    %3401 = vmatpush2.msra.mxu0 0.0
    %3402 = vmatprep.subr.mxu0 0.0
    %3403 = vmatpush2.msra.mxu0 0.0
    %3404 = vmatprep.subr.mxu0 0.0
    %3405 = vmatpush2.msra.mxu0 0.0
    %3406 = vmatprep.subr.mxu0 0.0
    %3407 = vmatpush2.msra.mxu0 0.0
    %3408 = vmatprep.mubr.f32.mxu0 0.0
    %3409 = vmatmul.mubr.f32.gmra.mxu0 %v3338
    %v3410 = vpop.f32.mrf.mxu0
    %v3411 = vadd.f32 0.0, %v3410
    %v3412 = vpop.f32.mrf.mxu0
    %3413 = vmatprep.mubr.f32.mxu0 0.0
    %3414 = vmatmul.mubr.f32.gmra.mxu0 %v3340
    %v3415 = vpop.f32.mrf.mxu0
    %v3416 = vadd.f32 0.0, %v3415
    %v3417 = vpop.f32.mrf.mxu0
    %3418 = vmatprep.mubr.f32.mxu0 0.0
    %3419 = vmatmul.mubr.f32.gmra.mxu0 %v3342
    %v3420 = vpop.f32.mrf.mxu0
    %v3421 = vadd.f32 0.0, %v3420
    %v3422 = vpop.f32.mrf.mxu0
    %3423 = vdwg.mxu0
    %v3424 = vld [vmem:[%s906] sm:$0xff]
    %v3425 = vld [vmem:[%s906 + $0x8] sm:$0xff]
    %v3426 = vld [vmem:[%s906 + $0x10] sm:$0xff]
    %v3427 = vld [vmem:[%s906 + $0x18] sm:$0xff]
    %3428 = vmatprep.subr.mxu0 0.0
    %3429 = vmatpush1.msra.mxu0 0.0
    %3430 = vmatprep.subr.mxu0 0.0
    %3431 = vmatpush1.msra.mxu0 0.0
    %3432 = vmatprep.subr.mxu0 0.0
    %3433 = vmatpush1.msra.mxu0 0.0
    %3434 = vmatprep.subr.mxu0 0.0
    %3435 = vmatpush1.msra.mxu0 0.0
    %3436 = vmatprep.subr.mxu0 0.0
    %3437 = vmatpush1.msra.mxu0 0.0
    %3438 = vmatprep.subr.mxu0 0.0
    %3439 = vmatpush1.msra.mxu0 0.0
    %3440 = vmatprep.subr.mxu0 0.0
    %3441 = vmatpush1.msra.mxu0 0.0
    %3442 = vmatprep.subr.mxu0 0.0
    %3443 = vmatpush1.msra.mxu0 0.0
    %3444 = vmatprep.subr.mxu0 0.0
    %3445 = vmatpush1.msra.mxu0 0.0
    %3446 = vmatprep.subr.mxu0 0.0
    %3447 = vmatpush1.msra.mxu0 0.0
    %3448 = vmatprep.subr.mxu0 0.0
    %3449 = vmatpush1.msra.mxu0 0.0
    %3450 = vmatprep.subr.mxu0 0.0
    %3451 = vmatpush1.msra.mxu0 0.0
    %3452 = vmatprep.subr.mxu0 0.0
    %3453 = vmatpush1.msra.mxu0 %v3427
    %3454 = vmatprep.subr.mxu0 0.0
    %3455 = vmatpush1.msra.mxu0 %v3426
    %3456 = vmatprep.subr.mxu0 0.0
    %3457 = vmatpush1.msra.mxu0 %v3425
    %3458 = vmatprep.subr.mxu0 0.0
    %3459 = vmatpush1.msra.mxu0 %v3424
    %3460 = vmatprep.subr.mxu0 0.0
    %3461 = vmatpush2.msra.mxu0 0.0
    %3462 = vmatprep.subr.mxu0 0.0
    %3463 = vmatpush2.msra.mxu0 0.0
    %3464 = vmatprep.subr.mxu0 0.0
    %3465 = vmatpush2.msra.mxu0 0.0
    %3466 = vmatprep.subr.mxu0 0.0
    %3467 = vmatpush2.msra.mxu0 0.0
    %3468 = vmatprep.subr.mxu0 0.0
    %3469 = vmatpush2.msra.mxu0 0.0
    %3470 = vmatprep.subr.mxu0 0.0
    %3471 = vmatpush2.msra.mxu0 0.0
    %3472 = vmatprep.subr.mxu0 0.0
    %3473 = vmatpush2.msra.mxu0 0.0
    %3474 = vmatprep.subr.mxu0 0.0
    %3475 = vmatpush2.msra.mxu0 0.0
    %3476 = vmatprep.subr.mxu0 0.0
    %3477 = vmatpush2.msra.mxu0 0.0
    %3478 = vmatprep.subr.mxu0 0.0
    %3479 = vmatpush2.msra.mxu0 0.0
    %3480 = vmatprep.subr.mxu0 0.0
    %3481 = vmatpush2.msra.mxu0 0.0
    %3482 = vmatprep.subr.mxu0 0.0
    %3483 = vmatpush2.msra.mxu0 0.0
    %3484 = vmatprep.subr.mxu0 0.0
    %3485 = vmatpush2.msra.mxu0 0.0
    %3486 = vmatprep.subr.mxu0 0.0
    %3487 = vmatpush2.msra.mxu0 0.0
    %3488 = vmatprep.subr.mxu0 0.0
    %3489 = vmatpush2.msra.mxu0 0.0
    %3490 = vmatprep.subr.mxu0 0.0
    %3491 = vmatpush2.msra.mxu0 0.0
    %3492 = vmatprep.mubr.f32.mxu0 0.0
    %3493 = vmatmul.mubr.f32.gmra.mxu0 %v3338
    %v3494 = vpop.f32.mrf.mxu0
    %v3495 = vadd.f32 0.0, %v3494
    %v3496 = vpop.f32.mrf.mxu0
    %3497 = vmatprep.mubr.f32.mxu0 0.0
    %3498 = vmatmul.mubr.f32.gmra.mxu0 %v3340
    %v3499 = vpop.f32.mrf.mxu0
    %v3500 = vadd.f32 0.0, %v3499
    %v3501 = vpop.f32.mrf.mxu0
    %3502 = vmatprep.mubr.f32.mxu0 0.0
    %3503 = vmatmul.mubr.f32.gmra.mxu0 %v3342
    %v3504 = vpop.f32.mrf.mxu0
    %v3505 = vadd.f32 0.0, %v3504
    %v3506 = vpop.f32.mrf.mxu0
    %3507 = vdwg.mxu0
    %v3508 = vadd.f32 %v3321, %v3411
    %v3509 = vadd.f32 %v3322, %v3416
    %v3510 = vadd.f32 %v3323, %v3421
    %v3511 = vadd.f32 %v3324, %v3495
    %v3512 = vadd.f32 %v3325, %v3500
    %v3513 = vadd.f32 %v3326, %v3505
    %v3514 = vadd.f32 %v3508, %v1001
    %v3515 = vadd.f32 %v3509, %v1001
    %v3516 = vadd.f32 %v3510, %v1001
    %v3517 = vmax.f32 %v3514, 0.0
    %v3518 = vmax.f32 %v3515, 0.0
    %v3519 = vmax.f32 %v3516, 0.0
    %v3520 = vadd.f32 %v3511, %v1001
    %v3521 = vadd.f32 %v3512, %v1001
    %v3522 = vadd.f32 %v3513, %v1001
    %v3523 = vmax.f32 %v3520, 0.0
    %v3524 = vmax.f32 %v3521, 0.0
    %v3525 = vmax.f32 %v3522, 0.0
    %v3526 = vmax.f32 %v3517, %v3523
    %v3527 = vmax.f32 %v3518, %v3524
    %v3528 = vmax.f32 %v3519, %v3525
    %v3532 = vcombine.high %v3526, %v3526
    %v3534 = vunpack.c.l.s4 1983009808
    %v3535 = vunpack.c.0.s8 %v3534
    %v3536 = vlaneseq
    %v3537 = vshrl.u32 %v3536, 7
    %v3538 = vsub.s32 %v3535, %v3537
    %v3539 = vrot.slane %v3526, %v3538
    %v3541 = vunpack.c.l.s4 1983009808
    %v3542 = vunpack.c.0.s8 %v3541
    %v3543 = vlaneseq
    %v3544 = vshrl.u32 %v3543, 7
    %v3545 = vsub.s32 %v3542, %v3544
    %v3546 = vrot.slane %v3532, %v3545
    %v3547 = vcombine.high %v3539, %v3539
    %v3548 = vcombine.high %v3546, %v3546
    %v3549 = vcombine.high %v3527, %v3527
    %v3551 = vunpack.c.l.s4 1983009808
    %v3552 = vunpack.c.0.s8 %v3551
    %v3553 = vlaneseq
    %v3554 = vshrl.u32 %v3553, 7
    %v3555 = vsub.s32 %v3552, %v3554
    %v3556 = vrot.slane %v3527, %v3555
    %v3558 = vunpack.c.l.s4 1983009808
    %v3559 = vunpack.c.0.s8 %v3558
    %v3560 = vlaneseq
    %v3561 = vshrl.u32 %v3560, 7
    %v3562 = vsub.s32 %v3559, %v3561
    %v3563 = vrot.slane %v3549, %v3562
    %v3564 = vcombine.high %v3556, %v3556
    %v3565 = vcombine.high %v3563, %v3563
    %v3566 = vcombine.high %v3528, %v3528
    %v3568 = vunpack.c.l.s4 1983009808
    %v3569 = vunpack.c.0.s8 %v3568
    %v3570 = vlaneseq
    %v3571 = vshrl.u32 %v3570, 7
    %v3572 = vsub.s32 %v3569, %v3571
    %v3573 = vrot.slane %v3528, %v3572
    %v3575 = vunpack.c.l.s4 1983009808
    %v3576 = vunpack.c.0.s8 %v3575
    %v3577 = vlaneseq
    %v3578 = vshrl.u32 %v3577, 7
    %v3579 = vsub.s32 %v3576, %v3578
    %v3580 = vrot.slane %v3566, %v3579
    %v3581 = vcombine.high %v3573, %v3573
    %v3582 = vcombine.high %v3580, %v3580
    %v3595 = vrot.slane %v3539, 7
    %v3596 = vrot.slane %v3595, 2
    %v3597 = vrot.slane %v3547, 7
    %v3598 = vrot.slane %v3597, 2
    %v3599 = vrot.slane %v3546, 7
    %v3600 = vrot.slane %v3599, 2
    %v3601 = vrot.slane %v3548, 7
    %v3602 = vrot.slane %v3601, 2
    %v3603 = vrot.slane %v3556, 7
    %v3604 = vrot.slane %v3603, 2
    %v3605 = vrot.slane %v3564, 7
    %v3606 = vrot.slane %v3605, 2
    %v3607 = vrot.slane %v3563, 7
    %v3608 = vrot.slane %v3607, 2
    %v3609 = vrot.slane %v3565, 7
    %v3610 = vrot.slane %v3609, 2
    %v3611 = vrot.slane %v3573, 7
    %v3612 = vrot.slane %v3611, 2
    %v3613 = vrot.slane %v3581, 7
    %v3614 = vrot.slane %v3613, 2
    %v3615 = vrot.slane %v3580, 7
    %v3616 = vrot.slane %v3615, 2
    %v3617 = vrot.slane %v3582, 7
    %v3618 = vrot.slane %v3617, 2
    %v3631 = vmax.f32 %v3539, %v3596
    %v3632 = vmax.f32 %v3547, %v3598
    %v3633 = vmax.f32 %v3546, %v3600
    %v3634 = vmax.f32 %v3548, %v3602
    %v3635 = vmax.f32 %v3556, %v3604
    %v3636 = vmax.f32 %v3564, %v3606
    %v3637 = vmax.f32 %v3563, %v3608
    %v3638 = vmax.f32 %v3565, %v3610
    %v3639 = vmax.f32 %v3573, %v3612
    %v3640 = vmax.f32 %v3581, %v3614
    %v3641 = vmax.f32 %v3580, %v3616
    %v3642 = vmax.f32 %v3582, %v3618
    %v3643 = vld [vmem:[#allocation2] sm:$0xff]
    %v3644 = vld [vmem:[#allocation2 + $0x8] sm:$0xff]
    %v3645 = vld [vmem:[#allocation2 + $0x10] sm:$0xff]
    %v3646 = vld [vmem:[#allocation2 + $0x18] sm:$0xff]
    %v3647 = vld [vmem:[#allocation2 + $0x20] sm:$0xff]
    %v3648 = vld [vmem:[#allocation2 + $0x28] sm:$0xff]
    %v3649 = vld [vmem:[#allocation2 + $0x30] sm:$0xff]
    %v3650 = vld [vmem:[#allocation2 + $0x38] sm:$0xff]
    %v3651 = vld [vmem:[#allocation2 + $0x40] sm:$0xff]
    %v3652 = vld [vmem:[#allocation2 + $0x48] sm:$0xff]
    %v3653 = vld [vmem:[#allocation2 + $0x50] sm:$0xff]
    %v3654 = vld [vmem:[#allocation2 + $0x58] sm:$0xff]
    %v3655 = vld [vmem:[#allocation2 + $0x60] sm:$0xff]
    %v3656 = vld [vmem:[#allocation2 + $0x68] sm:$0xff]
    %v3657 = vld [vmem:[#allocation2 + $0x70] sm:$0xff]
    %v3658 = vld [vmem:[#allocation2 + $0x78] sm:$0xff]
    %v3659 = vld [vmem:[%s1148] sm:$0xff]
    %v3660 = vld [vmem:[%s1148 + $0x8] sm:$0xff]
    %v3661 = vld [vmem:[%s1148 + $0x10] sm:$0xff]
    %v3662 = vld [vmem:[%s1148 + $0x18] sm:$0xff]
    %v3663 = vld [vmem:[%s1148 + $0x20] sm:$0xff]
    %v3664 = vld [vmem:[%s1148 + $0x28] sm:$0xff]
    %v3665 = vld [vmem:[%s1148 + $0x30] sm:$0xff]
    %v3666 = vld [vmem:[%s1148 + $0x38] sm:$0xff]
    %v3667 = vld [vmem:[%s1148 + $0x40] sm:$0xff]
    %v3668 = vld [vmem:[%s1148 + $0x48] sm:$0xff]
    %v3669 = vld [vmem:[%s1148 + $0x50] sm:$0xff]
    %v3670 = vld [vmem:[%s1148 + $0x58] sm:$0xff]
    %v3671 = vld [vmem:[%s1148 + $0x60] sm:$0xff]
    %v3672 = vld [vmem:[%s1148 + $0x68] sm:$0xff]
    %v3673 = vld [vmem:[%s1148 + $0x70] sm:$0xff]
    %v3674 = vld [vmem:[%s1148 + $0x78] sm:$0xff]
    %v3675 = vld [vmem:[%s1165] sm:$0xff]
    %v3676 = vld [vmem:[%s1165 + $0x8] sm:$0xff]
    %v3677 = vld [vmem:[%s1165 + $0x10] sm:$0xff]
    %v3678 = vld [vmem:[%s1165 + $0x18] sm:$0xff]
    %v3679 = vld [vmem:[%s1165 + $0x20] sm:$0xff]
    %v3680 = vld [vmem:[%s1165 + $0x28] sm:$0xff]
    %v3681 = vld [vmem:[%s1165 + $0x30] sm:$0xff]
    %v3682 = vld [vmem:[%s1165 + $0x38] sm:$0xff]
    %v3683 = vld [vmem:[%s1165 + $0x40] sm:$0xff]
    %v3684 = vld [vmem:[%s1165 + $0x48] sm:$0xff]
    %v3685 = vld [vmem:[%s1165 + $0x50] sm:$0xff]
    %v3686 = vld [vmem:[%s1165 + $0x58] sm:$0xff]
    %v3687 = vld [vmem:[%s1165 + $0x60] sm:$0xff]
    %v3688 = vld [vmem:[%s1165 + $0x68] sm:$0xff]
    %v3689 = vld [vmem:[%s1165 + $0x70] sm:$0xff]
    %v3690 = vld [vmem:[%s1165 + $0x78] sm:$0xff]
    %v3699 = vlaneseq
    %v3700 = vshrl.u32 %v3699, 7
    %v3701 = vsub.s32 0, %v3700
    %v3702 = vrot.slane %v3632, %v3701
    %v3703 = vlaneseq
    %v3704 = vshrl.u32 %v3703, 7
    %v3705 = vsub.s32 0, %v3704
    %v3706 = vrot.slane %v3633, %v3705
    %v3707 = vlaneseq
    %v3708 = vshrl.u32 %v3707, 7
    %v3709 = vsub.s32 0, %v3708
    %v3710 = vrot.slane %v3634, %v3709
    %v3711 = vlaneseq
    %v3712 = vshrl.u32 %v3711, 7
    %v3713 = vsub.s32 0, %v3712
    %v3714 = vrot.slane %v3635, %v3713
    %v3715 = vlaneseq
    %v3716 = vshrl.u32 %v3715, 7
    %v3717 = vsub.s32 0, %v3716
    %v3718 = vrot.slane %v3636, %v3717
    %v3719 = vlaneseq
    %v3720 = vshrl.u32 %v3719, 7
    %v3721 = vsub.s32 0, %v3720
    %v3722 = vrot.slane %v3637, %v3721
    %v3723 = vlaneseq
    %v3724 = vshrl.u32 %v3723, 7
    %v3725 = vsub.s32 0, %v3724
    %v3726 = vrot.slane %v3638, %v3725
    %v3727 = vlaneseq
    %v3728 = vshrl.u32 %v3727, 7
    %v3729 = vsub.s32 0, %v3728
    %v3730 = vrot.slane %v3639, %v3729
    %v3731 = vsel %vm1222, %v3706, %v3702
    %v3732 = vsel %vm1224, %v3710, %v3731
    %v3733 = vsel %vm1226, %v3714, %v3732
    %v3734 = vsel %vm1228, %v3718, %v3733
    %v3735 = vsel %vm1230, %v3722, %v3734
    %v3736 = vsel %vm1232, %v3726, %v3735
    %v3737 = vsel %vm1234, %v3730, %v3736
    %3739 = vmatprep.subr.mxu0 0.0
    %3740 = vmatpush1.msra.mxu0 %v3690
    %3741 = vmatprep.subr.mxu0 0.0
    %3742 = vmatpush1.msra.mxu0 %v3689
    %3743 = vmatprep.subr.mxu0 0.0
    %3744 = vmatpush1.msra.mxu0 %v3688
    %3745 = vmatprep.subr.mxu0 0.0
    %3746 = vmatpush1.msra.mxu0 %v3687
    %3747 = vmatprep.subr.mxu0 0.0
    %3748 = vmatpush1.msra.mxu0 %v3686
    %3749 = vmatprep.subr.mxu0 0.0
    %3750 = vmatpush1.msra.mxu0 %v3685
    %3751 = vmatprep.subr.mxu0 0.0
    %3752 = vmatpush1.msra.mxu0 %v3684
    %3753 = vmatprep.subr.mxu0 0.0
    %3754 = vmatpush1.msra.mxu0 %v3683
    %3755 = vmatprep.subr.mxu0 0.0
    %3756 = vmatpush1.msra.mxu0 %v3682
    %3757 = vmatprep.subr.mxu0 0.0
    %3758 = vmatpush1.msra.mxu0 %v3681
    %3759 = vmatprep.subr.mxu0 0.0
    %3760 = vmatpush1.msra.mxu0 %v3680
    %3761 = vmatprep.subr.mxu0 0.0
    %3762 = vmatpush1.msra.mxu0 %v3679
    %3763 = vmatprep.subr.mxu0 0.0
    %3764 = vmatpush1.msra.mxu0 %v3678
    %3765 = vmatprep.subr.mxu0 0.0
    %3766 = vmatpush1.msra.mxu0 %v3677
    %3767 = vmatprep.subr.mxu0 0.0
    %3768 = vmatpush1.msra.mxu0 %v3676
    %3769 = vmatprep.subr.mxu0 0.0
    %3770 = vmatpush1.msra.mxu0 %v3675
    %3771 = vmatprep.subr.mxu0 0.0
    %3772 = vmatpush2.msra.mxu0 0.0
    %3773 = vmatprep.subr.mxu0 0.0
    %3774 = vmatpush2.msra.mxu0 0.0
    %3775 = vmatprep.subr.mxu0 0.0
    %3776 = vmatpush2.msra.mxu0 0.0
    %3777 = vmatprep.subr.mxu0 0.0
    %3778 = vmatpush2.msra.mxu0 0.0
    %3779 = vmatprep.subr.mxu0 0.0
    %3780 = vmatpush2.msra.mxu0 0.0
    %3781 = vmatprep.subr.mxu0 0.0
    %3782 = vmatpush2.msra.mxu0 0.0
    %3783 = vmatprep.subr.mxu0 0.0
    %3784 = vmatpush2.msra.mxu0 0.0
    %3785 = vmatprep.subr.mxu0 0.0
    %3786 = vmatpush2.msra.mxu0 0.0
    %3787 = vmatprep.subr.mxu0 0.0
    %3788 = vmatpush2.msra.mxu0 0.0
    %3789 = vmatprep.subr.mxu0 0.0
    %3790 = vmatpush2.msra.mxu0 0.0
    %3791 = vmatprep.subr.mxu0 0.0
    %3792 = vmatpush2.msra.mxu0 0.0
    %3793 = vmatprep.subr.mxu0 0.0
    %3794 = vmatpush2.msra.mxu0 0.0
    %3795 = vmatprep.subr.mxu0 0.0
    %3796 = vmatpush2.msra.mxu0 0.0
    %3797 = vmatprep.subr.mxu0 0.0
    %3798 = vmatpush2.msra.mxu0 0.0
    %3799 = vmatprep.subr.mxu0 0.0
    %3800 = vmatpush2.msra.mxu0 0.0
    %3801 = vmatprep.subr.mxu0 0.0
    %3802 = vmatpush2.msra.mxu0 0.0
    %3803 = vmatprep.mubr.f32.mxu0 0.0
    %3804 = vmatmul.mubr.f32.gmra.mxu0 %v3737
    %v3805 = vpop.f32.mrf.mxu0
    %v3806 = vadd.f32 0.0, %v3805
    %v3807 = vpop.f32.mrf.mxu0
    %3808 = vdwg.mxu0
    %v3809 = vld [vmem:[%s1307] sm:$0xff]
    %v3810 = vld [vmem:[%s1307 + $0x8] sm:$0xff]
    %v3811 = vld [vmem:[%s1307 + $0x10] sm:$0xff]
    %v3812 = vld [vmem:[%s1307 + $0x18] sm:$0xff]
    %v3813 = vld [vmem:[%s1307 + $0x20] sm:$0xff]
    %v3814 = vld [vmem:[%s1307 + $0x28] sm:$0xff]
    %v3815 = vld [vmem:[%s1307 + $0x30] sm:$0xff]
    %v3816 = vld [vmem:[%s1307 + $0x38] sm:$0xff]
    %v3817 = vld [vmem:[%s1307 + $0x40] sm:$0xff]
    %v3818 = vld [vmem:[%s1307 + $0x48] sm:$0xff]
    %v3819 = vld [vmem:[%s1307 + $0x50] sm:$0xff]
    %v3820 = vld [vmem:[%s1307 + $0x58] sm:$0xff]
    %v3821 = vld [vmem:[%s1307 + $0x60] sm:$0xff]
    %v3822 = vld [vmem:[%s1307 + $0x68] sm:$0xff]
    %v3823 = vld [vmem:[%s1307 + $0x70] sm:$0xff]
    %v3824 = vld [vmem:[%s1307 + $0x78] sm:$0xff]
    %3825 = vmatprep.subr.mxu0 0.0
    %3826 = vmatpush1.msra.mxu0 %v3824
    %3827 = vmatprep.subr.mxu0 0.0
    %3828 = vmatpush1.msra.mxu0 %v3823
    %3829 = vmatprep.subr.mxu0 0.0
    %3830 = vmatpush1.msra.mxu0 %v3822
    %3831 = vmatprep.subr.mxu0 0.0
    %3832 = vmatpush1.msra.mxu0 %v3821
    %3833 = vmatprep.subr.mxu0 0.0
    %3834 = vmatpush1.msra.mxu0 %v3820
    %3835 = vmatprep.subr.mxu0 0.0
    %3836 = vmatpush1.msra.mxu0 %v3819
    %3837 = vmatprep.subr.mxu0 0.0
    %3838 = vmatpush1.msra.mxu0 %v3818
    %3839 = vmatprep.subr.mxu0 0.0
    %3840 = vmatpush1.msra.mxu0 %v3817
    %3841 = vmatprep.subr.mxu0 0.0
    %3842 = vmatpush1.msra.mxu0 %v3816
    %3843 = vmatprep.subr.mxu0 0.0
    %3844 = vmatpush1.msra.mxu0 %v3815
    %3845 = vmatprep.subr.mxu0 0.0
    %3846 = vmatpush1.msra.mxu0 %v3814
    %3847 = vmatprep.subr.mxu0 0.0
    %3848 = vmatpush1.msra.mxu0 %v3813
    %3849 = vmatprep.subr.mxu0 0.0
    %3850 = vmatpush1.msra.mxu0 %v3812
    %3851 = vmatprep.subr.mxu0 0.0
    %3852 = vmatpush1.msra.mxu0 %v3811
    %3853 = vmatprep.subr.mxu0 0.0
    %3854 = vmatpush1.msra.mxu0 %v3810
    %3855 = vmatprep.subr.mxu0 0.0
    %3856 = vmatpush1.msra.mxu0 %v3809
    %3857 = vmatprep.subr.mxu0 0.0
    %3858 = vmatpush2.msra.mxu0 0.0
    %3859 = vmatprep.subr.mxu0 0.0
    %3860 = vmatpush2.msra.mxu0 0.0
    %3861 = vmatprep.subr.mxu0 0.0
    %3862 = vmatpush2.msra.mxu0 0.0
    %3863 = vmatprep.subr.mxu0 0.0
    %3864 = vmatpush2.msra.mxu0 0.0
    %3865 = vmatprep.subr.mxu0 0.0
    %3866 = vmatpush2.msra.mxu0 0.0
    %3867 = vmatprep.subr.mxu0 0.0
    %3868 = vmatpush2.msra.mxu0 0.0
    %3869 = vmatprep.subr.mxu0 0.0
    %3870 = vmatpush2.msra.mxu0 0.0
    %3871 = vmatprep.subr.mxu0 0.0
    %3872 = vmatpush2.msra.mxu0 0.0
    %3873 = vmatprep.subr.mxu0 0.0
    %3874 = vmatpush2.msra.mxu0 0.0
    %3875 = vmatprep.subr.mxu0 0.0
    %3876 = vmatpush2.msra.mxu0 0.0
    %3877 = vmatprep.subr.mxu0 0.0
    %3878 = vmatpush2.msra.mxu0 0.0
    %3879 = vmatprep.subr.mxu0 0.0
    %3880 = vmatpush2.msra.mxu0 0.0
    %3881 = vmatprep.subr.mxu0 0.0
    %3882 = vmatpush2.msra.mxu0 0.0
    %3883 = vmatprep.subr.mxu0 0.0
    %3884 = vmatpush2.msra.mxu0 0.0
    %3885 = vmatprep.subr.mxu0 0.0
    %3886 = vmatpush2.msra.mxu0 0.0
    %3887 = vmatprep.subr.mxu0 0.0
    %3888 = vmatpush2.msra.mxu0 0.0
    %3889 = vmatprep.mubr.f32.mxu0 0.0
    %3890 = vmatmul.mubr.f32.gmra.mxu0 %v3737
    %v3891 = vpop.f32.mrf.mxu0
    %v3892 = vadd.f32 0.0, %v3891
    %v3893 = vpop.f32.mrf.mxu0
    %3894 = vdwg.mxu0
    %v3896 = vlaneseq
    %v3897 = vshrl.u32 %v3896, 7
    %v3898 = vsub.s32 0, %v3897
    %v3899 = vrot.slane %v3631, %v3898
    %v3900 = vsel %vm1222, %v3702, %v3899
    %v3901 = vsel %vm1224, %v3706, %v3900
    %v3902 = vsel %vm1226, %v3710, %v3901
    %v3903 = vsel %vm1228, %v3714, %v3902
    %v3904 = vsel %vm1230, %v3718, %v3903
    %v3905 = vsel %vm1232, %v3722, %v3904
    %v3906 = vsel %vm1234, %v3726, %v3905
    %3908 = vmatprep.subr.mxu0 0.0
    %3909 = vmatpush1.msra.mxu0 %v3658
    %3910 = vmatprep.subr.mxu0 0.0
    %3911 = vmatpush1.msra.mxu0 %v3657
    %3912 = vmatprep.subr.mxu0 0.0
    %3913 = vmatpush1.msra.mxu0 %v3656
    %3914 = vmatprep.subr.mxu0 0.0
    %3915 = vmatpush1.msra.mxu0 %v3655
    %3916 = vmatprep.subr.mxu0 0.0
    %3917 = vmatpush1.msra.mxu0 %v3654
    %3918 = vmatprep.subr.mxu0 0.0
    %3919 = vmatpush1.msra.mxu0 %v3653
    %3920 = vmatprep.subr.mxu0 0.0
    %3921 = vmatpush1.msra.mxu0 %v3652
    %3922 = vmatprep.subr.mxu0 0.0
    %3923 = vmatpush1.msra.mxu0 %v3651
    %3924 = vmatprep.subr.mxu0 0.0
    %3925 = vmatpush1.msra.mxu0 %v3650
    %3926 = vmatprep.subr.mxu0 0.0
    %3927 = vmatpush1.msra.mxu0 %v3649
    %3928 = vmatprep.subr.mxu0 0.0
    %3929 = vmatpush1.msra.mxu0 %v3648
    %3930 = vmatprep.subr.mxu0 0.0
    %3931 = vmatpush1.msra.mxu0 %v3647
    %3932 = vmatprep.subr.mxu0 0.0
    %3933 = vmatpush1.msra.mxu0 %v3646
    %3934 = vmatprep.subr.mxu0 0.0
    %3935 = vmatpush1.msra.mxu0 %v3645
    %3936 = vmatprep.subr.mxu0 0.0
    %3937 = vmatpush1.msra.mxu0 %v3644
    %3938 = vmatprep.subr.mxu0 0.0
    %3939 = vmatpush1.msra.mxu0 %v3643
    %3940 = vmatprep.subr.mxu0 0.0
    %3941 = vmatpush2.msra.mxu0 0.0
    %3942 = vmatprep.subr.mxu0 0.0
    %3943 = vmatpush2.msra.mxu0 0.0
    %3944 = vmatprep.subr.mxu0 0.0
    %3945 = vmatpush2.msra.mxu0 0.0
    %3946 = vmatprep.subr.mxu0 0.0
    %3947 = vmatpush2.msra.mxu0 0.0
    %3948 = vmatprep.subr.mxu0 0.0
    %3949 = vmatpush2.msra.mxu0 0.0
    %3950 = vmatprep.subr.mxu0 0.0
    %3951 = vmatpush2.msra.mxu0 0.0
    %3952 = vmatprep.subr.mxu0 0.0
    %3953 = vmatpush2.msra.mxu0 0.0
    %3954 = vmatprep.subr.mxu0 0.0
    %3955 = vmatpush2.msra.mxu0 0.0
    %3956 = vmatprep.subr.mxu0 0.0
    %3957 = vmatpush2.msra.mxu0 0.0
    %3958 = vmatprep.subr.mxu0 0.0
    %3959 = vmatpush2.msra.mxu0 0.0
    %3960 = vmatprep.subr.mxu0 0.0
    %3961 = vmatpush2.msra.mxu0 0.0
    %3962 = vmatprep.subr.mxu0 0.0
    %3963 = vmatpush2.msra.mxu0 0.0
    %3964 = vmatprep.subr.mxu0 0.0
    %3965 = vmatpush2.msra.mxu0 0.0
    %3966 = vmatprep.subr.mxu0 0.0
    %3967 = vmatpush2.msra.mxu0 0.0
    %3968 = vmatprep.subr.mxu0 0.0
    %3969 = vmatpush2.msra.mxu0 0.0
    %3970 = vmatprep.subr.mxu0 0.0
    %3971 = vmatpush2.msra.mxu0 0.0
    %3972 = vmatprep.mubr.f32.mxu0 0.0
    %3973 = vmatmul.mubr.f32.gmra.mxu0 %v3906
    %v3974 = vpop.f32.mrf.mxu0
    %v3975 = vadd.f32 %v3806, %v3974
    %v3976 = vpop.f32.mrf.mxu0
    %3977 = vdwg.mxu0
    %3978 = vmatprep.subr.mxu0 0.0
    %3979 = vmatpush1.msra.mxu0 %v3674
    %3980 = vmatprep.subr.mxu0 0.0
    %3981 = vmatpush1.msra.mxu0 %v3673
    %3982 = vmatprep.subr.mxu0 0.0
    %3983 = vmatpush1.msra.mxu0 %v3672
    %3984 = vmatprep.subr.mxu0 0.0
    %3985 = vmatpush1.msra.mxu0 %v3671
    %3986 = vmatprep.subr.mxu0 0.0
    %3987 = vmatpush1.msra.mxu0 %v3670
    %3988 = vmatprep.subr.mxu0 0.0
    %3989 = vmatpush1.msra.mxu0 %v3669
    %3990 = vmatprep.subr.mxu0 0.0
    %3991 = vmatpush1.msra.mxu0 %v3668
    %3992 = vmatprep.subr.mxu0 0.0
    %3993 = vmatpush1.msra.mxu0 %v3667
    %3994 = vmatprep.subr.mxu0 0.0
    %3995 = vmatpush1.msra.mxu0 %v3666
    %3996 = vmatprep.subr.mxu0 0.0
    %3997 = vmatpush1.msra.mxu0 %v3665
    %3998 = vmatprep.subr.mxu0 0.0
    %3999 = vmatpush1.msra.mxu0 %v3664
    %4000 = vmatprep.subr.mxu0 0.0
    %4001 = vmatpush1.msra.mxu0 %v3663
    %4002 = vmatprep.subr.mxu0 0.0
    %4003 = vmatpush1.msra.mxu0 %v3662
    %4004 = vmatprep.subr.mxu0 0.0
    %4005 = vmatpush1.msra.mxu0 %v3661
    %4006 = vmatprep.subr.mxu0 0.0
    %4007 = vmatpush1.msra.mxu0 %v3660
    %4008 = vmatprep.subr.mxu0 0.0
    %4009 = vmatpush1.msra.mxu0 %v3659
    %4010 = vmatprep.subr.mxu0 0.0
    %4011 = vmatpush2.msra.mxu0 0.0
    %4012 = vmatprep.subr.mxu0 0.0
    %4013 = vmatpush2.msra.mxu0 0.0
    %4014 = vmatprep.subr.mxu0 0.0
    %4015 = vmatpush2.msra.mxu0 0.0
    %4016 = vmatprep.subr.mxu0 0.0
    %4017 = vmatpush2.msra.mxu0 0.0
    %4018 = vmatprep.subr.mxu0 0.0
    %4019 = vmatpush2.msra.mxu0 0.0
    %4020 = vmatprep.subr.mxu0 0.0
    %4021 = vmatpush2.msra.mxu0 0.0
    %4022 = vmatprep.subr.mxu0 0.0
    %4023 = vmatpush2.msra.mxu0 0.0
    %4024 = vmatprep.subr.mxu0 0.0
    %4025 = vmatpush2.msra.mxu0 0.0
    %4026 = vmatprep.subr.mxu0 0.0
    %4027 = vmatpush2.msra.mxu0 0.0
    %4028 = vmatprep.subr.mxu0 0.0
    %4029 = vmatpush2.msra.mxu0 0.0
    %4030 = vmatprep.subr.mxu0 0.0
    %4031 = vmatpush2.msra.mxu0 0.0
    %4032 = vmatprep.subr.mxu0 0.0
    %4033 = vmatpush2.msra.mxu0 0.0
    %4034 = vmatprep.subr.mxu0 0.0
    %4035 = vmatpush2.msra.mxu0 0.0
    %4036 = vmatprep.subr.mxu0 0.0
    %4037 = vmatpush2.msra.mxu0 0.0
    %4038 = vmatprep.subr.mxu0 0.0
    %4039 = vmatpush2.msra.mxu0 0.0
    %4040 = vmatprep.subr.mxu0 0.0
    %4041 = vmatpush2.msra.mxu0 0.0
    %4042 = vmatprep.mubr.f32.mxu0 0.0
    %4043 = vmatmul.mubr.f32.gmra.mxu0 %v3906
    %v4044 = vpop.f32.mrf.mxu0
    %v4045 = vadd.f32 %v3892, %v4044
    %v4046 = vpop.f32.mrf.mxu0
    %4047 = vdwg.mxu0
    %v4048 = vld [vmem:[%s1547] sm:$0xff]
    %v4049 = vld [vmem:[%s1547 + $0x8] sm:$0xff]
    %v4050 = vld [vmem:[%s1547 + $0x10] sm:$0xff]
    %v4051 = vld [vmem:[%s1547 + $0x18] sm:$0xff]
    %v4052 = vld [vmem:[%s1547 + $0x20] sm:$0xff]
    %v4053 = vld [vmem:[%s1547 + $0x28] sm:$0xff]
    %v4054 = vld [vmem:[%s1547 + $0x30] sm:$0xff]
    %v4055 = vld [vmem:[%s1547 + $0x38] sm:$0xff]
    %v4056 = vld [vmem:[%s1547 + $0x40] sm:$0xff]
    %v4057 = vld [vmem:[%s1547 + $0x48] sm:$0xff]
    %v4058 = vld [vmem:[%s1547 + $0x50] sm:$0xff]
    %v4059 = vld [vmem:[%s1547 + $0x58] sm:$0xff]
    %v4060 = vld [vmem:[%s1547 + $0x60] sm:$0xff]
    %v4061 = vld [vmem:[%s1547 + $0x68] sm:$0xff]
    %v4062 = vld [vmem:[%s1547 + $0x70] sm:$0xff]
    %v4063 = vld [vmem:[%s1547 + $0x78] sm:$0xff]
    %v4065 = vlaneseq
    %v4066 = vshrl.u32 %v4065, 7
    %v4067 = vsub.s32 0, %v4066
    %v4068 = vrot.slane %v3640, %v4067
    %v4069 = vsel %vm1222, %v3710, %v3706
    %v4070 = vsel %vm1224, %v3714, %v4069
    %v4071 = vsel %vm1226, %v3718, %v4070
    %v4072 = vsel %vm1228, %v3722, %v4071
    %v4073 = vsel %vm1230, %v3726, %v4072
    %v4074 = vsel %vm1232, %v3730, %v4073
    %v4075 = vsel %vm1234, %v4068, %v4074
    %4077 = vmatprep.subr.mxu0 0.0
    %4078 = vmatpush1.msra.mxu0 %v4063
    %4079 = vmatprep.subr.mxu0 0.0
    %4080 = vmatpush1.msra.mxu0 %v4062
    %4081 = vmatprep.subr.mxu0 0.0
    %4082 = vmatpush1.msra.mxu0 %v4061
    %4083 = vmatprep.subr.mxu0 0.0
    %4084 = vmatpush1.msra.mxu0 %v4060
    %4085 = vmatprep.subr.mxu0 0.0
    %4086 = vmatpush1.msra.mxu0 %v4059
    %4087 = vmatprep.subr.mxu0 0.0
    %4088 = vmatpush1.msra.mxu0 %v4058
    %4089 = vmatprep.subr.mxu0 0.0
    %4090 = vmatpush1.msra.mxu0 %v4057
    %4091 = vmatprep.subr.mxu0 0.0
    %4092 = vmatpush1.msra.mxu0 %v4056
    %4093 = vmatprep.subr.mxu0 0.0
    %4094 = vmatpush1.msra.mxu0 %v4055
    %4095 = vmatprep.subr.mxu0 0.0
    %4096 = vmatpush1.msra.mxu0 %v4054
    %4097 = vmatprep.subr.mxu0 0.0
    %4098 = vmatpush1.msra.mxu0 %v4053
    %4099 = vmatprep.subr.mxu0 0.0
    %4100 = vmatpush1.msra.mxu0 %v4052
    %4101 = vmatprep.subr.mxu0 0.0
    %4102 = vmatpush1.msra.mxu0 %v4051
    %4103 = vmatprep.subr.mxu0 0.0
    %4104 = vmatpush1.msra.mxu0 %v4050
    %4105 = vmatprep.subr.mxu0 0.0
    %4106 = vmatpush1.msra.mxu0 %v4049
    %4107 = vmatprep.subr.mxu0 0.0
    %4108 = vmatpush1.msra.mxu0 %v4048
    %4109 = vmatprep.subr.mxu0 0.0
    %4110 = vmatpush2.msra.mxu0 0.0
    %4111 = vmatprep.subr.mxu0 0.0
    %4112 = vmatpush2.msra.mxu0 0.0
    %4113 = vmatprep.subr.mxu0 0.0
    %4114 = vmatpush2.msra.mxu0 0.0
    %4115 = vmatprep.subr.mxu0 0.0
    %4116 = vmatpush2.msra.mxu0 0.0
    %4117 = vmatprep.subr.mxu0 0.0
    %4118 = vmatpush2.msra.mxu0 0.0
    %4119 = vmatprep.subr.mxu0 0.0
    %4120 = vmatpush2.msra.mxu0 0.0
    %4121 = vmatprep.subr.mxu0 0.0
    %4122 = vmatpush2.msra.mxu0 0.0
    %4123 = vmatprep.subr.mxu0 0.0
    %4124 = vmatpush2.msra.mxu0 0.0
    %4125 = vmatprep.subr.mxu0 0.0
    %4126 = vmatpush2.msra.mxu0 0.0
    %4127 = vmatprep.subr.mxu0 0.0
    %4128 = vmatpush2.msra.mxu0 0.0
    %4129 = vmatprep.subr.mxu0 0.0
    %4130 = vmatpush2.msra.mxu0 0.0
    %4131 = vmatprep.subr.mxu0 0.0
    %4132 = vmatpush2.msra.mxu0 0.0
    %4133 = vmatprep.subr.mxu0 0.0
    %4134 = vmatpush2.msra.mxu0 0.0
    %4135 = vmatprep.subr.mxu0 0.0
    %4136 = vmatpush2.msra.mxu0 0.0
    %4137 = vmatprep.subr.mxu0 0.0
    %4138 = vmatpush2.msra.mxu0 0.0
    %4139 = vmatprep.subr.mxu0 0.0
    %4140 = vmatpush2.msra.mxu0 0.0
    %4141 = vmatprep.mubr.f32.mxu0 0.0
    %4142 = vmatmul.mubr.f32.gmra.mxu0 %v4075
    %v4143 = vpop.f32.mrf.mxu0
    %v4144 = vadd.f32 0.0, %v4143
    %v4145 = vpop.f32.mrf.mxu0
    %4146 = vdwg.mxu0
    %v4147 = vld [vmem:[%s1647] sm:$0xff]
    %v4148 = vld [vmem:[%s1647 + $0x8] sm:$0xff]
    %v4149 = vld [vmem:[%s1647 + $0x10] sm:$0xff]
    %v4150 = vld [vmem:[%s1647 + $0x18] sm:$0xff]
    %v4151 = vld [vmem:[%s1647 + $0x20] sm:$0xff]
    %v4152 = vld [vmem:[%s1647 + $0x28] sm:$0xff]
    %v4153 = vld [vmem:[%s1647 + $0x30] sm:$0xff]
    %v4154 = vld [vmem:[%s1647 + $0x38] sm:$0xff]
    %v4155 = vld [vmem:[%s1647 + $0x40] sm:$0xff]
    %v4156 = vld [vmem:[%s1647 + $0x48] sm:$0xff]
    %v4157 = vld [vmem:[%s1647 + $0x50] sm:$0xff]
    %v4158 = vld [vmem:[%s1647 + $0x58] sm:$0xff]
    %v4159 = vld [vmem:[%s1647 + $0x60] sm:$0xff]
    %v4160 = vld [vmem:[%s1647 + $0x68] sm:$0xff]
    %v4161 = vld [vmem:[%s1647 + $0x70] sm:$0xff]
    %v4162 = vld [vmem:[%s1647 + $0x78] sm:$0xff]
    %4163 = vmatprep.subr.mxu0 0.0
    %4164 = vmatpush1.msra.mxu0 %v4162
    %4165 = vmatprep.subr.mxu0 0.0
    %4166 = vmatpush1.msra.mxu0 %v4161
    %4167 = vmatprep.subr.mxu0 0.0
    %4168 = vmatpush1.msra.mxu0 %v4160
    %4169 = vmatprep.subr.mxu0 0.0
    %4170 = vmatpush1.msra.mxu0 %v4159
    %4171 = vmatprep.subr.mxu0 0.0
    %4172 = vmatpush1.msra.mxu0 %v4158
    %4173 = vmatprep.subr.mxu0 0.0
    %4174 = vmatpush1.msra.mxu0 %v4157
    %4175 = vmatprep.subr.mxu0 0.0
    %4176 = vmatpush1.msra.mxu0 %v4156
    %4177 = vmatprep.subr.mxu0 0.0
    %4178 = vmatpush1.msra.mxu0 %v4155
    %4179 = vmatprep.subr.mxu0 0.0
    %4180 = vmatpush1.msra.mxu0 %v4154
    %4181 = vmatprep.subr.mxu0 0.0
    %4182 = vmatpush1.msra.mxu0 %v4153
    %4183 = vmatprep.subr.mxu0 0.0
    %4184 = vmatpush1.msra.mxu0 %v4152
    %4185 = vmatprep.subr.mxu0 0.0
    %4186 = vmatpush1.msra.mxu0 %v4151
    %4187 = vmatprep.subr.mxu0 0.0
    %4188 = vmatpush1.msra.mxu0 %v4150
    %4189 = vmatprep.subr.mxu0 0.0
    %4190 = vmatpush1.msra.mxu0 %v4149
    %4191 = vmatprep.subr.mxu0 0.0
    %4192 = vmatpush1.msra.mxu0 %v4148
    %4193 = vmatprep.subr.mxu0 0.0
    %4194 = vmatpush1.msra.mxu0 %v4147
    %4195 = vmatprep.subr.mxu0 0.0
    %4196 = vmatpush2.msra.mxu0 0.0
    %4197 = vmatprep.subr.mxu0 0.0
    %4198 = vmatpush2.msra.mxu0 0.0
    %4199 = vmatprep.subr.mxu0 0.0
    %4200 = vmatpush2.msra.mxu0 0.0
    %4201 = vmatprep.subr.mxu0 0.0
    %4202 = vmatpush2.msra.mxu0 0.0
    %4203 = vmatprep.subr.mxu0 0.0
    %4204 = vmatpush2.msra.mxu0 0.0
    %4205 = vmatprep.subr.mxu0 0.0
    %4206 = vmatpush2.msra.mxu0 0.0
    %4207 = vmatprep.subr.mxu0 0.0
    %4208 = vmatpush2.msra.mxu0 0.0
    %4209 = vmatprep.subr.mxu0 0.0
    %4210 = vmatpush2.msra.mxu0 0.0
    %4211 = vmatprep.subr.mxu0 0.0
    %4212 = vmatpush2.msra.mxu0 0.0
    %4213 = vmatprep.subr.mxu0 0.0
    %4214 = vmatpush2.msra.mxu0 0.0
    %4215 = vmatprep.subr.mxu0 0.0
    %4216 = vmatpush2.msra.mxu0 0.0
    %4217 = vmatprep.subr.mxu0 0.0
    %4218 = vmatpush2.msra.mxu0 0.0
    %4219 = vmatprep.subr.mxu0 0.0
    %4220 = vmatpush2.msra.mxu0 0.0
    %4221 = vmatprep.subr.mxu0 0.0
    %4222 = vmatpush2.msra.mxu0 0.0
    %4223 = vmatprep.subr.mxu0 0.0
    %4224 = vmatpush2.msra.mxu0 0.0
    %4225 = vmatprep.subr.mxu0 0.0
    %4226 = vmatpush2.msra.mxu0 0.0
    %4227 = vmatprep.mubr.f32.mxu0 0.0
    %4228 = vmatmul.mubr.f32.gmra.mxu0 %v4075
    %v4229 = vpop.f32.mrf.mxu0
    %v4230 = vadd.f32 0.0, %v4229
    %v4231 = vpop.f32.mrf.mxu0
    %4232 = vdwg.mxu0
    %v4233 = vadd.f32 %v3975, %v4144
    %v4234 = vadd.f32 %v4045, %v4230
    %v4235 = vld [vmem:[%s1736] sm:$0xff]
    %v4236 = vld [vmem:[%s1736 + $0x8] sm:$0xff]
    %v4237 = vld [vmem:[%s1736 + $0x10] sm:$0xff]
    %v4238 = vld [vmem:[%s1736 + $0x18] sm:$0xff]
    %v4239 = vld [vmem:[%s1736 + $0x20] sm:$0xff]
    %v4240 = vld [vmem:[%s1736 + $0x28] sm:$0xff]
    %v4241 = vld [vmem:[%s1736 + $0x30] sm:$0xff]
    %v4242 = vld [vmem:[%s1736 + $0x38] sm:$0xff]
    %v4243 = vld [vmem:[%s1736 + $0x40] sm:$0xff]
    %v4244 = vld [vmem:[%s1736 + $0x48] sm:$0xff]
    %v4245 = vld [vmem:[%s1736 + $0x50] sm:$0xff]
    %v4246 = vld [vmem:[%s1736 + $0x58] sm:$0xff]
    %v4247 = vld [vmem:[%s1736 + $0x60] sm:$0xff]
    %v4248 = vld [vmem:[%s1736 + $0x68] sm:$0xff]
    %v4249 = vld [vmem:[%s1736 + $0x70] sm:$0xff]
    %v4250 = vld [vmem:[%s1736 + $0x78] sm:$0xff]
    %v4252 = vlaneseq
    %v4253 = vshrl.u32 %v4252, 7
    %v4254 = vsub.s32 0, %v4253
    %v4255 = vrot.slane %v3641, %v4254
    %v4256 = vsel %vm1222, %v3714, %v3710
    %v4257 = vsel %vm1224, %v3718, %v4256
    %v4258 = vsel %vm1226, %v3722, %v4257
    %v4259 = vsel %vm1228, %v3726, %v4258
    %v4260 = vsel %vm1230, %v3730, %v4259
    %v4261 = vsel %vm1232, %v4068, %v4260
    %v4262 = vsel %vm1234, %v4255, %v4261
    %4264 = vmatprep.subr.mxu0 0.0
    %4265 = vmatpush1.msra.mxu0 %v4250
    %4266 = vmatprep.subr.mxu0 0.0
    %4267 = vmatpush1.msra.mxu0 %v4249
    %4268 = vmatprep.subr.mxu0 0.0
    %4269 = vmatpush1.msra.mxu0 %v4248
    %4270 = vmatprep.subr.mxu0 0.0
    %4271 = vmatpush1.msra.mxu0 %v4247
    %4272 = vmatprep.subr.mxu0 0.0
    %4273 = vmatpush1.msra.mxu0 %v4246
    %4274 = vmatprep.subr.mxu0 0.0
    %4275 = vmatpush1.msra.mxu0 %v4245
    %4276 = vmatprep.subr.mxu0 0.0
    %4277 = vmatpush1.msra.mxu0 %v4244
    %4278 = vmatprep.subr.mxu0 0.0
    %4279 = vmatpush1.msra.mxu0 %v4243
    %4280 = vmatprep.subr.mxu0 0.0
    %4281 = vmatpush1.msra.mxu0 %v4242
    %4282 = vmatprep.subr.mxu0 0.0
    %4283 = vmatpush1.msra.mxu0 %v4241
    %4284 = vmatprep.subr.mxu0 0.0
    %4285 = vmatpush1.msra.mxu0 %v4240
    %4286 = vmatprep.subr.mxu0 0.0
    %4287 = vmatpush1.msra.mxu0 %v4239
    %4288 = vmatprep.subr.mxu0 0.0
    %4289 = vmatpush1.msra.mxu0 %v4238
    %4290 = vmatprep.subr.mxu0 0.0
    %4291 = vmatpush1.msra.mxu0 %v4237
    %4292 = vmatprep.subr.mxu0 0.0
    %4293 = vmatpush1.msra.mxu0 %v4236
    %4294 = vmatprep.subr.mxu0 0.0
    %4295 = vmatpush1.msra.mxu0 %v4235
    %4296 = vmatprep.subr.mxu0 0.0
    %4297 = vmatpush2.msra.mxu0 0.0
    %4298 = vmatprep.subr.mxu0 0.0
    %4299 = vmatpush2.msra.mxu0 0.0
    %4300 = vmatprep.subr.mxu0 0.0
    %4301 = vmatpush2.msra.mxu0 0.0
    %4302 = vmatprep.subr.mxu0 0.0
    %4303 = vmatpush2.msra.mxu0 0.0
    %4304 = vmatprep.subr.mxu0 0.0
    %4305 = vmatpush2.msra.mxu0 0.0
    %4306 = vmatprep.subr.mxu0 0.0
    %4307 = vmatpush2.msra.mxu0 0.0
    %4308 = vmatprep.subr.mxu0 0.0
    %4309 = vmatpush2.msra.mxu0 0.0
    %4310 = vmatprep.subr.mxu0 0.0
    %4311 = vmatpush2.msra.mxu0 0.0
    %4312 = vmatprep.subr.mxu0 0.0
    %4313 = vmatpush2.msra.mxu0 0.0
    %4314 = vmatprep.subr.mxu0 0.0
    %4315 = vmatpush2.msra.mxu0 0.0
    %4316 = vmatprep.subr.mxu0 0.0
    %4317 = vmatpush2.msra.mxu0 0.0
    %4318 = vmatprep.subr.mxu0 0.0
    %4319 = vmatpush2.msra.mxu0 0.0
    %4320 = vmatprep.subr.mxu0 0.0
    %4321 = vmatpush2.msra.mxu0 0.0
    %4322 = vmatprep.subr.mxu0 0.0
    %4323 = vmatpush2.msra.mxu0 0.0
    %4324 = vmatprep.subr.mxu0 0.0
    %4325 = vmatpush2.msra.mxu0 0.0
    %4326 = vmatprep.subr.mxu0 0.0
    %4327 = vmatpush2.msra.mxu0 0.0
    %4328 = vmatprep.mubr.f32.mxu0 0.0
    %4329 = vmatmul.mubr.f32.gmra.mxu0 %v4262
    %v4330 = vpop.f32.mrf.mxu0
    %v4331 = vadd.f32 0.0, %v4330
    %v4332 = vpop.f32.mrf.mxu0
    %4333 = vdwg.mxu0
    %v4334 = vld [vmem:[%s1836] sm:$0xff]
    %v4335 = vld [vmem:[%s1836 + $0x8] sm:$0xff]
    %v4336 = vld [vmem:[%s1836 + $0x10] sm:$0xff]
    %v4337 = vld [vmem:[%s1836 + $0x18] sm:$0xff]
    %v4338 = vld [vmem:[%s1836 + $0x20] sm:$0xff]
    %v4339 = vld [vmem:[%s1836 + $0x28] sm:$0xff]
    %v4340 = vld [vmem:[%s1836 + $0x30] sm:$0xff]
    %v4341 = vld [vmem:[%s1836 + $0x38] sm:$0xff]
    %v4342 = vld [vmem:[%s1836 + $0x40] sm:$0xff]
    %v4343 = vld [vmem:[%s1836 + $0x48] sm:$0xff]
    %v4344 = vld [vmem:[%s1836 + $0x50] sm:$0xff]
    %v4345 = vld [vmem:[%s1836 + $0x58] sm:$0xff]
    %v4346 = vld [vmem:[%s1836 + $0x60] sm:$0xff]
    %v4347 = vld [vmem:[%s1836 + $0x68] sm:$0xff]
    %v4348 = vld [vmem:[%s1836 + $0x70] sm:$0xff]
    %v4349 = vld [vmem:[%s1836 + $0x78] sm:$0xff]
    %4350 = vmatprep.subr.mxu0 0.0
    %4351 = vmatpush1.msra.mxu0 %v4349
    %4352 = vmatprep.subr.mxu0 0.0
    %4353 = vmatpush1.msra.mxu0 %v4348
    %4354 = vmatprep.subr.mxu0 0.0
    %4355 = vmatpush1.msra.mxu0 %v4347
    %4356 = vmatprep.subr.mxu0 0.0
    %4357 = vmatpush1.msra.mxu0 %v4346
    %4358 = vmatprep.subr.mxu0 0.0
    %4359 = vmatpush1.msra.mxu0 %v4345
    %4360 = vmatprep.subr.mxu0 0.0
    %4361 = vmatpush1.msra.mxu0 %v4344
    %4362 = vmatprep.subr.mxu0 0.0
    %4363 = vmatpush1.msra.mxu0 %v4343
    %4364 = vmatprep.subr.mxu0 0.0
    %4365 = vmatpush1.msra.mxu0 %v4342
    %4366 = vmatprep.subr.mxu0 0.0
    %4367 = vmatpush1.msra.mxu0 %v4341
    %4368 = vmatprep.subr.mxu0 0.0
    %4369 = vmatpush1.msra.mxu0 %v4340
    %4370 = vmatprep.subr.mxu0 0.0
    %4371 = vmatpush1.msra.mxu0 %v4339
    %4372 = vmatprep.subr.mxu0 0.0
    %4373 = vmatpush1.msra.mxu0 %v4338
    %4374 = vmatprep.subr.mxu0 0.0
    %4375 = vmatpush1.msra.mxu0 %v4337
    %4376 = vmatprep.subr.mxu0 0.0
    %4377 = vmatpush1.msra.mxu0 %v4336
    %4378 = vmatprep.subr.mxu0 0.0
    %4379 = vmatpush1.msra.mxu0 %v4335
    %4380 = vmatprep.subr.mxu0 0.0
    %4381 = vmatpush1.msra.mxu0 %v4334
    %4382 = vmatprep.subr.mxu0 0.0
    %4383 = vmatpush2.msra.mxu0 0.0
    %4384 = vmatprep.subr.mxu0 0.0
    %4385 = vmatpush2.msra.mxu0 0.0
    %4386 = vmatprep.subr.mxu0 0.0
    %4387 = vmatpush2.msra.mxu0 0.0
    %4388 = vmatprep.subr.mxu0 0.0
    %4389 = vmatpush2.msra.mxu0 0.0
    %4390 = vmatprep.subr.mxu0 0.0
    %4391 = vmatpush2.msra.mxu0 0.0
    %4392 = vmatprep.subr.mxu0 0.0
    %4393 = vmatpush2.msra.mxu0 0.0
    %4394 = vmatprep.subr.mxu0 0.0
    %4395 = vmatpush2.msra.mxu0 0.0
    %4396 = vmatprep.subr.mxu0 0.0
    %4397 = vmatpush2.msra.mxu0 0.0
    %4398 = vmatprep.subr.mxu0 0.0
    %4399 = vmatpush2.msra.mxu0 0.0
    %4400 = vmatprep.subr.mxu0 0.0
    %4401 = vmatpush2.msra.mxu0 0.0
    %4402 = vmatprep.subr.mxu0 0.0
    %4403 = vmatpush2.msra.mxu0 0.0
    %4404 = vmatprep.subr.mxu0 0.0
    %4405 = vmatpush2.msra.mxu0 0.0
    %4406 = vmatprep.subr.mxu0 0.0
    %4407 = vmatpush2.msra.mxu0 0.0
    %4408 = vmatprep.subr.mxu0 0.0
    %4409 = vmatpush2.msra.mxu0 0.0
    %4410 = vmatprep.subr.mxu0 0.0
    %4411 = vmatpush2.msra.mxu0 0.0
    %4412 = vmatprep.subr.mxu0 0.0
    %4413 = vmatpush2.msra.mxu0 0.0
    %4414 = vmatprep.mubr.f32.mxu0 0.0
    %4415 = vmatmul.mubr.f32.gmra.mxu0 %v4262
    %v4416 = vpop.f32.mrf.mxu0
    %v4417 = vadd.f32 0.0, %v4416
    %v4418 = vpop.f32.mrf.mxu0
    %4419 = vdwg.mxu0
    %v4420 = vadd.f32 %v4233, %v4331
    %v4421 = vadd.f32 %v4234, %v4417
    %v4422 = vld [vmem:[%s1925] sm:$0xff]
    %v4423 = vld [vmem:[%s1925 + $0x8] sm:$0xff]
    %v4424 = vld [vmem:[%s1925 + $0x10] sm:$0xff]
    %v4425 = vld [vmem:[%s1925 + $0x18] sm:$0xff]
    %v4426 = vld [vmem:[%s1925 + $0x20] sm:$0xff]
    %v4427 = vld [vmem:[%s1925 + $0x28] sm:$0xff]
    %v4428 = vld [vmem:[%s1925 + $0x30] sm:$0xff]
    %v4429 = vld [vmem:[%s1925 + $0x38] sm:$0xff]
    %v4430 = vld [vmem:[%s1925 + $0x40] sm:$0xff]
    %v4431 = vld [vmem:[%s1925 + $0x48] sm:$0xff]
    %v4432 = vld [vmem:[%s1925 + $0x50] sm:$0xff]
    %v4433 = vld [vmem:[%s1925 + $0x58] sm:$0xff]
    %v4434 = vld [vmem:[%s1925 + $0x60] sm:$0xff]
    %v4435 = vld [vmem:[%s1925 + $0x68] sm:$0xff]
    %v4436 = vld [vmem:[%s1925 + $0x70] sm:$0xff]
    %v4437 = vld [vmem:[%s1925 + $0x78] sm:$0xff]
    %v4439 = vlaneseq
    %v4440 = vshrl.u32 %v4439, 7
    %v4441 = vsub.s32 0, %v4440
    %v4442 = vrot.slane %v3642, %v4441
    %v4443 = vsel %vm1222, %v3718, %v3714
    %v4444 = vsel %vm1224, %v3722, %v4443
    %v4445 = vsel %vm1226, %v3726, %v4444
    %v4446 = vsel %vm1228, %v3730, %v4445
    %v4447 = vsel %vm1230, %v4068, %v4446
    %v4448 = vsel %vm1232, %v4255, %v4447
    %v4449 = vsel %vm1234, %v4442, %v4448
    %4451 = vmatprep.subr.mxu0 0.0
    %4452 = vmatpush1.msra.mxu0 %v4437
    %4453 = vmatprep.subr.mxu0 0.0
    %4454 = vmatpush1.msra.mxu0 %v4436
    %4455 = vmatprep.subr.mxu0 0.0
    %4456 = vmatpush1.msra.mxu0 %v4435
    %4457 = vmatprep.subr.mxu0 0.0
    %4458 = vmatpush1.msra.mxu0 %v4434
    %4459 = vmatprep.subr.mxu0 0.0
    %4460 = vmatpush1.msra.mxu0 %v4433
    %4461 = vmatprep.subr.mxu0 0.0
    %4462 = vmatpush1.msra.mxu0 %v4432
    %4463 = vmatprep.subr.mxu0 0.0
    %4464 = vmatpush1.msra.mxu0 %v4431
    %4465 = vmatprep.subr.mxu0 0.0
    %4466 = vmatpush1.msra.mxu0 %v4430
    %4467 = vmatprep.subr.mxu0 0.0
    %4468 = vmatpush1.msra.mxu0 %v4429
    %4469 = vmatprep.subr.mxu0 0.0
    %4470 = vmatpush1.msra.mxu0 %v4428
    %4471 = vmatprep.subr.mxu0 0.0
    %4472 = vmatpush1.msra.mxu0 %v4427
    %4473 = vmatprep.subr.mxu0 0.0
    %4474 = vmatpush1.msra.mxu0 %v4426
    %4475 = vmatprep.subr.mxu0 0.0
    %4476 = vmatpush1.msra.mxu0 %v4425
    %4477 = vmatprep.subr.mxu0 0.0
    %4478 = vmatpush1.msra.mxu0 %v4424
    %4479 = vmatprep.subr.mxu0 0.0
    %4480 = vmatpush1.msra.mxu0 %v4423
    %4481 = vmatprep.subr.mxu0 0.0
    %4482 = vmatpush1.msra.mxu0 %v4422
    %4483 = vmatprep.subr.mxu0 0.0
    %4484 = vmatpush2.msra.mxu0 0.0
    %4485 = vmatprep.subr.mxu0 0.0
    %4486 = vmatpush2.msra.mxu0 0.0
    %4487 = vmatprep.subr.mxu0 0.0
    %4488 = vmatpush2.msra.mxu0 0.0
    %4489 = vmatprep.subr.mxu0 0.0
    %4490 = vmatpush2.msra.mxu0 0.0
    %4491 = vmatprep.subr.mxu0 0.0
    %4492 = vmatpush2.msra.mxu0 0.0
    %4493 = vmatprep.subr.mxu0 0.0
    %4494 = vmatpush2.msra.mxu0 0.0
    %4495 = vmatprep.subr.mxu0 0.0
    %4496 = vmatpush2.msra.mxu0 0.0
    %4497 = vmatprep.subr.mxu0 0.0
    %4498 = vmatpush2.msra.mxu0 0.0
    %4499 = vmatprep.subr.mxu0 0.0
    %4500 = vmatpush2.msra.mxu0 0.0
    %4501 = vmatprep.subr.mxu0 0.0
    %4502 = vmatpush2.msra.mxu0 0.0
    %4503 = vmatprep.subr.mxu0 0.0
    %4504 = vmatpush2.msra.mxu0 0.0
    %4505 = vmatprep.subr.mxu0 0.0
    %4506 = vmatpush2.msra.mxu0 0.0
    %4507 = vmatprep.subr.mxu0 0.0
    %4508 = vmatpush2.msra.mxu0 0.0
    %4509 = vmatprep.subr.mxu0 0.0
    %4510 = vmatpush2.msra.mxu0 0.0
    %4511 = vmatprep.subr.mxu0 0.0
    %4512 = vmatpush2.msra.mxu0 0.0
    %4513 = vmatprep.subr.mxu0 0.0
    %4514 = vmatpush2.msra.mxu0 0.0
    %4515 = vmatprep.mubr.f32.mxu0 0.0
    %4516 = vmatmul.mubr.f32.gmra.mxu0 %v4449
    %v4517 = vpop.f32.mrf.mxu0
    %v4518 = vadd.f32 0.0, %v4517
    %v4519 = vpop.f32.mrf.mxu0
    %4520 = vdwg.mxu0
    %v4521 = vld [vmem:[%s2025] sm:$0xff]
    %v4522 = vld [vmem:[%s2025 + $0x8] sm:$0xff]
    %v4523 = vld [vmem:[%s2025 + $0x10] sm:$0xff]
    %v4524 = vld [vmem:[%s2025 + $0x18] sm:$0xff]
    %v4525 = vld [vmem:[%s2025 + $0x20] sm:$0xff]
    %v4526 = vld [vmem:[%s2025 + $0x28] sm:$0xff]
    %v4527 = vld [vmem:[%s2025 + $0x30] sm:$0xff]
    %v4528 = vld [vmem:[%s2025 + $0x38] sm:$0xff]
    %v4529 = vld [vmem:[%s2025 + $0x40] sm:$0xff]
    %v4530 = vld [vmem:[%s2025 + $0x48] sm:$0xff]
    %v4531 = vld [vmem:[%s2025 + $0x50] sm:$0xff]
    %v4532 = vld [vmem:[%s2025 + $0x58] sm:$0xff]
    %v4533 = vld [vmem:[%s2025 + $0x60] sm:$0xff]
    %v4534 = vld [vmem:[%s2025 + $0x68] sm:$0xff]
    %v4535 = vld [vmem:[%s2025 + $0x70] sm:$0xff]
    %v4536 = vld [vmem:[%s2025 + $0x78] sm:$0xff]
    %4537 = vmatprep.subr.mxu0 0.0
    %4538 = vmatpush1.msra.mxu0 %v4536
    %4539 = vmatprep.subr.mxu0 0.0
    %4540 = vmatpush1.msra.mxu0 %v4535
    %4541 = vmatprep.subr.mxu0 0.0
    %4542 = vmatpush1.msra.mxu0 %v4534
    %4543 = vmatprep.subr.mxu0 0.0
    %4544 = vmatpush1.msra.mxu0 %v4533
    %4545 = vmatprep.subr.mxu0 0.0
    %4546 = vmatpush1.msra.mxu0 %v4532
    %4547 = vmatprep.subr.mxu0 0.0
    %4548 = vmatpush1.msra.mxu0 %v4531
    %4549 = vmatprep.subr.mxu0 0.0
    %4550 = vmatpush1.msra.mxu0 %v4530
    %4551 = vmatprep.subr.mxu0 0.0
    %4552 = vmatpush1.msra.mxu0 %v4529
    %4553 = vmatprep.subr.mxu0 0.0
    %4554 = vmatpush1.msra.mxu0 %v4528
    %4555 = vmatprep.subr.mxu0 0.0
    %4556 = vmatpush1.msra.mxu0 %v4527
    %4557 = vmatprep.subr.mxu0 0.0
    %4558 = vmatpush1.msra.mxu0 %v4526
    %4559 = vmatprep.subr.mxu0 0.0
    %4560 = vmatpush1.msra.mxu0 %v4525
    %4561 = vmatprep.subr.mxu0 0.0
    %4562 = vmatpush1.msra.mxu0 %v4524
    %4563 = vmatprep.subr.mxu0 0.0
    %4564 = vmatpush1.msra.mxu0 %v4523
    %4565 = vmatprep.subr.mxu0 0.0
    %4566 = vmatpush1.msra.mxu0 %v4522
    %4567 = vmatprep.subr.mxu0 0.0
    %4568 = vmatpush1.msra.mxu0 %v4521
    %4569 = vmatprep.subr.mxu0 0.0
    %4570 = vmatpush2.msra.mxu0 0.0
    %4571 = vmatprep.subr.mxu0 0.0
    %4572 = vmatpush2.msra.mxu0 0.0
    %4573 = vmatprep.subr.mxu0 0.0
    %4574 = vmatpush2.msra.mxu0 0.0
    %4575 = vmatprep.subr.mxu0 0.0
    %4576 = vmatpush2.msra.mxu0 0.0
    %4577 = vmatprep.subr.mxu0 0.0
    %4578 = vmatpush2.msra.mxu0 0.0
    %4579 = vmatprep.subr.mxu0 0.0
    %4580 = vmatpush2.msra.mxu0 0.0
    %4581 = vmatprep.subr.mxu0 0.0
    %4582 = vmatpush2.msra.mxu0 0.0
    %4583 = vmatprep.subr.mxu0 0.0
    %4584 = vmatpush2.msra.mxu0 0.0
    %4585 = vmatprep.subr.mxu0 0.0
    %4586 = vmatpush2.msra.mxu0 0.0
    %4587 = vmatprep.subr.mxu0 0.0
    %4588 = vmatpush2.msra.mxu0 0.0
    %4589 = vmatprep.subr.mxu0 0.0
    %4590 = vmatpush2.msra.mxu0 0.0
    %4591 = vmatprep.subr.mxu0 0.0
    %4592 = vmatpush2.msra.mxu0 0.0
    %4593 = vmatprep.subr.mxu0 0.0
    %4594 = vmatpush2.msra.mxu0 0.0
    %4595 = vmatprep.subr.mxu0 0.0
    %4596 = vmatpush2.msra.mxu0 0.0
    %4597 = vmatprep.subr.mxu0 0.0
    %4598 = vmatpush2.msra.mxu0 0.0
    %4599 = vmatprep.subr.mxu0 0.0
    %4600 = vmatpush2.msra.mxu0 0.0
    %4601 = vmatprep.mubr.f32.mxu0 0.0
    %4602 = vmatmul.mubr.f32.gmra.mxu0 %v4449
    %v4603 = vpop.f32.mrf.mxu0
    %v4604 = vadd.f32 0.0, %v4603
    %v4605 = vpop.f32.mrf.mxu0
    %4606 = vdwg.mxu0
    %v4607 = vadd.f32 %v4420, %v4518
    %v4608 = vadd.f32 %v4421, %v4604
    %v4609 = vadd.f32 %v4607, %v2118
    %v4610 = vmax.f32 %v4609, 0.0
    %v4611 = vadd.f32 %v4608, %v2118
    %v4612 = vmax.f32 %v4611, 0.0
    %v4613 = vmax.f32 %v4610, %v4612
    %v4615 = vcombine.high %v4613, %v4613
    %v4617 = vunpack.c.l.s4 1983009808
    %v4618 = vunpack.c.0.s8 %v4617
    %v4619 = vlaneseq
    %v4620 = vshrl.u32 %v4619, 7
    %v4621 = vsub.s32 %v4618, %v4620
    %v4622 = vrot.slane %v4613, %v4621
    %v4624 = vunpack.c.l.s4 1983009808
    %v4625 = vunpack.c.0.s8 %v4624
    %v4626 = vlaneseq
    %v4627 = vshrl.u32 %v4626, 7
    %v4628 = vsub.s32 %v4625, %v4627
    %v4629 = vrot.slane %v4615, %v4628
    %v4630 = vcombine.high %v4622, %v4622
    %v4631 = vcombine.high %v4629, %v4629
    %v4636 = vrot.slane %v4622, 7
    %v4637 = vrot.slane %v4636, 2
    %v4638 = vrot.slane %v4630, 7
    %v4639 = vrot.slane %v4638, 2
    %v4640 = vrot.slane %v4629, 7
    %v4641 = vrot.slane %v4640, 2
    %v4642 = vrot.slane %v4631, 7
    %v4643 = vrot.slane %v4642, 2
    %v4648 = vmax.f32 %v4622, %v4637
    %v4649 = vmax.f32 %v4630, %v4639
    %v4650 = vmax.f32 %v4629, %v4641
    %v4651 = vmax.f32 %v4631, %v4643
    %v4652 = vld [vmem:[%s5] sm:$0xff]
    %v4653 = vld [vmem:[%s5 + $0x8] sm:$0xff]
    %v4654 = vld [vmem:[%s5 + $0x10] sm:$0xff]
    %v4655 = vld [vmem:[%s5 + $0x18] sm:$0xff]
    %v4656 = vld [vmem:[%s5 + $0x20] sm:$0xff]
    %v4657 = vld [vmem:[%s5 + $0x28] sm:$0xff]
    %v4658 = vld [vmem:[%s5 + $0x30] sm:$0xff]
    %v4659 = vld [vmem:[%s5 + $0x38] sm:$0xff]
    %v4660 = vld [vmem:[%s5 + $0x40] sm:$0xff]
    %v4661 = vld [vmem:[%s5 + $0x48] sm:$0xff]
    %v4662 = vld [vmem:[%s5 + $0x50] sm:$0xff]
    %v4663 = vld [vmem:[%s5 + $0x58] sm:$0xff]
    %v4664 = vld [vmem:[%s5 + $0x60] sm:$0xff]
    %v4665 = vld [vmem:[%s5 + $0x68] sm:$0xff]
    %v4666 = vld [vmem:[%s5 + $0x70] sm:$0xff]
    %v4667 = vld [vmem:[%s5 + $0x78] sm:$0xff]
    %4668 = vmatprep.subr.mxu0 0.0
    %4669 = vmatpush1.msra.mxu0 %v4667
    %4670 = vmatprep.subr.mxu0 0.0
    %4671 = vmatpush1.msra.mxu0 %v4666
    %4672 = vmatprep.subr.mxu0 0.0
    %4673 = vmatpush1.msra.mxu0 %v4665
    %4674 = vmatprep.subr.mxu0 0.0
    %4675 = vmatpush1.msra.mxu0 %v4664
    %4676 = vmatprep.subr.mxu0 0.0
    %4677 = vmatpush1.msra.mxu0 %v4663
    %4678 = vmatprep.subr.mxu0 0.0
    %4679 = vmatpush1.msra.mxu0 %v4662
    %4680 = vmatprep.subr.mxu0 0.0
    %4681 = vmatpush1.msra.mxu0 %v4661
    %4682 = vmatprep.subr.mxu0 0.0
    %4683 = vmatpush1.msra.mxu0 %v4660
    %4684 = vmatprep.subr.mxu0 0.0
    %4685 = vmatpush1.msra.mxu0 %v4659
    %4686 = vmatprep.subr.mxu0 0.0
    %4687 = vmatpush1.msra.mxu0 %v4658
    %4688 = vmatprep.subr.mxu0 0.0
    %4689 = vmatpush1.msra.mxu0 %v4657
    %4690 = vmatprep.subr.mxu0 0.0
    %4691 = vmatpush1.msra.mxu0 %v4656
    %4692 = vmatprep.subr.mxu0 0.0
    %4693 = vmatpush1.msra.mxu0 %v4655
    %4694 = vmatprep.subr.mxu0 0.0
    %4695 = vmatpush1.msra.mxu0 %v4654
    %4696 = vmatprep.subr.mxu0 0.0
    %4697 = vmatpush1.msra.mxu0 %v4653
    %4698 = vmatprep.subr.mxu0 0.0
    %4699 = vmatpush1.msra.mxu0 %v4652
    %4700 = vmatprep.subr.mxu0 0.0
    %4701 = vmatpush2.msra.mxu0 0.0
    %4702 = vmatprep.subr.mxu0 0.0
    %4703 = vmatpush2.msra.mxu0 0.0
    %4704 = vmatprep.subr.mxu0 0.0
    %4705 = vmatpush2.msra.mxu0 0.0
    %4706 = vmatprep.subr.mxu0 0.0
    %4707 = vmatpush2.msra.mxu0 0.0
    %4708 = vmatprep.subr.mxu0 0.0
    %4709 = vmatpush2.msra.mxu0 0.0
    %4710 = vmatprep.subr.mxu0 0.0
    %4711 = vmatpush2.msra.mxu0 0.0
    %4712 = vmatprep.subr.mxu0 0.0
    %4713 = vmatpush2.msra.mxu0 0.0
    %4714 = vmatprep.subr.mxu0 0.0
    %4715 = vmatpush2.msra.mxu0 0.0
    %4716 = vmatprep.subr.mxu0 0.0
    %4717 = vmatpush2.msra.mxu0 0.0
    %4718 = vmatprep.subr.mxu0 0.0
    %4719 = vmatpush2.msra.mxu0 0.0
    %4720 = vmatprep.subr.mxu0 0.0
    %4721 = vmatpush2.msra.mxu0 0.0
    %4722 = vmatprep.subr.mxu0 0.0
    %4723 = vmatpush2.msra.mxu0 0.0
    %4724 = vmatprep.subr.mxu0 0.0
    %4725 = vmatpush2.msra.mxu0 0.0
    %4726 = vmatprep.subr.mxu0 0.0
    %4727 = vmatpush2.msra.mxu0 0.0
    %4728 = vmatprep.subr.mxu0 0.0
    %4729 = vmatpush2.msra.mxu0 0.0
    %4730 = vmatprep.subr.mxu0 0.0
    %4731 = vmatpush2.msra.mxu0 0.0
    %4732 = vmatprep.mubr.f32.mxu0 0.0
    %4733 = vmatmul.mubr.f32.gmra.mxu0 %v4648
    %v4734 = vpop.f32.mrf.mxu0
    %v4735 = vadd.f32 0.0, %v4734
    %v4736 = vpop.f32.mrf.mxu0
    %4737 = vdwg.mxu0
    %v4738 = vadd.f32 %v49, %v4735
    %v4739 = vld [vmem:[%s2250] sm:$0xff]
    %v4740 = vld [vmem:[%s2250 + $0x8] sm:$0xff]
    %v4741 = vld [vmem:[%s2250 + $0x10] sm:$0xff]
    %v4742 = vld [vmem:[%s2250 + $0x18] sm:$0xff]
    %v4743 = vld [vmem:[%s2250 + $0x20] sm:$0xff]
    %v4744 = vld [vmem:[%s2250 + $0x28] sm:$0xff]
    %v4745 = vld [vmem:[%s2250 + $0x30] sm:$0xff]
    %v4746 = vld [vmem:[%s2250 + $0x38] sm:$0xff]
    %v4747 = vld [vmem:[%s2250 + $0x40] sm:$0xff]
    %v4748 = vld [vmem:[%s2250 + $0x48] sm:$0xff]
    %v4749 = vld [vmem:[%s2250 + $0x50] sm:$0xff]
    %v4750 = vld [vmem:[%s2250 + $0x58] sm:$0xff]
    %v4751 = vld [vmem:[%s2250 + $0x60] sm:$0xff]
    %v4752 = vld [vmem:[%s2250 + $0x68] sm:$0xff]
    %v4753 = vld [vmem:[%s2250 + $0x70] sm:$0xff]
    %v4754 = vld [vmem:[%s2250 + $0x78] sm:$0xff]
    %4755 = vmatprep.subr.mxu0 0.0
    %4756 = vmatpush1.msra.mxu0 %v4754
    %4757 = vmatprep.subr.mxu0 0.0
    %4758 = vmatpush1.msra.mxu0 %v4753
    %4759 = vmatprep.subr.mxu0 0.0
    %4760 = vmatpush1.msra.mxu0 %v4752
    %4761 = vmatprep.subr.mxu0 0.0
    %4762 = vmatpush1.msra.mxu0 %v4751
    %4763 = vmatprep.subr.mxu0 0.0
    %4764 = vmatpush1.msra.mxu0 %v4750
    %4765 = vmatprep.subr.mxu0 0.0
    %4766 = vmatpush1.msra.mxu0 %v4749
    %4767 = vmatprep.subr.mxu0 0.0
    %4768 = vmatpush1.msra.mxu0 %v4748
    %4769 = vmatprep.subr.mxu0 0.0
    %4770 = vmatpush1.msra.mxu0 %v4747
    %4771 = vmatprep.subr.mxu0 0.0
    %4772 = vmatpush1.msra.mxu0 %v4746
    %4773 = vmatprep.subr.mxu0 0.0
    %4774 = vmatpush1.msra.mxu0 %v4745
    %4775 = vmatprep.subr.mxu0 0.0
    %4776 = vmatpush1.msra.mxu0 %v4744
    %4777 = vmatprep.subr.mxu0 0.0
    %4778 = vmatpush1.msra.mxu0 %v4743
    %4779 = vmatprep.subr.mxu0 0.0
    %4780 = vmatpush1.msra.mxu0 %v4742
    %4781 = vmatprep.subr.mxu0 0.0
    %4782 = vmatpush1.msra.mxu0 %v4741
    %4783 = vmatprep.subr.mxu0 0.0
    %4784 = vmatpush1.msra.mxu0 %v4740
    %4785 = vmatprep.subr.mxu0 0.0
    %4786 = vmatpush1.msra.mxu0 %v4739
    %4787 = vmatprep.subr.mxu0 0.0
    %4788 = vmatpush2.msra.mxu0 0.0
    %4789 = vmatprep.subr.mxu0 0.0
    %4790 = vmatpush2.msra.mxu0 0.0
    %4791 = vmatprep.subr.mxu0 0.0
    %4792 = vmatpush2.msra.mxu0 0.0
    %4793 = vmatprep.subr.mxu0 0.0
    %4794 = vmatpush2.msra.mxu0 0.0
    %4795 = vmatprep.subr.mxu0 0.0
    %4796 = vmatpush2.msra.mxu0 0.0
    %4797 = vmatprep.subr.mxu0 0.0
    %4798 = vmatpush2.msra.mxu0 0.0
    %4799 = vmatprep.subr.mxu0 0.0
    %4800 = vmatpush2.msra.mxu0 0.0
    %4801 = vmatprep.subr.mxu0 0.0
    %4802 = vmatpush2.msra.mxu0 0.0
    %4803 = vmatprep.subr.mxu0 0.0
    %4804 = vmatpush2.msra.mxu0 0.0
    %4805 = vmatprep.subr.mxu0 0.0
    %4806 = vmatpush2.msra.mxu0 0.0
    %4807 = vmatprep.subr.mxu0 0.0
    %4808 = vmatpush2.msra.mxu0 0.0
    %4809 = vmatprep.subr.mxu0 0.0
    %4810 = vmatpush2.msra.mxu0 0.0
    %4811 = vmatprep.subr.mxu0 0.0
    %4812 = vmatpush2.msra.mxu0 0.0
    %4813 = vmatprep.subr.mxu0 0.0
    %4814 = vmatpush2.msra.mxu0 0.0
    %4815 = vmatprep.subr.mxu0 0.0
    %4816 = vmatpush2.msra.mxu0 0.0
    %4817 = vmatprep.subr.mxu0 0.0
    %4818 = vmatpush2.msra.mxu0 0.0
    %4819 = vmatprep.mubr.f32.mxu0 0.0
    %4820 = vmatmul.mubr.f32.gmra.mxu0 %v4649
    %v4821 = vpop.f32.mrf.mxu0
    %v4822 = vadd.f32 0.0, %v4821
    %v4823 = vpop.f32.mrf.mxu0
    %4824 = vdwg.mxu0
    %v4825 = vadd.f32 %v4738, %v4822
    %v4826 = vld [vmem:[%s2338] sm:$0xff]
    %v4827 = vld [vmem:[%s2338 + $0x8] sm:$0xff]
    %v4828 = vld [vmem:[%s2338 + $0x10] sm:$0xff]
    %v4829 = vld [vmem:[%s2338 + $0x18] sm:$0xff]
    %v4830 = vld [vmem:[%s2338 + $0x20] sm:$0xff]
    %v4831 = vld [vmem:[%s2338 + $0x28] sm:$0xff]
    %v4832 = vld [vmem:[%s2338 + $0x30] sm:$0xff]
    %v4833 = vld [vmem:[%s2338 + $0x38] sm:$0xff]
    %v4834 = vld [vmem:[%s2338 + $0x40] sm:$0xff]
    %v4835 = vld [vmem:[%s2338 + $0x48] sm:$0xff]
    %v4836 = vld [vmem:[%s2338 + $0x50] sm:$0xff]
    %v4837 = vld [vmem:[%s2338 + $0x58] sm:$0xff]
    %v4838 = vld [vmem:[%s2338 + $0x60] sm:$0xff]
    %v4839 = vld [vmem:[%s2338 + $0x68] sm:$0xff]
    %v4840 = vld [vmem:[%s2338 + $0x70] sm:$0xff]
    %v4841 = vld [vmem:[%s2338 + $0x78] sm:$0xff]
    %4842 = vmatprep.subr.mxu0 0.0
    %4843 = vmatpush1.msra.mxu0 %v4841
    %4844 = vmatprep.subr.mxu0 0.0
    %4845 = vmatpush1.msra.mxu0 %v4840
    %4846 = vmatprep.subr.mxu0 0.0
    %4847 = vmatpush1.msra.mxu0 %v4839
    %4848 = vmatprep.subr.mxu0 0.0
    %4849 = vmatpush1.msra.mxu0 %v4838
    %4850 = vmatprep.subr.mxu0 0.0
    %4851 = vmatpush1.msra.mxu0 %v4837
    %4852 = vmatprep.subr.mxu0 0.0
    %4853 = vmatpush1.msra.mxu0 %v4836
    %4854 = vmatprep.subr.mxu0 0.0
    %4855 = vmatpush1.msra.mxu0 %v4835
    %4856 = vmatprep.subr.mxu0 0.0
    %4857 = vmatpush1.msra.mxu0 %v4834
    %4858 = vmatprep.subr.mxu0 0.0
    %4859 = vmatpush1.msra.mxu0 %v4833
    %4860 = vmatprep.subr.mxu0 0.0
    %4861 = vmatpush1.msra.mxu0 %v4832
    %4862 = vmatprep.subr.mxu0 0.0
    %4863 = vmatpush1.msra.mxu0 %v4831
    %4864 = vmatprep.subr.mxu0 0.0
    %4865 = vmatpush1.msra.mxu0 %v4830
    %4866 = vmatprep.subr.mxu0 0.0
    %4867 = vmatpush1.msra.mxu0 %v4829
    %4868 = vmatprep.subr.mxu0 0.0
    %4869 = vmatpush1.msra.mxu0 %v4828
    %4870 = vmatprep.subr.mxu0 0.0
    %4871 = vmatpush1.msra.mxu0 %v4827
    %4872 = vmatprep.subr.mxu0 0.0
    %4873 = vmatpush1.msra.mxu0 %v4826
    %4874 = vmatprep.subr.mxu0 0.0
    %4875 = vmatpush2.msra.mxu0 0.0
    %4876 = vmatprep.subr.mxu0 0.0
    %4877 = vmatpush2.msra.mxu0 0.0
    %4878 = vmatprep.subr.mxu0 0.0
    %4879 = vmatpush2.msra.mxu0 0.0
    %4880 = vmatprep.subr.mxu0 0.0
    %4881 = vmatpush2.msra.mxu0 0.0
    %4882 = vmatprep.subr.mxu0 0.0
    %4883 = vmatpush2.msra.mxu0 0.0
    %4884 = vmatprep.subr.mxu0 0.0
    %4885 = vmatpush2.msra.mxu0 0.0
    %4886 = vmatprep.subr.mxu0 0.0
    %4887 = vmatpush2.msra.mxu0 0.0
    %4888 = vmatprep.subr.mxu0 0.0
    %4889 = vmatpush2.msra.mxu0 0.0
    %4890 = vmatprep.subr.mxu0 0.0
    %4891 = vmatpush2.msra.mxu0 0.0
    %4892 = vmatprep.subr.mxu0 0.0
    %4893 = vmatpush2.msra.mxu0 0.0
    %4894 = vmatprep.subr.mxu0 0.0
    %4895 = vmatpush2.msra.mxu0 0.0
    %4896 = vmatprep.subr.mxu0 0.0
    %4897 = vmatpush2.msra.mxu0 0.0
    %4898 = vmatprep.subr.mxu0 0.0
    %4899 = vmatpush2.msra.mxu0 0.0
    %4900 = vmatprep.subr.mxu0 0.0
    %4901 = vmatpush2.msra.mxu0 0.0
    %4902 = vmatprep.subr.mxu0 0.0
    %4903 = vmatpush2.msra.mxu0 0.0
    %4904 = vmatprep.subr.mxu0 0.0
    %4905 = vmatpush2.msra.mxu0 0.0
    %4906 = vmatprep.mubr.f32.mxu0 0.0
    %4907 = vmatmul.mubr.f32.gmra.mxu0 %v4650
    %v4908 = vpop.f32.mrf.mxu0
    %v4909 = vadd.f32 0.0, %v4908
    %v4910 = vpop.f32.mrf.mxu0
    %4911 = vdwg.mxu0
    %v4912 = vadd.f32 %v4825, %v4909
    %v4913 = vld [vmem:[%s2426] sm:$0xff]
    %v4914 = vld [vmem:[%s2426 + $0x8] sm:$0xff]
    %v4915 = vld [vmem:[%s2426 + $0x10] sm:$0xff]
    %v4916 = vld [vmem:[%s2426 + $0x18] sm:$0xff]
    %v4917 = vld [vmem:[%s2426 + $0x20] sm:$0xff]
    %v4918 = vld [vmem:[%s2426 + $0x28] sm:$0xff]
    %v4919 = vld [vmem:[%s2426 + $0x30] sm:$0xff]
    %v4920 = vld [vmem:[%s2426 + $0x38] sm:$0xff]
    %v4921 = vld [vmem:[%s2426 + $0x40] sm:$0xff]
    %v4922 = vld [vmem:[%s2426 + $0x48] sm:$0xff]
    %v4923 = vld [vmem:[%s2426 + $0x50] sm:$0xff]
    %v4924 = vld [vmem:[%s2426 + $0x58] sm:$0xff]
    %v4925 = vld [vmem:[%s2426 + $0x60] sm:$0xff]
    %v4926 = vld [vmem:[%s2426 + $0x68] sm:$0xff]
    %v4927 = vld [vmem:[%s2426 + $0x70] sm:$0xff]
    %v4928 = vld [vmem:[%s2426 + $0x78] sm:$0xff]
    %4929 = vmatprep.subr.mxu0 0.0
    %4930 = vmatpush1.msra.mxu0 %v4928
    %4931 = vmatprep.subr.mxu0 0.0
    %4932 = vmatpush1.msra.mxu0 %v4927
    %4933 = vmatprep.subr.mxu0 0.0
    %4934 = vmatpush1.msra.mxu0 %v4926
    %4935 = vmatprep.subr.mxu0 0.0
    %4936 = vmatpush1.msra.mxu0 %v4925
    %4937 = vmatprep.subr.mxu0 0.0
    %4938 = vmatpush1.msra.mxu0 %v4924
    %4939 = vmatprep.subr.mxu0 0.0
    %4940 = vmatpush1.msra.mxu0 %v4923
    %4941 = vmatprep.subr.mxu0 0.0
    %4942 = vmatpush1.msra.mxu0 %v4922
    %4943 = vmatprep.subr.mxu0 0.0
    %4944 = vmatpush1.msra.mxu0 %v4921
    %4945 = vmatprep.subr.mxu0 0.0
    %4946 = vmatpush1.msra.mxu0 %v4920
    %4947 = vmatprep.subr.mxu0 0.0
    %4948 = vmatpush1.msra.mxu0 %v4919
    %4949 = vmatprep.subr.mxu0 0.0
    %4950 = vmatpush1.msra.mxu0 %v4918
    %4951 = vmatprep.subr.mxu0 0.0
    %4952 = vmatpush1.msra.mxu0 %v4917
    %4953 = vmatprep.subr.mxu0 0.0
    %4954 = vmatpush1.msra.mxu0 %v4916
    %4955 = vmatprep.subr.mxu0 0.0
    %4956 = vmatpush1.msra.mxu0 %v4915
    %4957 = vmatprep.subr.mxu0 0.0
    %4958 = vmatpush1.msra.mxu0 %v4914
    %4959 = vmatprep.subr.mxu0 0.0
    %4960 = vmatpush1.msra.mxu0 %v4913
    %4961 = vmatprep.subr.mxu0 0.0
    %4962 = vmatpush2.msra.mxu0 0.0
    %4963 = vmatprep.subr.mxu0 0.0
    %4964 = vmatpush2.msra.mxu0 0.0
    %4965 = vmatprep.subr.mxu0 0.0
    %4966 = vmatpush2.msra.mxu0 0.0
    %4967 = vmatprep.subr.mxu0 0.0
    %4968 = vmatpush2.msra.mxu0 0.0
    %4969 = vmatprep.subr.mxu0 0.0
    %4970 = vmatpush2.msra.mxu0 0.0
    %4971 = vmatprep.subr.mxu0 0.0
    %4972 = vmatpush2.msra.mxu0 0.0
    %4973 = vmatprep.subr.mxu0 0.0
    %4974 = vmatpush2.msra.mxu0 0.0
    %4975 = vmatprep.subr.mxu0 0.0
    %4976 = vmatpush2.msra.mxu0 0.0
    %4977 = vmatprep.subr.mxu0 0.0
    %4978 = vmatpush2.msra.mxu0 0.0
    %4979 = vmatprep.subr.mxu0 0.0
    %4980 = vmatpush2.msra.mxu0 0.0
    %4981 = vmatprep.subr.mxu0 0.0
    %4982 = vmatpush2.msra.mxu0 0.0
    %4983 = vmatprep.subr.mxu0 0.0
    %4984 = vmatpush2.msra.mxu0 0.0
    %4985 = vmatprep.subr.mxu0 0.0
    %4986 = vmatpush2.msra.mxu0 0.0
    %4987 = vmatprep.subr.mxu0 0.0
    %4988 = vmatpush2.msra.mxu0 0.0
    %4989 = vmatprep.subr.mxu0 0.0
    %4990 = vmatpush2.msra.mxu0 0.0
    %4991 = vmatprep.subr.mxu0 0.0
    %4992 = vmatpush2.msra.mxu0 0.0
    %4993 = vmatprep.mubr.f32.mxu0 0.0
    %4994 = vmatmul.mubr.f32.gmra.mxu0 %v4651
    %v4995 = vpop.f32.mrf.mxu0
    %v4996 = vadd.f32 0.0, %v4995
    %v4997 = vpop.f32.mrf.mxu0
    %4998 = vdwg.mxu0
    %v4999 = vadd.f32 %v4912, %v4996
    %v5001 = vsel %vm2514, %v4999, 0
    %5003 = vmatprep.subr.mxu0 0.0
    %5004 = vmatpush1.msra.mxu0 0.0
    %5005 = vmatprep.subr.mxu0 0.0
    %5006 = vmatpush1.msra.mxu0 0.0
    %5007 = vmatprep.subr.mxu0 0.0
    %5008 = vmatpush1.msra.mxu0 0.0
    %5009 = vmatprep.subr.mxu0 0.0
    %5010 = vmatpush1.msra.mxu0 0.0
    %5011 = vmatprep.subr.mxu0 0.0
    %5012 = vmatpush1.msra.mxu0 0.0
    %5013 = vmatprep.subr.mxu0 0.0
    %5014 = vmatpush1.msra.mxu0 0.0
    %5015 = vmatprep.subr.mxu0 0.0
    %5016 = vmatpush1.msra.mxu0 0.0
    %5017 = vmatprep.subr.mxu0 0.0
    %5018 = vmatpush1.msra.mxu0 0.0
    %5019 = vmatprep.subr.mxu0 0.0
    %5020 = vmatpush1.msra.mxu0 %v58
    %5021 = vmatprep.subr.mxu0 0.0
    %5022 = vmatpush1.msra.mxu0 %v57
    %5023 = vmatprep.subr.mxu0 0.0
    %5024 = vmatpush1.msra.mxu0 %v56
    %5025 = vmatprep.subr.mxu0 0.0
    %5026 = vmatpush1.msra.mxu0 %v55
    %5027 = vmatprep.subr.mxu0 0.0
    %5028 = vmatpush1.msra.mxu0 %v54
    %5029 = vmatprep.subr.mxu0 0.0
    %5030 = vmatpush1.msra.mxu0 %v53
    %5031 = vmatprep.subr.mxu0 0.0
    %5032 = vmatpush1.msra.mxu0 %v52
    %5033 = vmatprep.subr.mxu0 0.0
    %5034 = vmatpush1.msra.mxu0 %v51
    %5035 = vmatprep.subr.mxu0 0.0
    %5036 = vmatpush2.msra.mxu0 0.0
    %5037 = vmatprep.subr.mxu0 0.0
    %5038 = vmatpush2.msra.mxu0 0.0
    %5039 = vmatprep.subr.mxu0 0.0
    %5040 = vmatpush2.msra.mxu0 0.0
    %5041 = vmatprep.subr.mxu0 0.0
    %5042 = vmatpush2.msra.mxu0 0.0
    %5043 = vmatprep.subr.mxu0 0.0
    %5044 = vmatpush2.msra.mxu0 0.0
    %5045 = vmatprep.subr.mxu0 0.0
    %5046 = vmatpush2.msra.mxu0 0.0
    %5047 = vmatprep.subr.mxu0 0.0
    %5048 = vmatpush2.msra.mxu0 0.0
    %5049 = vmatprep.subr.mxu0 0.0
    %5050 = vmatpush2.msra.mxu0 0.0
    %5051 = vmatprep.subr.mxu0 0.0
    %5052 = vmatpush2.msra.mxu0 0.0
    %5053 = vmatprep.subr.mxu0 0.0
    %5054 = vmatpush2.msra.mxu0 0.0
    %5055 = vmatprep.subr.mxu0 0.0
    %5056 = vmatpush2.msra.mxu0 0.0
    %5057 = vmatprep.subr.mxu0 0.0
    %5058 = vmatpush2.msra.mxu0 0.0
    %5059 = vmatprep.subr.mxu0 0.0
    %5060 = vmatpush2.msra.mxu0 0.0
    %5061 = vmatprep.subr.mxu0 0.0
    %5062 = vmatpush2.msra.mxu0 0.0
    %5063 = vmatprep.subr.mxu0 0.0
    %5064 = vmatpush2.msra.mxu0 0.0
    %5065 = vmatprep.subr.mxu0 0.0
    %5066 = vmatpush2.msra.mxu0 0.0
    %5067 = vmatprep.mubr.f32.mxu0 0.0
    %5068 = vmatmul.mubr.f32.gmra.mxu0 %v5001
    %v5069 = vpop.f32.mrf.mxu0
    %v5070 = vadd.f32 %v50, %v5069
    %v5071 = vpop.f32.mrf.mxu0
    %5072 = vdwg.mxu0
    %s5073 = scalar_lea.vmem [#allocation5], 1
    %5074 = vst [vmem:[%s5073] sm:$0x1] %v5070
    // Predicated region
    $region42: #{net_forward.1} parent=1 // pred_check
      _
    $region43: #{net_forward.1} parent=1 // pred_check_branch
      %5076 = sbr.rel (0) target = $region45
    $region44: #{net_forward.1} parent=1 // pred_region
      %s5078 = ssub.s32 32, 32
      %5079 = vsyncadd [#allocation4], %s5078
      %s5080 = sshll.u32 [#allocation5], 4
      %s5081 = int_to_ptr.vmem [resolvable:$true] %s5080
      %5086 = dma.vmem_to_hbm [thread:$0]  %s5081, 32, %s9, [#allocation4], 16, 16, 1
    $region45: #{net_forward.1} parent=1 // pred_fallthru
      _
    // Predicated region
    $region46: #{net_forward.1} parent=1 // pred_check
      _
    $region47: #{net_forward.1} parent=1 // pred_check_branch
      %5088 = sbr.rel (0) target = $region49
    $region48: #{net_forward.1} parent=1 // pred_region
      %5089 = dma.done [#allocation4], 32
    $region49: #{net_forward.1} parent=1 // pred_fallthru
      _
    %5090 = vsyncpa [#allocation3], 1
    %5091 = vsyncpa [#allocation4], 1

</llo_original>
